<compile_context>
chip_gen: v6e
topology: v6e:2x2x1
jax: 0.10.0
libtpu: 0.0.40
codegen_flags: <defaults>
</compile_context>

<pallas_src>
import functools

import jax
import jax.numpy as jnp
from jax.experimental import pallas as pl
from jax.experimental.pallas import tpu as pltpu

EPS = 1e-5          # nn.BatchNorm2d default eps
LANE = 128


def _round_up(x, m):
    return (x + m - 1) // m * m


def _vmem_limit():
    try:
        cap = int(pltpu.get_tpu_info().vmem_capacity_bytes)
    except Exception:
        cap = 128 * 1024 * 1024
    return int(min(64 * 1024 * 1024, cap // 2))


def _pick_tile(rows, pref=1024):
    """Largest multiple of 8 <= pref that divides rows (pass-B row tile)."""
    tb = min(pref, rows)
    tb -= tb % 8
    while tb > 8 and rows % tb:
        tb -= 8
    if tb < 8 or rows % tb:
        return rows
    return tb


def _call_maybe_buffered(build):
    """build(resident_kwargs) -> arrays.  Resident (constant-index) read-only blocks
    ask for single buffering; retry without if this Pallas build rejects it."""
    try:
        return build(dict(pipeline_mode=pl.Buffered(1)))
    except Exception:
        return build({})


# ---------------------------------------------------------------------------
# Pallas kernels
# ---------------------------------------------------------------------------
def conv_stats_kernel(xw_ref, w_ref, y_ref, s_ref, m2_ref, t2_ref, *, width):
    """Pass A: 3x3 conv as 3 row-tap MXU matmuls on the column-triplet input
    (bf16 in, f32 accumulate) + training-BN statistics (per-tile centered)."""
    hw, kp = y_ref.shape
    acc = jnp.zeros((hw, kp), jnp.float32)
    for dy in range(3):                                    # static unroll; free row slices
        u = xw_ref[pl.ds(dy * width, hw), :]               # (hw, 3*cp) bf16
        acc += jnp.dot(u, w_ref[dy], preferred_element_type=jnp.float32)

    y_ref[...] = acc.astype(y_ref.dtype)                   # bf16 store; stats use f32 acc

    tile_sum = jnp.sum(acc, axis=0, keepdims=True)         # (1, kp)
    tile_mean = tile_sum * (1.0 / hw)
    c = acc - tile_mean
    tile_m2 = jnp.sum(c * c, axis=0, keepdims=True)

    @pl.when(pl.program_id(0) == 0)
    def _():
        s_ref[...] = jnp.zeros_like(s_ref)
        m2_ref[...] = jnp.zeros_like(m2_ref)
        t2_ref[...] = jnp.zeros_like(t2_ref)

    s_ref[...] += tile_sum
    m2_ref[...] += tile_m2
    t2_ref[...] += tile_mean * tile_mean


def bn_relu_kernel(y_ref, scale_ref, shift_ref, o_ref):
    """Pass B: out = relu(y * scale + shift)."""
    v = y_ref[...].astype(jnp.float32) * scale_ref[...] + shift_ref[...]
    o_ref[...] = jnp.maximum(v, 0.0).astype(o_ref.dtype)


def bn_add_relu_kernel(y_ref, scale_ref, shift_ref, res_ref, o_ref):
    """Pass B: out = relu(y * scale + shift + residual)."""
    v = (y_ref[...].astype(jnp.float32) * scale_ref[...] + shift_ref[...]
         + res_ref[...].astype(jnp.float32))
    o_ref[...] = jnp.maximum(v, 0.0).astype(o_ref.dtype)


# ---------------------------------------------------------------------------
# pallas_call wrappers
# ---------------------------------------------------------------------------
def _conv_stats(xw, wmat, width, hw, kp):
    """Grid over images; stats accumulate across the 'arbitrary' axis."""
    n, pw, kin = xw.shape
    kernel = functools.partial(conv_stats_kernel, width=width)
    cost = pl.CostEstimate(
        flops=2 * 3 * n * hw * kin * kp,
        transcendentals=0,
        bytes_accessed=n * pw * kin * 2 + 3 * kin * kp * 2
                       + n * hw * kp * 2 + 3 * kp * 4)

    def build(resident):
        return pl.pallas_call(
            kernel,
            grid=(n,),
            in_specs=[pl.BlockSpec((None, pw, kin), lambda i: (i, 0, 0)),
                      pl.BlockSpec((3, kin, kp), lambda i: (0, 0, 0), **resident)],
            out_specs=[pl.BlockSpec((None, hw, kp), lambda i: (i, 0, 0)),
                       pl.BlockSpec((1, kp), lambda i: (0, 0)),
                       pl.BlockSpec((1, kp), lambda i: (0, 0)),
                       pl.BlockSpec((1, kp), lambda i: (0, 0))],
            out_shape=[jax.ShapeDtypeStruct((n, hw, kp), jnp.bfloat16),
                       jax.ShapeDtypeStruct((1, kp), jnp.float32),
                       jax.ShapeDtypeStruct((1, kp), jnp.float32),
                       jax.ShapeDtypeStruct((1, kp), jnp.float32)],
            compiler_params=pltpu.CompilerParams(
                dimension_semantics=("arbitrary",),   # stats accumulate across images
                vmem_limit_bytes=_vmem_limit()),
            cost_estimate=cost,
        )(xw, wmat)

    return _call_maybe_buffered(build)


def _bn_apply(y2d, scale, shift, tb, res=None, out_dtype=jnp.float32, alias=False):
    """Row-tiled, 'parallel' normalize (+ residual) + ReLU epilogue."""
    rows, kp = y2d.shape
    grid = (rows // tb,)
    tile = pl.BlockSpec((tb, kp), lambda i: (i, 0))

    def build(resident):
        vec = pl.BlockSpec((1, kp), lambda i: (0, 0), **resident)
        if res is None:
            kern, ins, specs = bn_relu_kernel, (y2d, scale, shift), [tile, vec, vec]
        else:
            kern, ins, specs = (bn_add_relu_kernel, (y2d, scale, shift, res),
                                [tile, vec, vec, tile])
        kwargs = {}
        if alias and y2d.dtype == out_dtype:
            kwargs["input_output_aliases"] = {0: 0}   # overwrite y in place
        return pl.pallas_call(
            kern,
            grid=grid,
            in_specs=specs,
            out_specs=tile,
            out_shape=jax.ShapeDtypeStruct((rows, kp), out_dtype),
            compiler_params=pltpu.CompilerParams(
                dimension_semantics=("parallel",),
                vmem_limit_bytes=_vmem_limit()),
            **kwargs,
        )(*ins)

    return _call_maybe_buffered(build)


# ---------------------------------------------------------------------------
# JAX glue (layout plumbing only)
# ---------------------------------------------------------------------------
def _col_triplet(x_nhwc, cp):
    """H zero-pad by 1, channel-pad to cp, concat the dx = -1/0/+1 column shifts
    along channels, cast bf16, flatten rows -> (N, (H+2)*W, 3*cp)."""
    N, H, W, C = x_nhwc.shape
    xh = jnp.pad(x_nhwc, ((0, 0), (1, 1), (0, 0), (0, cp - C)))
    left = jnp.pad(xh, ((0, 0), (0, 0), (1, 0), (0, 0)))[:, :, :W, :]    # x[.., w-1, ..]
    right = jnp.pad(xh, ((0, 0), (0, 0), (0, 1), (0, 0)))[:, :, 1:, :]   # x[.., w+1, ..]
    xw = jnp.concatenate([left, xh, right], axis=-1)                     # (N, H+2, W, 3*cp)
    return xw.astype(jnp.bfloat16).reshape(N, (H + 2) * W, 3 * cp)


def _w_stack(w, cp, kp):
    """PyTorch conv weight (Cout, Cin, 3, 3) -> (3, 3*cp, kp) bf16; the 3*cp rows of
    tap dy are grouped [dx=-1 | dx=0 | dx=+1] to match _col_triplet's channel order."""
    cout, cin = w.shape[0], w.shape[1]
    wt = jnp.transpose(w, (2, 3, 1, 0))                     # (kh, kw, Cin, Cout)
    wt = jnp.pad(wt, ((0, 0), (0, 0), (0, cp - cin), (0, kp - cout)))
    return wt.reshape(3, 3 * cp, kp).astype(jnp.bfloat16)


def _bn_affine(s, m2, t2, hw, n_tiles, gamma, beta, kp):
    """Finalize training-mode BN from the kernel's per-tile-centered statistics."""
    rows = hw * n_tiles
    mean = s / rows                                         # (1, kp)
    between = jnp.maximum(t2 - n_tiles * mean * mean, 0.0)  # sum_t (tile_mean - mean)^2
    var = jnp.maximum((m2 + hw * between) / rows, 0.0)      # biased variance
    g = jnp.zeros((1, kp), jnp.float32).at[0, :gamma.shape[0]].set(gamma)
    b = jnp.zeros((1, kp), jnp.float32).at[0, :beta.shape[0]].set(beta)
    scale = g * jax.lax.rsqrt(var + EPS)
    shift = b - mean * scale
    return scale, shift


def basic_block(x_nchw, params):
    """BasicBlock forward (stride=1, in_planes == planes -> identity shortcut)."""
    w1, g1, b1, w2, g2, b2 = params
    N, C, H, W = x_nchw.shape
    planes = w1.shape[0]
    # TODO(synk): projection shortcut / stride != 1 not implemented.
    assert planes == C and w1.shape[1] == C, "identity-shortcut configuration only"

    cp = _round_up(C, LANE)
    kp = _round_up(planes, LANE)
    hw = H * W
    rows = N * hw
    tb = _pick_tile(rows)

    x_nhwc = jnp.transpose(x_nchw, (0, 2, 3, 1)).astype(jnp.float32)

    # conv1 + bn1 + relu (h1 emitted bf16, channel-padded zeros kept for conv2)
    xw1 = _col_triplet(x_nhwc, cp)
    y1, s1, m21, t21 = _conv_stats(xw1, _w_stack(w1, cp, kp), W, hw, kp)
    sc1, sh1 = _bn_affine(s1, m21, t21, hw, N, g1, b1, kp)
    h1 = _bn_apply(y1.reshape(rows, kp), sc1, sh1, tb,
                   out_dtype=jnp.bfloat16, alias=True)

    # conv2 + bn2 + residual add + relu
    xw2 = _col_triplet(h1.reshape(N, H, W, kp), kp)
    y2, s2, m22, t22 = _conv_stats(xw2, _w_stack(w2, kp, kp), W, hw, kp)
    sc2, sh2 = _bn_affine(s2, m22, t22, hw, N, g2, b2, kp)
    res = x_nhwc.reshape(rows, C)
    if kp != C:                                  # only pad when planes isn't lane-aligned
        res = jnp.pad(res, ((0, 0), (0, kp - C)))
    out = _bn_apply(y2.reshape(rows, kp), sc2, sh2, tb, res=res,
                    out_dtype=jnp.float32, alias=False)

    out = out[:, :planes].reshape(N, H, W, planes)
    return jnp.transpose(out, (0, 3, 1, 2))      # NCHW out


# ---------------------------------------------------------------------------
# Pure-JAX reference (f32, for correctness check)
# ---------------------------------------------------------------------------
def _ref_basic_block(x_nchw, params):
    w1, g1, b1, w2, g2, b2 = params
    x = jnp.transpose(x_nchw, (0, 2, 3, 1)).astype(jnp.float32)

    def conv(h, w):
        return jax.lax.conv_general_dilated(
            h, jnp.transpose(w, (2, 3, 1, 0)), (1, 1), "SAME",
            dimension_numbers=("NHWC", "HWIO", "NHWC"),
            precision=jax.lax.Precision.HIGHEST)

    def bn(h, g, b):
        m = h.mean(axis=(0, 1, 2), keepdims=True)
        v = ((h - m) ** 2).mean(axis=(0, 1, 2), keepdims=True)
        return (h - m) * jax.lax.rsqrt(v + EPS) * g + b

    h = jax.nn.relu(bn(conv(x, w1), g1, b1))
    h = bn(conv(h, w2), g2, b2) + x
    return jnp.transpose(jax.nn.relu(h), (0, 3, 1, 2))


if __name__ == "__main__":
    key = jax.random.PRNGKey(0)
    N, C, H, W = 2, 8, 16, 16
    planes = C  # stride=1, in_planes == planes -> identity shortcut
    ks = jax.random.split(key, 7)
    x = jax.random.normal(ks[0], (N, C, H, W), jnp.float32)
    w1 = 0.1 * jax.random.normal(ks[1], (planes, C, 3, 3), jnp.float32)
    w2 = 0.1 * jax.random.normal(ks[2], (planes, planes, 3, 3), jnp.float32)
    g1 = 1.0 + 0.1 * jax.random.normal(ks[3], (planes,), jnp.float32)
    b1 = 0.1 * jax.random.normal(ks[4], (planes,), jnp.float32)
    g2 = 1.0 + 0.1 * jax.random.normal(ks[5], (planes,), jnp.float32)
    b2 = 0.1 * jax.random.normal(ks[6], (planes,), jnp.float32)
    params = (w1, g1, b1, w2, g2, b2)

    out = jax.block_until_ready(basic_block(x, params))
    ref = jax.block_until_ready(_ref_basic_block(x, params))
    assert out.shape == (N, planes, H, W)
    # bf16 MXU inputs + bf16 conv intermediates vs. an f32-HIGHEST reference:
    # accepted precision trade-off -> slightly wide tolerances.
    max_err = float(jnp.max(jnp.abs(out - ref)))
    mean_err = float(jnp.mean(jnp.abs(out - ref)))
    assert max_err < 7.5e-2, f"max abs err {max_err}"
    assert mean_err < 2e-2, f"mean abs err {mean_err}"
    print("KERNEL_OK")
</pallas_src>

<mosaic_0001>
module attributes {stable_mosaic.version = 11 : i64} {
  func.func @conv_stats_kernel(%arg0: i32, %arg1: memref<1x288x384xbf16, #tpu.memory_space<vmem>>, %arg2: memref<3x384x128xbf16, #tpu.memory_space<vmem>>, %arg3: memref<1x256x128xbf16, #tpu.memory_space<vmem>>, %arg4: memref<1x128xf32, #tpu.memory_space<vmem>>, %arg5: memref<1x128xf32, #tpu.memory_space<vmem>>, %arg6: memref<1x128xf32, #tpu.memory_space<vmem>>) attributes {dimension_semantics = [#tpu.dimension_semantics<arbitrary>], iteration_bounds = array<i64: 2>, scalar_prefetch = 0 : i64, scratch_operands = 0 : i64, tpu.core_type = #tpu.core_type<tc>, window_params = [{transform_indices = @transform_0, window_bounds = array<i64: 1, 288, 384>}, {pipeline_mode = #tpu.pipeline_mode<synchronous>, transform_indices = @transform_1, window_bounds = array<i64: 3, 384, 128>}, {transform_indices = @transform_2, window_bounds = array<i64: 1, 256, 128>}, {pipeline_mode = #tpu.pipeline_mode<synchronous>, transform_indices = @transform_3, window_bounds = array<i64: 1, 128>}, {pipeline_mode = #tpu.pipeline_mode<synchronous>, transform_indices = @transform_4, window_bounds = array<i64: 1, 128>}, {pipeline_mode = #tpu.pipeline_mode<synchronous>, transform_indices = @transform_5, window_bounds = array<i64: 1, 128>}]} {
    %cst = arith.constant 0.000000e+00 : f32
    %0 = vector.broadcast %cst : f32 to vector<256x128xf32>
    %c0 = arith.constant 0 : index
    %c0_0 = arith.constant 0 : index
    %c0_1 = arith.constant 0 : index
    %1 = vector.load %arg1[%c0, %c0_0, %c0_1] : memref<1x288x384xbf16, #tpu.memory_space<vmem>>, vector<1x256x384xbf16>
    %2 = vector.shape_cast %1 : vector<1x256x384xbf16> to vector<256x384xbf16>
    %c0_2 = arith.constant 0 : index
    %c0_3 = arith.constant 0 : index
    %c0_4 = arith.constant 0 : index
    %3 = vector.load %arg2[%c0_2, %c0_3, %c0_4] : memref<3x384x128xbf16, #tpu.memory_space<vmem>>, vector<1x384x128xbf16>
    %4 = vector.shape_cast %3 : vector<1x384x128xbf16> to vector<384x128xbf16>
    %cst_5 = arith.constant dense<0.000000e+00> : vector<256x128xf32>
    %5 = tpu.matmul %2, %4, %cst_5 {dimension_numbers = #tpu.dot_dimension_numbers<[1], [0], [0], [1], [0, 0, 1, 1], [], []>} : vector<256x384xbf16>, vector<384x128xbf16>, vector<256x128xf32> -> vector<256x128xf32>
    %6 = arith.addf %0, %5 : vector<256x128xf32>
    %c0_6 = arith.constant 0 : index
    %c16 = arith.constant 16 : index
    %c0_7 = arith.constant 0 : index
    %7 = vector.load %arg1[%c0_6, %c16, %c0_7] : memref<1x288x384xbf16, #tpu.memory_space<vmem>>, vector<1x256x384xbf16>
    %8 = vector.shape_cast %7 : vector<1x256x384xbf16> to vector<256x384xbf16>
    %c1 = arith.constant 1 : index
    %c0_8 = arith.constant 0 : index
    %c0_9 = arith.constant 0 : index
    %9 = vector.load %arg2[%c1, %c0_8, %c0_9] : memref<3x384x128xbf16, #tpu.memory_space<vmem>>, vector<1x384x128xbf16>
    %10 = vector.shape_cast %9 : vector<1x384x128xbf16> to vector<384x128xbf16>
    %cst_10 = arith.constant dense<0.000000e+00> : vector<256x128xf32>
    %11 = tpu.matmul %8, %10, %cst_10 {dimension_numbers = #tpu.dot_dimension_numbers<[1], [0], [0], [1], [0, 0, 1, 1], [], []>} : vector<256x384xbf16>, vector<384x128xbf16>, vector<256x128xf32> -> vector<256x128xf32>
    %12 = arith.addf %6, %11 : vector<256x128xf32>
    %c0_11 = arith.constant 0 : index
    %c32 = arith.constant 32 : index
    %c0_12 = arith.constant 0 : index
    %13 = vector.load %arg1[%c0_11, %c32, %c0_12] : memref<1x288x384xbf16, #tpu.memory_space<vmem>>, vector<1x256x384xbf16>
    %14 = vector.shape_cast %13 : vector<1x256x384xbf16> to vector<256x384xbf16>
    %c2 = arith.constant 2 : index
    %c0_13 = arith.constant 0 : index
    %c0_14 = arith.constant 0 : index
    %15 = vector.load %arg2[%c2, %c0_13, %c0_14] : memref<3x384x128xbf16, #tpu.memory_space<vmem>>, vector<1x384x128xbf16>
    %16 = vector.shape_cast %15 : vector<1x384x128xbf16> to vector<384x128xbf16>
    %cst_15 = arith.constant dense<0.000000e+00> : vector<256x128xf32>
    %17 = tpu.matmul %14, %16, %cst_15 {dimension_numbers = #tpu.dot_dimension_numbers<[1], [0], [0], [1], [0, 0, 1, 1], [], []>} : vector<256x384xbf16>, vector<384x128xbf16>, vector<256x128xf32> -> vector<256x128xf32>
    %18 = arith.addf %12, %17 : vector<256x128xf32>
    %19 = arith.truncf %18 : vector<256x128xf32> to vector<256x128xbf16>
    %c0_16 = arith.constant 0 : index
    %c0_17 = arith.constant 0 : index
    %c0_18 = arith.constant 0 : index
    %20 = vector.load %arg3[%c0_16, %c0_17, %c0_18] : memref<1x256x128xbf16, #tpu.memory_space<vmem>>, vector<1x256x128xbf16>
    %21 = vector.shape_cast %20 : vector<1x256x128xbf16> to vector<256x128xbf16>
    %22 = vector.shape_cast %19 : vector<256x128xbf16> to vector<1x256x128xbf16>
    tpu.vector_store %arg3[%c0_16, %c0_17, %c0_18], %22 {strides = array<i32>} : memref<1x256x128xbf16, #tpu.memory_space<vmem>>, vector<1x256x128xbf16>,
    %cst_19 = arith.constant dense<0.000000e+00> : vector<128xf32>
    %23 = vector.multi_reduction <add>, %18, %cst_19 [0] : vector<256x128xf32> to vector<128xf32>
    %24 = vector.shape_cast %23 : vector<128xf32> to vector<1x128xf32>
    %cst_20 = arith.constant 3.906250e-03 : f32
    %25 = vector.broadcast %cst_20 : f32 to vector<1x128xf32>
    %26 = arith.mulf %24, %25 : vector<1x128xf32>
    %27 = vector.broadcast %26 : vector<1x128xf32> to vector<256x128xf32>
    %28 = arith.subf %18, %27 : vector<256x128xf32>
    %29 = arith.mulf %28, %28 : vector<256x128xf32>
    %cst_21 = arith.constant dense<0.000000e+00> : vector<128xf32>
    %30 = vector.multi_reduction <add>, %29, %cst_21 [0] : vector<256x128xf32> to vector<128xf32>
    %31 = vector.shape_cast %30 : vector<128xf32> to vector<1x128xf32>
    %c0_i32 = arith.constant 0 : i32
    %32 = arith.cmpi eq, %arg0, %c0_i32 : i32
    %33 = arith.extui %32 : i1 to i32
    %c0_i32_22 = arith.constant 0 : i32
    %34 = arith.cmpi ne, %33, %c0_i32_22 : i32
    scf.if %34 {
      %cst_35 = arith.constant 0.000000e+00 : f32
      %45 = vector.broadcast %cst_35 : f32 to vector<1x128xf32>
      %c0_36 = arith.constant 0 : index
      %c0_37 = arith.constant 0 : index
      %46 = vector.load %arg4[%c0_36, %c0_37] : memref<1x128xf32, #tpu.memory_space<vmem>>, vector<1x128xf32>
      tpu.vector_store %arg4[%c0_36, %c0_37], %45 {strides = array<i32>} : memref<1x128xf32, #tpu.memory_space<vmem>>, vector<1x128xf32>,
      %cst_38 = arith.constant 0.000000e+00 : f32
      %47 = vector.broadcast %cst_38 : f32 to vector<1x128xf32>
      %c0_39 = arith.constant 0 : index
      %c0_40 = arith.constant 0 : index
      %48 = vector.load %arg5[%c0_39, %c0_40] : memref<1x128xf32, #tpu.memory_space<vmem>>, vector<1x128xf32>
      tpu.vector_store %arg5[%c0_39, %c0_40], %47 {strides = array<i32>} : memref<1x128xf32, #tpu.memory_space<vmem>>, vector<1x128xf32>,
      %cst_41 = arith.constant 0.000000e+00 : f32
      %49 = vector.broadcast %cst_41 : f32 to vector<1x128xf32>
      %c0_42 = arith.constant 0 : index
      %c0_43 = arith.constant 0 : index
      %50 = vector.load %arg6[%c0_42, %c0_43] : memref<1x128xf32, #tpu.memory_space<vmem>>, vector<1x128xf32>
      tpu.vector_store %arg6[%c0_42, %c0_43], %49 {strides = array<i32>} : memref<1x128xf32, #tpu.memory_space<vmem>>, vector<1x128xf32>,
    } else {
    }
    %c0_23 = arith.constant 0 : index
    %c0_24 = arith.constant 0 : index
    %35 = vector.load %arg4[%c0_23, %c0_24] : memref<1x128xf32, #tpu.memory_space<vmem>>, vector<1x128xf32>
    %36 = arith.addf %35, %24 : vector<1x128xf32>
    %c0_25 = arith.constant 0 : index
    %c0_26 = arith.constant 0 : index
    %37 = vector.load %arg4[%c0_25, %c0_26] : memref<1x128xf32, #tpu.memory_space<vmem>>, vector<1x128xf32>
    tpu.vector_store %arg4[%c0_25, %c0_26], %36 {strides = array<i32>} : memref<1x128xf32, #tpu.memory_space<vmem>>, vector<1x128xf32>,
    %c0_27 = arith.constant 0 : index
    %c0_28 = arith.constant 0 : index
    %38 = vector.load %arg5[%c0_27, %c0_28] : memref<1x128xf32, #tpu.memory_space<vmem>>, vector<1x128xf32>
    %39 = arith.addf %38, %31 : vector<1x128xf32>
    %c0_29 = arith.constant 0 : index
    %c0_30 = arith.constant 0 : index
    %40 = vector.load %arg5[%c0_29, %c0_30] : memref<1x128xf32, #tpu.memory_space<vmem>>, vector<1x128xf32>
    tpu.vector_store %arg5[%c0_29, %c0_30], %39 {strides = array<i32>} : memref<1x128xf32, #tpu.memory_space<vmem>>, vector<1x128xf32>,
    %c0_31 = arith.constant 0 : index
    %c0_32 = arith.constant 0 : index
    %41 = vector.load %arg6[%c0_31, %c0_32] : memref<1x128xf32, #tpu.memory_space<vmem>>, vector<1x128xf32>
    %42 = arith.mulf %26, %26 : vector<1x128xf32>
    %43 = arith.addf %41, %42 : vector<1x128xf32>
    %c0_33 = arith.constant 0 : index
    %c0_34 = arith.constant 0 : index
    %44 = vector.load %arg6[%c0_33, %c0_34] : memref<1x128xf32, #tpu.memory_space<vmem>>, vector<1x128xf32>
    tpu.vector_store %arg6[%c0_33, %c0_34], %43 {strides = array<i32>} : memref<1x128xf32, #tpu.memory_space<vmem>>, vector<1x128xf32>,
    return
  }
  func.func @transform_0(%arg0: i32) -> (i32, i32, i32) {
    %c0_i32 = arith.constant 0 : i32
    %c0_i32_0 = arith.constant 0 : i32
    %c0_i32_1 = arith.constant 0 : i32
    return %arg0, %c0_i32, %c0_i32_0 : i32, i32, i32
  }
  func.func @transform_1(%arg0: i32) -> (i32, i32, i32) {
    %c0_i32 = arith.constant 0 : i32
    %c0_i32_0 = arith.constant 0 : i32
    %c0_i32_1 = arith.constant 0 : i32
    %c0_i32_2 = arith.constant 0 : i32
    return %c0_i32, %c0_i32_0, %c0_i32_1 : i32, i32, i32
  }
  func.func @transform_2(%arg0: i32) -> (i32, i32, i32) {
    %c0_i32 = arith.constant 0 : i32
    %c0_i32_0 = arith.constant 0 : i32
    %c0_i32_1 = arith.constant 0 : i32
    return %arg0, %c0_i32, %c0_i32_0 : i32, i32, i32
  }
  func.func @transform_3(%arg0: i32) -> (i32, i32) {
    %c0_i32 = arith.constant 0 : i32
    %c0_i32_0 = arith.constant 0 : i32
    %c0_i32_1 = arith.constant 0 : i32
    return %c0_i32, %c0_i32_0 : i32, i32
  }
  func.func @transform_4(%arg0: i32) -> (i32, i32) {
    %c0_i32 = arith.constant 0 : i32
    %c0_i32_0 = arith.constant 0 : i32
    %c0_i32_1 = arith.constant 0 : i32
    return %c0_i32, %c0_i32_0 : i32, i32
  }
  func.func @transform_5(%arg0: i32) -> (i32, i32) {
    %c0_i32 = arith.constant 0 : i32
    %c0_i32_0 = arith.constant 0 : i32
    %c0_i32_1 = arith.constant 0 : i32
    return %c0_i32, %c0_i32_0 : i32, i32
  }
}

module attributes {stable_mosaic.version = 11 : i64} {
  func.func @conv_stats_kernel(%arg0: i32, %arg1: memref<1x288x384xbf16, #tpu.memory_space<vmem>>, %arg2: memref<3x384x128xbf16, #tpu.memory_space<vmem>>, %arg3: memref<1x256x128xbf16, #tpu.memory_space<vmem>>, %arg4: memref<1x128xf32, #tpu.memory_space<vmem>>, %arg5: memref<1x128xf32, #tpu.memory_space<vmem>>, %arg6: memref<1x128xf32, #tpu.memory_space<vmem>>) attributes {dimension_semantics = [#tpu.dimension_semantics<arbitrary>], iteration_bounds = array<i64: 2>, scalar_prefetch = 0 : i64, scratch_operands = 0 : i64, tpu.core_type = #tpu.core_type<tc>, window_params = [{transform_indices = @transform_0, window_bounds = array<i64: 1, 288, 384>}, {pipeline_mode = #tpu.pipeline_mode<synchronous>, transform_indices = @transform_1, window_bounds = array<i64: 3, 384, 128>}, {transform_indices = @transform_2, window_bounds = array<i64: 1, 256, 128>}, {pipeline_mode = #tpu.pipeline_mode<synchronous>, transform_indices = @transform_3, window_bounds = array<i64: 1, 128>}, {pipeline_mode = #tpu.pipeline_mode<synchronous>, transform_indices = @transform_4, window_bounds = array<i64: 1, 128>}, {pipeline_mode = #tpu.pipeline_mode<synchronous>, transform_indices = @transform_5, window_bounds = array<i64: 1, 128>}]} {
    %cst = arith.constant 0.000000e+00 : f32
    %0 = vector.broadcast %cst : f32 to vector<256x128xf32>
    %c0 = arith.constant 0 : index
    %c0_0 = arith.constant 0 : index
    %c0_1 = arith.constant 0 : index
    %1 = vector.load %arg1[%c0, %c0_0, %c0_1] : memref<1x288x384xbf16, #tpu.memory_space<vmem>>, vector<1x256x384xbf16>
    %2 = vector.shape_cast %1 : vector<1x256x384xbf16> to vector<256x384xbf16>
    %c0_2 = arith.constant 0 : index
    %c0_3 = arith.constant 0 : index
    %c0_4 = arith.constant 0 : index
    %3 = vector.load %arg2[%c0_2, %c0_3, %c0_4] : memref<3x384x128xbf16, #tpu.memory_space<vmem>>, vector<1x384x128xbf16>
    %4 = vector.shape_cast %3 : vector<1x384x128xbf16> to vector<384x128xbf16>
    %cst_5 = arith.constant dense<0.000000e+00> : vector<256x128xf32>
    %5 = tpu.matmul %2, %4, %cst_5 {dimension_numbers = #tpu.dot_dimension_numbers<[1], [0], [0], [1], [0, 0, 1, 1], [], []>} : vector<256x384xbf16>, vector<384x128xbf16>, vector<256x128xf32> -> vector<256x128xf32>
    %6 = arith.addf %0, %5 : vector<256x128xf32>
    %c0_6 = arith.constant 0 : index
    %c16 = arith.constant 16 : index
    %c0_7 = arith.constant 0 : index
    %7 = vector.load %arg1[%c0_6, %c16, %c0_7] : memref<1x288x384xbf16, #tpu.memory_space<vmem>>, vector<1x256x384xbf16>
    %8 = vector.shape_cast %7 : vector<1x256x384xbf16> to vector<256x384xbf16>
    %c1 = arith.constant 1 : index
    %c0_8 = arith.constant 0 : index
    %c0_9 = arith.constant 0 : index
    %9 = vector.load %arg2[%c1, %c0_8, %c0_9] : memref<3x384x128xbf16, #tpu.memory_space<vmem>>, vector<1x384x128xbf16>
    %10 = vector.shape_cast %9 : vector<1x384x128xbf16> to vector<384x128xbf16>
    %cst_10 = arith.constant dense<0.000000e+00> : vector<256x128xf32>
    %11 = tpu.matmul %8, %10, %cst_10 {dimension_numbers = #tpu.dot_dimension_numbers<[1], [0], [0], [1], [0, 0, 1, 1], [], []>} : vector<256x384xbf16>, vector<384x128xbf16>, vector<256x128xf32> -> vector<256x128xf32>
    %12 = arith.addf %6, %11 : vector<256x128xf32>
    %c0_11 = arith.constant 0 : index
    %c32 = arith.constant 32 : index
    %c0_12 = arith.constant 0 : index
    %13 = vector.load %arg1[%c0_11, %c32, %c0_12] : memref<1x288x384xbf16, #tpu.memory_space<vmem>>, vector<1x256x384xbf16>
    %14 = vector.shape_cast %13 : vector<1x256x384xbf16> to vector<256x384xbf16>
    %c2 = arith.constant 2 : index
    %c0_13 = arith.constant 0 : index
    %c0_14 = arith.constant 0 : index
    %15 = vector.load %arg2[%c2, %c0_13, %c0_14] : memref<3x384x128xbf16, #tpu.memory_space<vmem>>, vector<1x384x128xbf16>
    %16 = vector.shape_cast %15 : vector<1x384x128xbf16> to vector<384x128xbf16>
    %cst_15 = arith.constant dense<0.000000e+00> : vector<256x128xf32>
    %17 = tpu.matmul %14, %16, %cst_15 {dimension_numbers = #tpu.dot_dimension_numbers<[1], [0], [0], [1], [0, 0, 1, 1], [], []>} : vector<256x384xbf16>, vector<384x128xbf16>, vector<256x128xf32> -> vector<256x128xf32>
    %18 = arith.addf %12, %17 : vector<256x128xf32>
    %19 = arith.truncf %18 : vector<256x128xf32> to vector<256x128xbf16>
    %c0_16 = arith.constant 0 : index
    %c0_17 = arith.constant 0 : index
    %c0_18 = arith.constant 0 : index
    %20 = vector.load %arg3[%c0_16, %c0_17, %c0_18] : memref<1x256x128xbf16, #tpu.memory_space<vmem>>, vector<1x256x128xbf16>
    %21 = vector.shape_cast %20 : vector<1x256x128xbf16> to vector<256x128xbf16>
    %22 = vector.shape_cast %19 : vector<256x128xbf16> to vector<1x256x128xbf16>
    tpu.vector_store %arg3[%c0_16, %c0_17, %c0_18], %22 {strides = array<i32>} : memref<1x256x128xbf16, #tpu.memory_space<vmem>>, vector<1x256x128xbf16>,
    %cst_19 = arith.constant dense<0.000000e+00> : vector<128xf32>
    %23 = vector.multi_reduction <add>, %18, %cst_19 [0] : vector<256x128xf32> to vector<128xf32>
    %24 = vector.shape_cast %23 : vector<128xf32> to vector<1x128xf32>
    %cst_20 = arith.constant 3.906250e-03 : f32
    %25 = vector.broadcast %cst_20 : f32 to vector<1x128xf32>
    %26 = arith.mulf %24, %25 : vector<1x128xf32>
    %27 = vector.broadcast %26 : vector<1x128xf32> to vector<256x128xf32>
    %28 = arith.subf %18, %27 : vector<256x128xf32>
    %29 = arith.mulf %28, %28 : vector<256x128xf32>
    %cst_21 = arith.constant dense<0.000000e+00> : vector<128xf32>
    %30 = vector.multi_reduction <add>, %29, %cst_21 [0] : vector<256x128xf32> to vector<128xf32>
    %31 = vector.shape_cast %30 : vector<128xf32> to vector<1x128xf32>
    %c0_i32 = arith.constant 0 : i32
    %32 = arith.cmpi eq, %arg0, %c0_i32 : i32
    %33 = arith.extui %32 : i1 to i32
    %c0_i32_22 = arith.constant 0 : i32
    %34 = arith.cmpi ne, %33, %c0_i32_22 : i32
    scf.if %34 {
      %cst_35 = arith.constant 0.000000e+00 : f32
      %45 = vector.broadcast %cst_35 : f32 to vector<1x128xf32>
      %c0_36 = arith.constant 0 : index
      %c0_37 = arith.constant 0 : index
      %46 = vector.load %arg4[%c0_36, %c0_37] : memref<1x128xf32, #tpu.memory_space<vmem>>, vector<1x128xf32>
      tpu.vector_store %arg4[%c0_36, %c0_37], %45 {strides = array<i32>} : memref<1x128xf32, #tpu.memory_space<vmem>>, vector<1x128xf32>,
      %cst_38 = arith.constant 0.000000e+00 : f32
      %47 = vector.broadcast %cst_38 : f32 to vector<1x128xf32>
      %c0_39 = arith.constant 0 : index
      %c0_40 = arith.constant 0 : index
      %48 = vector.load %arg5[%c0_39, %c0_40] : memref<1x128xf32, #tpu.memory_space<vmem>>, vector<1x128xf32>
      tpu.vector_store %arg5[%c0_39, %c0_40], %47 {strides = array<i32>} : memref<1x128xf32, #tpu.memory_space<vmem>>, vector<1x128xf32>,
      %cst_41 = arith.constant 0.000000e+00 : f32
      %49 = vector.broadcast %cst_41 : f32 to vector<1x128xf32>
      %c0_42 = arith.constant 0 : index
      %c0_43 = arith.constant 0 : index
      %50 = vector.load %arg6[%c0_42, %c0_43] : memref<1x128xf32, #tpu.memory_space<vmem>>, vector<1x128xf32>
      tpu.vector_store %arg6[%c0_42, %c0_43], %49 {strides = array<i32>} : memref<1x128xf32, #tpu.memory_space<vmem>>, vector<1x128xf32>,
    } else {
    }
    %c0_23 = arith.constant 0 : index
    %c0_24 = arith.constant 0 : index
    %35 = vector.load %arg4[%c0_23, %c0_24] : memref<1x128xf32, #tpu.memory_space<vmem>>, vector<1x128xf32>
    %36 = arith.addf %35, %24 : vector<1x128xf32>
    %c0_25 = arith.constant 0 : index
    %c0_26 = arith.constant 0 : index
    %37 = vector.load %arg4[%c0_25, %c0_26] : memref<1x128xf32, #tpu.memory_space<vmem>>, vector<1x128xf32>
    tpu.vector_store %arg4[%c0_25, %c0_26], %36 {strides = array<i32>} : memref<1x128xf32, #tpu.memory_space<vmem>>, vector<1x128xf32>,
    %c0_27 = arith.constant 0 : index
    %c0_28 = arith.constant 0 : index
    %38 = vector.load %arg5[%c0_27, %c0_28] : memref<1x128xf32, #tpu.memory_space<vmem>>, vector<1x128xf32>
    %39 = arith.addf %38, %31 : vector<1x128xf32>
    %c0_29 = arith.constant 0 : index
    %c0_30 = arith.constant 0 : index
    %40 = vector.load %arg5[%c0_29, %c0_30] : memref<1x128xf32, #tpu.memory_space<vmem>>, vector<1x128xf32>
    tpu.vector_store %arg5[%c0_29, %c0_30], %39 {strides = array<i32>} : memref<1x128xf32, #tpu.memory_space<vmem>>, vector<1x128xf32>,
    %c0_31 = arith.constant 0 : index
    %c0_32 = arith.constant 0 : index
    %41 = vector.load %arg6[%c0_31, %c0_32] : memref<1x128xf32, #tpu.memory_space<vmem>>, vector<1x128xf32>
    %42 = arith.mulf %26, %26 : vector<1x128xf32>
    %43 = arith.addf %41, %42 : vector<1x128xf32>
    %c0_33 = arith.constant 0 : index
    %c0_34 = arith.constant 0 : index
    %44 = vector.load %arg6[%c0_33, %c0_34] : memref<1x128xf32, #tpu.memory_space<vmem>>, vector<1x128xf32>
    tpu.vector_store %arg6[%c0_33, %c0_34], %43 {strides = array<i32>} : memref<1x128xf32, #tpu.memory_space<vmem>>, vector<1x128xf32>,
    return
  }
  func.func @transform_0(%arg0: i32) -> (i32, i32, i32) {
    %c0_i32 = arith.constant 0 : i32
    %c0_i32_0 = arith.constant 0 : i32
    %c0_i32_1 = arith.constant 0 : i32
    return %arg0, %c0_i32, %c0_i32_0 : i32, i32, i32
  }
  func.func @transform_1(%arg0: i32) -> (i32, i32, i32) {
    %c0_i32 = arith.constant 0 : i32
    %c0_i32_0 = arith.constant 0 : i32
    %c0_i32_1 = arith.constant 0 : i32
    %c0_i32_2 = arith.constant 0 : i32
    return %c0_i32, %c0_i32_0, %c0_i32_1 : i32, i32, i32
  }
  func.func @transform_2(%arg0: i32) -> (i32, i32, i32) {
    %c0_i32 = arith.constant 0 : i32
    %c0_i32_0 = arith.constant 0 : i32
    %c0_i32_1 = arith.constant 0 : i32
    return %arg0, %c0_i32, %c0_i32_0 : i32, i32, i32
  }
  func.func @transform_3(%arg0: i32) -> (i32, i32) {
    %c0_i32 = arith.constant 0 : i32
    %c0_i32_0 = arith.constant 0 : i32
    %c0_i32_1 = arith.constant 0 : i32
    return %c0_i32, %c0_i32_0 : i32, i32
  }
  func.func @transform_4(%arg0: i32) -> (i32, i32) {
    %c0_i32 = arith.constant 0 : i32
    %c0_i32_0 = arith.constant 0 : i32
    %c0_i32_1 = arith.constant 0 : i32
    return %c0_i32, %c0_i32_0 : i32, i32
  }
  func.func @transform_5(%arg0: i32) -> (i32, i32) {
    %c0_i32 = arith.constant 0 : i32
    %c0_i32_0 = arith.constant 0 : i32
    %c0_i32_1 = arith.constant 0 : i32
    return %c0_i32, %c0_i32_0 : i32, i32
  }
}

</mosaic_0001>

<llo_original>
// kernel: tpu_custom_call.1
$region0: #{tpu_custom_call.1}
  #allocation0 [shape = 'u32[]', space=smem, size = 0x4, offset = 0x4, fixed_abs, tag = 'smem constant byte address 0x4 - core index']
  #allocation1 [shape = 'u32[144,128]{1,0:T(1,128)}', space=vmem, size = 0x12000, scoped, tag = 'internal scratch']
  %s0 = inlined_call_operand.hbm [shape: bf16[2,288,384], index: 0, kind: input, shape index: {}]
  %s1 = inlined_call_operand.hbm [shape: bf16[3,384,128], index: 1, kind: input, shape index: {}]
  %s2 = inlined_call_operand.hbm [shape: bf16[2,256,128], index: 2, kind: output, shape index: {0}]
  %s3 = inlined_call_operand.hbm [shape: f32[1,128], index: 3, kind: output, shape index: {1}]
  %s4 = inlined_call_operand.hbm [shape: f32[1,128], index: 4, kind: output, shape index: {2}]
  %s5 = inlined_call_operand.hbm [shape: f32[1,128], index: 5, kind: output, shape index: {3}]
  %6 = xla_tuple %s2, %s3, %s4, %s5
  %s7 = sld [smem:[#allocation0]]
  $region77: #{tpu_custom_call.1} parent=0
    _
  %s9 = ssub.s32 1, %s7
  %s10 = scalar_select 0, %s9, %s7
  $region1: #{tpu_custom_call.1} parent=0
    #allocation2 [shape = 'u8[442368]{0}', space=vmem, size = 0x6c000, scoped, tag = 'input window, operand 0']
    #allocation3 [shape = 's32[2]{0}', space=sflag, size = 0x8, scoped, tag = 'scoped memory for tpu_custom_call.1']
    #allocation4 [shape = 's32[2]{0}', space=sflag, size = 0x8, scoped, tag = 'scoped memory for tpu_custom_call.1']
    #allocation5 [shape = 'u8[294912]{0}', space=vmem, size = 0x48000, scoped, tag = 'input window, operand 1, single buffered']
    #allocation6 [shape = 's32[1]{0}', space=sflag, size = 0x4, scoped, tag = 'scoped memory for tpu_custom_call.1']
    #allocation7 [shape = 'u8[131072]{0}', space=vmem, size = 0x20000, scoped, tag = 'output window, operand 0']
    #allocation8 [shape = 'u8[512]{0}', space=vmem, size = 0x400, scoped, tag = 'output window, operand 1, single buffered']
    #allocation9 [shape = 's32[1]{0}', space=sflag, size = 0x4, scoped, tag = 'scoped memory for tpu_custom_call.1']
    #allocation10 [shape = 'u8[512]{0}', space=vmem, size = 0x400, scoped, tag = 'output window, operand 2, single buffered']
    #allocation11 [shape = 'u8[512]{0}', space=vmem, size = 0x400, scoped, tag = 'output window, operand 3, single buffered']
    #allocation12 [shape = 's32[1]{0}', space=sflag, size = 0x4, scoped, tag = 'scoped memory for tpu_custom_call.1']
    %11 = vsyncpa [#allocation3], 0
    %s12 = scalar_lea.sflag [#allocation3], 1
    %13 = vsyncpa %s12, 0
    %14 = vsyncpa [#allocation6], 0
    %15 = vsyncpa [#allocation4], 0
    %s16 = scalar_lea.sflag [#allocation4], 1
    %17 = vsyncpa %s16, 0
    %18 = vsyncpa [#allocation9], 0
    %19 = vsyncpa [#allocation12], 0
    loop: start=0, step=1, limit=4
    $region2: #{tpu_custom_call.1} parent=1 // loop_pre_header
      _
    $region3: #{tpu_custom_call.1} parent=1 // loop_header
      %s21 = sphi 0, %s25
      %p22 = scmp.ge.s32.totalorder %s21, 4
      %s31 = sphi 0, %s33
      %s34 = sphi 0, %s31
      %s35 = sphi 0, %s34
      %s51 = sphi 0, %s35
      %s55 = sphi 0, %s55
      %s57 = sphi 0, %s55
      %s58 = sphi 0, %s57
      %s72 = sphi 0, %s58
      %s78 = sphi 0, %s80
      %s81 = sphi 0, %s78
      %s82 = sphi 0, %s81
      %s98 = sphi 0, %s82
      %s102 = sphi 0, %s102
      %s104 = sphi 0, %s102
      %s105 = sphi 0, %s104
      %s119 = sphi 0, %s105
      %s123 = sphi 0, %s123
      %s125 = sphi 0, %s123
      %s126 = sphi 0, %s125
      %s140 = sphi 0, %s126
      %s144 = sphi 0, %s144
      %s146 = sphi 0, %s144
      %s147 = sphi 0, %s146
      %s161 = sphi 0, %s147
    $region4: #{tpu_custom_call.1} parent=1 // loop_header_branch
      %24 = sbr.rel (%p22) target = $region8
    $region5: #{tpu_custom_call.1} parent=1 // loop_body
      %s26 = ssub.s32 %s21, 1
      %s27 = ssub.s32 %s21, 2
      %s28 = sadd.s32 %s21, 1
      %s29 = ssub.s32 %s21, %s28
      %p30 = scmp.eq.s32.totalorder %s29, 0
      %s32 = sadd.s32 %s31, 1
      %s33 = scalar_select %p30, %s31, %s32
      %p36 = pneg %p30
      %p37 = scmp.eq.s32.totalorder %s21, 1
      %p38 = por %p36, %p37
      %p39 = scmp.ne.s32.totalorder %s31, %s34
      %p40 = scmp.eq.s32.totalorder %s21, 0
      %p41 = por %p39, %p40
      %p42 = scmp.ne.s32.totalorder %s31, %s34
      %p43 = scmp.eq.s32.totalorder %s26, 1
      %p44 = por %p42, %p43
      %p45 = scmp.ne.s32.totalorder %s34, %s35
      %p46 = scmp.eq.s32.totalorder %s26, 0
      %p47 = por %p45, %p46
      %p48 = scmp.ne.s32.totalorder %s34, %s35
      %p49 = scmp.eq.s32.totalorder %s27, 1
      %p50 = por %p48, %p49
      %p52 = scmp.ne.s32.totalorder %s35, %s51
      %p53 = scmp.eq.s32.totalorder %s27, 0
      %p54 = por %p52, %p53
      %s56 = sadd.s32 %s55, 1
      %p59 = scmp.eq.s32.totalorder %s21, 1
      %p60 = scmp.ne.s32.totalorder %s55, %s57
      %p61 = scmp.eq.s32.totalorder %s21, 0
      %p62 = por %p60, %p61
      %p63 = scmp.ne.s32.totalorder %s55, %s57
      %p64 = scmp.eq.s32.totalorder %s26, 1
      %p65 = por %p63, %p64
      %p66 = scmp.ne.s32.totalorder %s57, %s58
      %p67 = scmp.eq.s32.totalorder %s26, 0
      %p68 = por %p66, %p67
      %p69 = scmp.ne.s32.totalorder %s57, %s58
      %p70 = scmp.eq.s32.totalorder %s27, 1
      %p71 = por %p69, %p70
      %p73 = scmp.ne.s32.totalorder %s58, %s72
      %p74 = scmp.eq.s32.totalorder %s27, 0
      %p75 = por %p73, %p74
      %s76 = ssub.s32 %s21, %s28
      %p77 = scmp.eq.s32.totalorder %s76, 0
      %s79 = sadd.s32 %s78, 1
      %s80 = scalar_select %p77, %s78, %s79
      %p83 = pneg %p77
      %p84 = scmp.eq.s32.totalorder %s21, 1
      %p85 = por %p83, %p84
      %p86 = scmp.ne.s32.totalorder %s78, %s81
      %p87 = scmp.eq.s32.totalorder %s21, 0
      %p88 = por %p86, %p87
      %p89 = scmp.ne.s32.totalorder %s78, %s81
      %p90 = scmp.eq.s32.totalorder %s26, 1
      %p91 = por %p89, %p90
      %p92 = scmp.ne.s32.totalorder %s81, %s82
      %p93 = scmp.eq.s32.totalorder %s26, 0
      %p94 = por %p92, %p93
      %p95 = scmp.ne.s32.totalorder %s81, %s82
      %p96 = scmp.eq.s32.totalorder %s27, 1
      %p97 = por %p95, %p96
      %p99 = scmp.ne.s32.totalorder %s82, %s98
      %p100 = scmp.eq.s32.totalorder %s27, 0
      %p101 = por %p99, %p100
      %s103 = sadd.s32 %s102, 1
      %p106 = scmp.eq.s32.totalorder %s21, 1
      %p107 = scmp.ne.s32.totalorder %s102, %s104
      %p108 = scmp.eq.s32.totalorder %s21, 0
      %p109 = por %p107, %p108
      %p110 = scmp.ne.s32.totalorder %s102, %s104
      %p111 = scmp.eq.s32.totalorder %s26, 1
      %p112 = por %p110, %p111
      %p113 = scmp.ne.s32.totalorder %s104, %s105
      %p114 = scmp.eq.s32.totalorder %s26, 0
      %p115 = por %p113, %p114
      %p116 = scmp.ne.s32.totalorder %s104, %s105
      %p117 = scmp.eq.s32.totalorder %s27, 1
      %p118 = por %p116, %p117
      %p120 = scmp.ne.s32.totalorder %s105, %s119
      %p121 = scmp.eq.s32.totalorder %s27, 0
      %p122 = por %p120, %p121
      %s124 = sadd.s32 %s123, 1
      %p127 = scmp.eq.s32.totalorder %s21, 1
      %p128 = scmp.ne.s32.totalorder %s123, %s125
      %p129 = scmp.eq.s32.totalorder %s21, 0
      %p130 = por %p128, %p129
      %p131 = scmp.ne.s32.totalorder %s123, %s125
      %p132 = scmp.eq.s32.totalorder %s26, 1
      %p133 = por %p131, %p132
      %p134 = scmp.ne.s32.totalorder %s125, %s126
      %p135 = scmp.eq.s32.totalorder %s26, 0
      %p136 = por %p134, %p135
      %p137 = scmp.ne.s32.totalorder %s125, %s126
      %p138 = scmp.eq.s32.totalorder %s27, 1
      %p139 = por %p137, %p138
      %p141 = scmp.ne.s32.totalorder %s126, %s140
      %p142 = scmp.eq.s32.totalorder %s27, 0
      %p143 = por %p141, %p142
      %s145 = sadd.s32 %s144, 1
      %p148 = scmp.eq.s32.totalorder %s21, 1
      %p149 = scmp.ne.s32.totalorder %s144, %s146
      %p150 = scmp.eq.s32.totalorder %s21, 0
      %p151 = por %p149, %p150
      %p152 = scmp.ne.s32.totalorder %s144, %s146
      %p153 = scmp.eq.s32.totalorder %s26, 1
      %p154 = por %p152, %p153
      %p155 = scmp.ne.s32.totalorder %s146, %s147
      %p156 = scmp.eq.s32.totalorder %s26, 0
      %p157 = por %p155, %p156
      %p158 = scmp.ne.s32.totalorder %s146, %s147
      %p159 = scmp.eq.s32.totalorder %s27, 1
      %p160 = por %p158, %p159
      %p162 = scmp.ne.s32.totalorder %s147, %s161
      %p163 = scmp.eq.s32.totalorder %s27, 0
      %p164 = por %p162, %p163
      %p165 = scmp.le.s32.totalorder 1, %s21
      %p166 = scmp.lt.s32.totalorder %s21, 3
      %p167 = pnand %p165, %p166
      %p168 = pneg %p167
      // Predicated region
      $region9: #{tpu_custom_call.1} parent=5 // pred_check
        _
      $region10: #{tpu_custom_call.1} parent=5 // pred_check_branch
        %170 = sbr.rel (%p167) target = $region12
      $region11: #{tpu_custom_call.1} parent=5 // pred_region
        %s171 = ssub.s32 %s21, 1
        // Predicated region
        $region13: #{tpu_custom_call.1} parent=11 // pred_check
          %p172 = pneg %p68
        $region14: #{tpu_custom_call.1} parent=11 // pred_check_branch
          %174 = sbr.rel (%p172) target = $region16
        $region15: #{tpu_custom_call.1} parent=11 // pred_region
          %s176 = ssub.s32 9216, 9216
          %177 = vsyncadd [#allocation6], %s176
          %s178 = sshll.u32 [#allocation5], 4
          %s179 = int_to_ptr.vmem [resolvable:$true] %s178
          %184 = dma.hbm_to_vmem [thread:$0]  %s1, 9216, %s179, [#allocation6], 64, 64, 4
        $region16: #{tpu_custom_call.1} parent=11 // pred_fallthru
          _
      $region12: #{tpu_custom_call.1} parent=5 // pred_fallthru
        _
      %p185 = scmp.lt.s32.totalorder %s21, 2
      // Predicated region
      $region17: #{tpu_custom_call.1} parent=5 // pred_check
        %p186 = pneg %p185
      $region18: #{tpu_custom_call.1} parent=5 // pred_check_branch
        %188 = sbr.rel (%p186) target = $region20
      $region19: #{tpu_custom_call.1} parent=5 // pred_region
        // Predicated region
        $region21: #{tpu_custom_call.1} parent=19 // pred_check
          %p189 = pneg %p41
        $region22: #{tpu_custom_call.1} parent=19 // pred_check_branch
          %191 = sbr.rel (%p189) target = $region24
        $region23: #{tpu_custom_call.1} parent=19 // pred_region
          %s192 = sand.u32 %s31, 1
          %s193 = scalar_lea.sflag [#allocation3], %s192
          %s194 = sand.u32 %s31, 1
          %s195 = smul.addr %s194, 432
          %s196 = scalar_lea.vmem [#allocation2], %s195
          %s198 = ssub.s32 6912, 6912
          %199 = vsyncadd %s193, %s198
          %s200 = smul.addr %s21, 108
          %s201 = smul.addr %s200, 64
          %s202 = scalar_lea.hbm %s0, %s201
          %s203 = sshll.u32 %s196, 4
          %s204 = int_to_ptr.vmem [resolvable:$true] %s203
          %209 = dma.hbm_to_vmem [thread:$0]  %s202, 6912, %s204, %s193, 192, 192, 12
        $region24: #{tpu_custom_call.1} parent=19 // pred_fallthru
          _
      $region20: #{tpu_custom_call.1} parent=5 // pred_fallthru
        _
      %p210 = scmp.le.s32.totalorder 1, %s21
      %p211 = scmp.lt.s32.totalorder %s21, 3
      %p212 = pnand %p210, %p211
      %p213 = pneg %p212
      // Predicated region
      $region25: #{tpu_custom_call.1} parent=5 // pred_check
        _
      $region26: #{tpu_custom_call.1} parent=5 // pred_check_branch
        %215 = sbr.rel (%p212) target = $region28
      $region27: #{tpu_custom_call.1} parent=5 // pred_region
        %s216 = ssub.s32 %s21, 1
        %s217 = sand.u32 %s34, 1
        %s218 = scalar_lea.sflag [#allocation3], %s217
        %s219 = sand.u32 %s34, 1
        %s220 = smul.addr %s219, 432
        %s221 = scalar_lea.vmem [#allocation2], %s220
        // Predicated region
        $region29: #{tpu_custom_call.1} parent=27 // pred_check
          %p222 = pneg %p47
        $region30: #{tpu_custom_call.1} parent=27 // pred_check_branch
          %224 = sbr.rel (%p222) target = $region32
        $region31: #{tpu_custom_call.1} parent=27 // pred_region
          %225 = dma.done %s218, 6912
        $region32: #{tpu_custom_call.1} parent=27 // pred_fallthru
          _
        // Predicated region
        $region33: #{tpu_custom_call.1} parent=27 // pred_check
          %p226 = pneg %p68
        $region34: #{tpu_custom_call.1} parent=27 // pred_check_branch
          %228 = sbr.rel (%p226) target = $region36
        $region35: #{tpu_custom_call.1} parent=27 // pred_region
          %229 = dma.done [#allocation6], 9216
        $region36: #{tpu_custom_call.1} parent=27 // pred_fallthru
          _
        %s230 = sand.u32 %s34, 1
        %s231 = scalar_lea.sflag [#allocation3], %s230
        %s232 = sand.u32 %s34, 1
        %s233 = smul.addr %s232, 432
        %s234 = scalar_lea.vmem [#allocation2], %s233
        %p235 = pneg %p47
        %p236 = pneg %p44
        %p237 = pneg %p68
        %p238 = pneg %p65
        %p239 = pneg %p94
        %p240 = pneg %p91
        %s241 = sand.u32 %s81, 1
        %s242 = scalar_lea.sflag [#allocation4], %s241
        %s243 = sand.u32 %s81, 1
        %s244 = smul.addr %s243, 128
        %s245 = scalar_lea.vmem [#allocation7], %s244
        %p246 = pneg %p115
        %p247 = pneg %p112
        %p248 = pneg %p136
        %p249 = pneg %p133
        %p250 = pneg %p157
        %p251 = pneg %p154
        %v253 = vld [vmem:[%s221] sm:$0xff]
        %v254 = vld [vmem:[%s221 + $0x8] sm:$0xf]
        %v255 = vld [vmem:[%s221 + $0xc] sm:$0xff]
        %v256 = vld [vmem:[%s221 + $0x14] sm:$0xf]
        %v257 = vld [vmem:[%s221 + $0x18] sm:$0xff]
        %v258 = vld [vmem:[%s221 + $0x20] sm:$0xf]
        %v259 = vld [vmem:[%s221 + $0x24] sm:$0xff]
        %v260 = vld [vmem:[%s221 + $0x2c] sm:$0xf]
        %v261 = vld [vmem:[%s221 + $0x30] sm:$0xff]
        %v262 = vld [vmem:[%s221 + $0x38] sm:$0xf]
        %v263 = vld [vmem:[%s221 + $0x3c] sm:$0xff]
        %v264 = vld [vmem:[%s221 + $0x44] sm:$0xf]
        %v265 = vld [vmem:[%s221 + $0x48] sm:$0xff]
        %v266 = vld [vmem:[%s221 + $0x50] sm:$0xf]
        %v267 = vld [vmem:[%s221 + $0x54] sm:$0xff]
        %v268 = vld [vmem:[%s221 + $0x5c] sm:$0xf]
        %v269 = vld [vmem:[%s221 + $0x60] sm:$0xff]
        %v270 = vld [vmem:[%s221 + $0x68] sm:$0xf]
        %v271 = vld [vmem:[%s221 + $0x6c] sm:$0xff]
        %v272 = vld [vmem:[%s221 + $0x74] sm:$0xf]
        %v273 = vld [vmem:[%s221 + $0x78] sm:$0xff]
        %v274 = vld [vmem:[%s221 + $0x80] sm:$0xf]
        %v275 = vld [vmem:[%s221 + $0x84] sm:$0xff]
        %v276 = vld [vmem:[%s221 + $0x8c] sm:$0xf]
        %v277 = vld [vmem:[%s221 + $0x90] sm:$0xff]
        %v278 = vld [vmem:[%s221 + $0x98] sm:$0xf]
        %v279 = vld [vmem:[%s221 + $0x9c] sm:$0xff]
        %v280 = vld [vmem:[%s221 + $0xa4] sm:$0xf]
        %v281 = vld [vmem:[%s221 + $0xa8] sm:$0xff]
        %v282 = vld [vmem:[%s221 + $0xb0] sm:$0xf]
        %v283 = vld [vmem:[%s221 + $0xb4] sm:$0xff]
        %v284 = vld [vmem:[%s221 + $0xbc] sm:$0xf]
        %v285 = vld [vmem:[%s221 + $0xc0] sm:$0xff]
        %v286 = vld [vmem:[%s221 + $0xc8] sm:$0xf]
        %v287 = vld [vmem:[%s221 + $0xcc] sm:$0xff]
        %v288 = vld [vmem:[%s221 + $0xd4] sm:$0xf]
        %v289 = vld [vmem:[%s221 + $0xd8] sm:$0xff]
        %v290 = vld [vmem:[%s221 + $0xe0] sm:$0xf]
        %v291 = vld [vmem:[%s221 + $0xe4] sm:$0xff]
        %v292 = vld [vmem:[%s221 + $0xec] sm:$0xf]
        %v293 = vld [vmem:[%s221 + $0xf0] sm:$0xff]
        %v294 = vld [vmem:[%s221 + $0xf8] sm:$0xf]
        %v295 = vld [vmem:[%s221 + $0xfc] sm:$0xff]
        %v296 = vld [vmem:[%s221 + $0x104] sm:$0xf]
        %v297 = vld [vmem:[%s221 + $0x108] sm:$0xff]
        %v298 = vld [vmem:[%s221 + $0x110] sm:$0xf]
        %v299 = vld [vmem:[%s221 + $0x114] sm:$0xff]
        %v300 = vld [vmem:[%s221 + $0x11c] sm:$0xf]
        %v301 = vld [vmem:[%s221 + $0x120] sm:$0xff]
        %v302 = vld [vmem:[%s221 + $0x128] sm:$0xf]
        %v303 = vld [vmem:[%s221 + $0x12c] sm:$0xff]
        %v304 = vld [vmem:[%s221 + $0x134] sm:$0xf]
        %v305 = vld [vmem:[%s221 + $0x138] sm:$0xff]
        %v306 = vld [vmem:[%s221 + $0x140] sm:$0xf]
        %v307 = vld [vmem:[%s221 + $0x144] sm:$0xff]
        %v308 = vld [vmem:[%s221 + $0x14c] sm:$0xf]
        %v309 = vld [vmem:[%s221 + $0x150] sm:$0xff]
        %v310 = vld [vmem:[%s221 + $0x158] sm:$0xf]
        %v311 = vld [vmem:[%s221 + $0x15c] sm:$0xff]
        %v312 = vld [vmem:[%s221 + $0x164] sm:$0xf]
        %v313 = vld [vmem:[%s221 + $0x168] sm:$0xff]
        %v314 = vld [vmem:[%s221 + $0x170] sm:$0xf]
        %v315 = vld [vmem:[%s221 + $0x174] sm:$0xff]
        %v316 = vld [vmem:[%s221 + $0x17c] sm:$0xf]
        %v317 = vld [vmem:[#allocation5] sm:$0xf]
        %v318 = vld [vmem:[#allocation5 + $0x4] sm:$0xf]
        %v319 = vld [vmem:[#allocation5 + $0x8] sm:$0xf]
        %v320 = vld [vmem:[#allocation5 + $0xc] sm:$0xf]
        %v321 = vld [vmem:[#allocation5 + $0x10] sm:$0xf]
        %v322 = vld [vmem:[#allocation5 + $0x14] sm:$0xf]
        %v323 = vld [vmem:[#allocation5 + $0x18] sm:$0xf]
        %v324 = vld [vmem:[#allocation5 + $0x1c] sm:$0xf]
        %v325 = vld [vmem:[#allocation5 + $0x20] sm:$0xf]
        %v326 = vld [vmem:[#allocation5 + $0x24] sm:$0xf]
        %v327 = vld [vmem:[#allocation5 + $0x28] sm:$0xf]
        %v328 = vld [vmem:[#allocation5 + $0x2c] sm:$0xf]
        %v329 = vld [vmem:[#allocation5 + $0x30] sm:$0xf]
        %v330 = vld [vmem:[#allocation5 + $0x34] sm:$0xf]
        %v331 = vld [vmem:[#allocation5 + $0x38] sm:$0xf]
        %v332 = vld [vmem:[#allocation5 + $0x3c] sm:$0xf]
        %v333 = vld [vmem:[#allocation5 + $0x40] sm:$0xf]
        %v334 = vld [vmem:[#allocation5 + $0x44] sm:$0xf]
        %v335 = vld [vmem:[#allocation5 + $0x48] sm:$0xf]
        %v336 = vld [vmem:[#allocation5 + $0x4c] sm:$0xf]
        %v337 = vld [vmem:[#allocation5 + $0x50] sm:$0xf]
        %v338 = vld [vmem:[#allocation5 + $0x54] sm:$0xf]
        %v339 = vld [vmem:[#allocation5 + $0x58] sm:$0xf]
        %v340 = vld [vmem:[#allocation5 + $0x5c] sm:$0xf]
        %v341 = vld [vmem:[#allocation5 + $0x60] sm:$0xf]
        %v342 = vld [vmem:[#allocation5 + $0x64] sm:$0xf]
        %v343 = vld [vmem:[#allocation5 + $0x68] sm:$0xf]
        %v344 = vld [vmem:[#allocation5 + $0x6c] sm:$0xf]
        %v345 = vld [vmem:[#allocation5 + $0x70] sm:$0xf]
        %v346 = vld [vmem:[#allocation5 + $0x74] sm:$0xf]
        %v347 = vld [vmem:[#allocation5 + $0x78] sm:$0xf]
        %v348 = vld [vmem:[#allocation5 + $0x7c] sm:$0xf]
        %v349 = vld [vmem:[#allocation5 + $0x80] sm:$0xf]
        %v350 = vld [vmem:[#allocation5 + $0x84] sm:$0xf]
        %v351 = vld [vmem:[#allocation5 + $0x88] sm:$0xf]
        %v352 = vld [vmem:[#allocation5 + $0x8c] sm:$0xf]
        %v353 = vld [vmem:[#allocation5 + $0x90] sm:$0xf]
        %v354 = vld [vmem:[#allocation5 + $0x94] sm:$0xf]
        %v355 = vld [vmem:[#allocation5 + $0x98] sm:$0xf]
        %v356 = vld [vmem:[#allocation5 + $0x9c] sm:$0xf]
        %v357 = vld [vmem:[#allocation5 + $0xa0] sm:$0xf]
        %v358 = vld [vmem:[#allocation5 + $0xa4] sm:$0xf]
        %v359 = vld [vmem:[#allocation5 + $0xa8] sm:$0xf]
        %v360 = vld [vmem:[#allocation5 + $0xac] sm:$0xf]
        %v361 = vld [vmem:[#allocation5 + $0xb0] sm:$0xf]
        %v362 = vld [vmem:[#allocation5 + $0xb4] sm:$0xf]
        %v363 = vld [vmem:[#allocation5 + $0xb8] sm:$0xf]
        %v364 = vld [vmem:[#allocation5 + $0xbc] sm:$0xf]
        %v365 = vld [vmem:[%s221 + $0x180] sm:$0xff]
        %v366 = vld [vmem:[%s221 + $0x188] sm:$0xf]
        %v367 = vld [vmem:[%s221 + $0x18c] sm:$0xff]
        %v368 = vld [vmem:[%s221 + $0x194] sm:$0xf]
        %s369 = scalar_lea.vmem [#allocation5], 192
        %v370 = vld [vmem:[%s369] sm:$0xf]
        %v371 = vld [vmem:[%s369 + $0x4] sm:$0xf]
        %v372 = vld [vmem:[%s369 + $0x8] sm:$0xf]
        %v373 = vld [vmem:[%s369 + $0xc] sm:$0xf]
        %v374 = vld [vmem:[%s369 + $0x10] sm:$0xf]
        %v375 = vld [vmem:[%s369 + $0x14] sm:$0xf]
        %v376 = vld [vmem:[%s369 + $0x18] sm:$0xf]
        %v377 = vld [vmem:[%s369 + $0x1c] sm:$0xf]
        %v378 = vld [vmem:[%s369 + $0x20] sm:$0xf]
        %v379 = vld [vmem:[%s369 + $0x24] sm:$0xf]
        %v380 = vld [vmem:[%s369 + $0x28] sm:$0xf]
        %v381 = vld [vmem:[%s369 + $0x2c] sm:$0xf]
        %v382 = vld [vmem:[%s369 + $0x30] sm:$0xf]
        %v383 = vld [vmem:[%s369 + $0x34] sm:$0xf]
        %v384 = vld [vmem:[%s369 + $0x38] sm:$0xf]
        %v385 = vld [vmem:[%s369 + $0x3c] sm:$0xf]
        %v386 = vld [vmem:[%s369 + $0x40] sm:$0xf]
        %v387 = vld [vmem:[%s369 + $0x44] sm:$0xf]
        %v388 = vld [vmem:[%s369 + $0x48] sm:$0xf]
        %v389 = vld [vmem:[%s369 + $0x4c] sm:$0xf]
        %v390 = vld [vmem:[%s369 + $0x50] sm:$0xf]
        %v391 = vld [vmem:[%s369 + $0x54] sm:$0xf]
        %v392 = vld [vmem:[%s369 + $0x58] sm:$0xf]
        %v393 = vld [vmem:[%s369 + $0x5c] sm:$0xf]
        %v394 = vld [vmem:[%s369 + $0x60] sm:$0xf]
        %v395 = vld [vmem:[%s369 + $0x64] sm:$0xf]
        %v396 = vld [vmem:[%s369 + $0x68] sm:$0xf]
        %v397 = vld [vmem:[%s369 + $0x6c] sm:$0xf]
        %v398 = vld [vmem:[%s369 + $0x70] sm:$0xf]
        %v399 = vld [vmem:[%s369 + $0x74] sm:$0xf]
        %v400 = vld [vmem:[%s369 + $0x78] sm:$0xf]
        %v401 = vld [vmem:[%s369 + $0x7c] sm:$0xf]
        %v402 = vld [vmem:[%s369 + $0x80] sm:$0xf]
        %v403 = vld [vmem:[%s369 + $0x84] sm:$0xf]
        %v404 = vld [vmem:[%s369 + $0x88] sm:$0xf]
        %v405 = vld [vmem:[%s369 + $0x8c] sm:$0xf]
        %v406 = vld [vmem:[%s369 + $0x90] sm:$0xf]
        %v407 = vld [vmem:[%s369 + $0x94] sm:$0xf]
        %v408 = vld [vmem:[%s369 + $0x98] sm:$0xf]
        %v409 = vld [vmem:[%s369 + $0x9c] sm:$0xf]
        %v410 = vld [vmem:[%s369 + $0xa0] sm:$0xf]
        %v411 = vld [vmem:[%s369 + $0xa4] sm:$0xf]
        %v412 = vld [vmem:[%s369 + $0xa8] sm:$0xf]
        %v413 = vld [vmem:[%s369 + $0xac] sm:$0xf]
        %v414 = vld [vmem:[%s369 + $0xb0] sm:$0xf]
        %v415 = vld [vmem:[%s369 + $0xb4] sm:$0xf]
        %v416 = vld [vmem:[%s369 + $0xb8] sm:$0xf]
        %v417 = vld [vmem:[%s369 + $0xbc] sm:$0xf]
        %v482 = vunpack.c.l.b16 %v257
        %v483 = vunpack.c.h.b16 %v257
        %v484 = vunpack.c.l.b16 %v258
        %v485 = vunpack.c.l.b16 %v259
        %v486 = vunpack.c.h.b16 %v259
        %v487 = vunpack.c.l.b16 %v260
        %v488 = vunpack.c.l.b16 %v261
        %v489 = vunpack.c.h.b16 %v261
        %v490 = vunpack.c.l.b16 %v262
        %v491 = vunpack.c.l.b16 %v263
        %v492 = vunpack.c.h.b16 %v263
        %v493 = vunpack.c.l.b16 %v264
        %v494 = vunpack.c.l.b16 %v265
        %v495 = vunpack.c.h.b16 %v265
        %v496 = vunpack.c.l.b16 %v266
        %v497 = vunpack.c.l.b16 %v267
        %v498 = vunpack.c.h.b16 %v267
        %v499 = vunpack.c.l.b16 %v268
        %v500 = vunpack.c.l.b16 %v269
        %v501 = vunpack.c.h.b16 %v269
        %v502 = vunpack.c.l.b16 %v270
        %v503 = vunpack.c.l.b16 %v271
        %v504 = vunpack.c.h.b16 %v271
        %v505 = vunpack.c.l.b16 %v272
        %v506 = vunpack.c.l.b16 %v273
        %v507 = vunpack.c.h.b16 %v273
        %v508 = vunpack.c.l.b16 %v274
        %v509 = vunpack.c.l.b16 %v275
        %v510 = vunpack.c.h.b16 %v275
        %v511 = vunpack.c.l.b16 %v276
        %v512 = vunpack.c.l.b16 %v277
        %v513 = vunpack.c.h.b16 %v277
        %v514 = vunpack.c.l.b16 %v278
        %v515 = vunpack.c.l.b16 %v279
        %v516 = vunpack.c.h.b16 %v279
        %v517 = vunpack.c.l.b16 %v280
        %v518 = vunpack.c.l.b16 %v281
        %v519 = vunpack.c.h.b16 %v281
        %v520 = vunpack.c.l.b16 %v282
        %v521 = vunpack.c.l.b16 %v283
        %v522 = vunpack.c.h.b16 %v283
        %v523 = vunpack.c.l.b16 %v284
        %v524 = vunpack.c.l.b16 %v285
        %v525 = vunpack.c.h.b16 %v285
        %v526 = vunpack.c.l.b16 %v286
        %v527 = vunpack.c.l.b16 %v287
        %v528 = vunpack.c.h.b16 %v287
        %v529 = vunpack.c.l.b16 %v288
        %v530 = vunpack.c.l.b16 %v289
        %v531 = vunpack.c.h.b16 %v289
        %v532 = vunpack.c.l.b16 %v290
        %v533 = vunpack.c.l.b16 %v291
        %v534 = vunpack.c.h.b16 %v291
        %v535 = vunpack.c.l.b16 %v292
        %v536 = vunpack.c.l.b16 %v293
        %v537 = vunpack.c.h.b16 %v293
        %v538 = vunpack.c.l.b16 %v294
        %v539 = vunpack.c.l.b16 %v295
        %v540 = vunpack.c.h.b16 %v295
        %v541 = vunpack.c.l.b16 %v296
        %v542 = vunpack.c.l.b16 %v297
        %v543 = vunpack.c.h.b16 %v297
        %v544 = vunpack.c.l.b16 %v298
        %v545 = vunpack.c.l.b16 %v299
        %v546 = vunpack.c.h.b16 %v299
        %v547 = vunpack.c.l.b16 %v300
        %v548 = vunpack.c.l.b16 %v301
        %v549 = vunpack.c.h.b16 %v301
        %v550 = vunpack.c.l.b16 %v302
        %v551 = vunpack.c.l.b16 %v303
        %v552 = vunpack.c.h.b16 %v303
        %v553 = vunpack.c.l.b16 %v304
        %v554 = vunpack.c.l.b16 %v305
        %v555 = vunpack.c.h.b16 %v305
        %v556 = vunpack.c.l.b16 %v306
        %v557 = vunpack.c.l.b16 %v307
        %v558 = vunpack.c.h.b16 %v307
        %v559 = vunpack.c.l.b16 %v308
        %v560 = vunpack.c.l.b16 %v309
        %v561 = vunpack.c.h.b16 %v309
        %v562 = vunpack.c.l.b16 %v310
        %v563 = vunpack.c.l.b16 %v311
        %v564 = vunpack.c.h.b16 %v311
        %v565 = vunpack.c.l.b16 %v312
        %v566 = vunpack.c.l.b16 %v313
        %v567 = vunpack.c.h.b16 %v313
        %v568 = vunpack.c.l.b16 %v314
        %v569 = vunpack.c.l.b16 %v315
        %v570 = vunpack.c.h.b16 %v315
        %v571 = vunpack.c.l.b16 %v316
        %v572 = vunpack.c.l.b16 %v365
        %v573 = vunpack.c.h.b16 %v365
        %v574 = vunpack.c.l.b16 %v366
        %v575 = vunpack.c.l.b16 %v367
        %v576 = vunpack.c.h.b16 %v367
        %v577 = vunpack.c.l.b16 %v368
        %v578 = vpack.c.b16 %v485, %v482
        %v579 = vpack.c.b16 %v486, %v483
        %v580 = vpack.c.b16 %v487, %v484
        %v581 = vpack.c.b16 %v491, %v488
        %v582 = vpack.c.b16 %v492, %v489
        %v583 = vpack.c.b16 %v493, %v490
        %v584 = vpack.c.b16 %v497, %v494
        %v585 = vpack.c.b16 %v498, %v495
        %v586 = vpack.c.b16 %v499, %v496
        %v587 = vpack.c.b16 %v503, %v500
        %v588 = vpack.c.b16 %v504, %v501
        %v589 = vpack.c.b16 %v505, %v502
        %v590 = vpack.c.b16 %v509, %v506
        %v591 = vpack.c.b16 %v510, %v507
        %v592 = vpack.c.b16 %v511, %v508
        %v593 = vpack.c.b16 %v515, %v512
        %v594 = vpack.c.b16 %v516, %v513
        %v595 = vpack.c.b16 %v517, %v514
        %v596 = vpack.c.b16 %v521, %v518
        %v597 = vpack.c.b16 %v522, %v519
        %v598 = vpack.c.b16 %v523, %v520
        %v599 = vpack.c.b16 %v527, %v524
        %v600 = vpack.c.b16 %v528, %v525
        %v601 = vpack.c.b16 %v529, %v526
        %v602 = vpack.c.b16 %v533, %v530
        %v603 = vpack.c.b16 %v534, %v531
        %v604 = vpack.c.b16 %v535, %v532
        %v605 = vpack.c.b16 %v539, %v536
        %v606 = vpack.c.b16 %v540, %v537
        %v607 = vpack.c.b16 %v541, %v538
        %v608 = vpack.c.b16 %v545, %v542
        %v609 = vpack.c.b16 %v546, %v543
        %v610 = vpack.c.b16 %v547, %v544
        %v611 = vpack.c.b16 %v551, %v548
        %v612 = vpack.c.b16 %v552, %v549
        %v613 = vpack.c.b16 %v553, %v550
        %v614 = vpack.c.b16 %v557, %v554
        %v615 = vpack.c.b16 %v558, %v555
        %v616 = vpack.c.b16 %v559, %v556
        %v617 = vpack.c.b16 %v563, %v560
        %v618 = vpack.c.b16 %v564, %v561
        %v619 = vpack.c.b16 %v565, %v562
        %v620 = vpack.c.b16 %v569, %v566
        %v621 = vpack.c.b16 %v570, %v567
        %v622 = vpack.c.b16 %v571, %v568
        %v623 = vpack.c.b16 %v575, %v572
        %v624 = vpack.c.b16 %v576, %v573
        %v625 = vpack.c.b16 %v577, %v574
        %v722 = vunpack.c.l.b16 %v370
        %v723 = vunpack.c.l.b16 %v371
        %v724 = vunpack.c.l.b16 %v372
        %v725 = vunpack.c.l.b16 %v373
        %v726 = vunpack.c.l.b16 %v374
        %v727 = vunpack.c.l.b16 %v375
        %v728 = vunpack.c.l.b16 %v376
        %v729 = vunpack.c.l.b16 %v377
        %v730 = vunpack.c.l.b16 %v378
        %v731 = vunpack.c.l.b16 %v379
        %v732 = vunpack.c.l.b16 %v380
        %v733 = vunpack.c.l.b16 %v381
        %v734 = vunpack.c.l.b16 %v382
        %v735 = vunpack.c.l.b16 %v383
        %v736 = vunpack.c.l.b16 %v384
        %v737 = vunpack.c.l.b16 %v385
        %v738 = vunpack.c.l.b16 %v386
        %v739 = vunpack.c.l.b16 %v387
        %v740 = vunpack.c.l.b16 %v388
        %v741 = vunpack.c.l.b16 %v389
        %v742 = vunpack.c.l.b16 %v390
        %v743 = vunpack.c.l.b16 %v391
        %v744 = vunpack.c.l.b16 %v392
        %v745 = vunpack.c.l.b16 %v393
        %v746 = vunpack.c.l.b16 %v394
        %v747 = vunpack.c.l.b16 %v395
        %v748 = vunpack.c.l.b16 %v396
        %v749 = vunpack.c.l.b16 %v397
        %v750 = vunpack.c.l.b16 %v398
        %v751 = vunpack.c.l.b16 %v399
        %v752 = vunpack.c.l.b16 %v400
        %v753 = vunpack.c.l.b16 %v401
        %v754 = vunpack.c.l.b16 %v402
        %v755 = vunpack.c.l.b16 %v403
        %v756 = vunpack.c.l.b16 %v404
        %v757 = vunpack.c.l.b16 %v405
        %v758 = vunpack.c.l.b16 %v406
        %v759 = vunpack.c.l.b16 %v407
        %v760 = vunpack.c.l.b16 %v408
        %v761 = vunpack.c.l.b16 %v409
        %v762 = vunpack.c.l.b16 %v410
        %v763 = vunpack.c.l.b16 %v411
        %v764 = vunpack.c.l.b16 %v412
        %v765 = vunpack.c.l.b16 %v413
        %v766 = vunpack.c.l.b16 %v414
        %v767 = vunpack.c.l.b16 %v415
        %v768 = vunpack.c.l.b16 %v416
        %v769 = vunpack.c.l.b16 %v417
        %v770 = vpack.c.b16 %v723, %v722
        %v771 = vpack.c.b16 %v725, %v724
        %v772 = vpack.c.b16 %v727, %v726
        %v773 = vpack.c.b16 %v729, %v728
        %v774 = vpack.c.b16 %v731, %v730
        %v775 = vpack.c.b16 %v733, %v732
        %v776 = vpack.c.b16 %v735, %v734
        %v777 = vpack.c.b16 %v737, %v736
        %v778 = vpack.c.b16 %v739, %v738
        %v779 = vpack.c.b16 %v741, %v740
        %v780 = vpack.c.b16 %v743, %v742
        %v781 = vpack.c.b16 %v745, %v744
        %v782 = vpack.c.b16 %v747, %v746
        %v783 = vpack.c.b16 %v749, %v748
        %v784 = vpack.c.b16 %v751, %v750
        %v785 = vpack.c.b16 %v753, %v752
        %v786 = vpack.c.b16 %v755, %v754
        %v787 = vpack.c.b16 %v757, %v756
        %v788 = vpack.c.b16 %v759, %v758
        %v789 = vpack.c.b16 %v761, %v760
        %v790 = vpack.c.b16 %v763, %v762
        %v791 = vpack.c.b16 %v765, %v764
        %v792 = vpack.c.b16 %v767, %v766
        %v793 = vpack.c.b16 %v769, %v768
        %818 = vmatprep.subr.bf16.mxu0 0
        %819 = vmatpush1.bf16.msra.mxu0 %v777
        %820 = vmatprep.subr.bf16.mxu0 0
        %821 = vmatpush1.bf16.msra.mxu0 %v776
        %822 = vmatprep.subr.bf16.mxu0 0
        %823 = vmatpush1.bf16.msra.mxu0 %v775
        %824 = vmatprep.subr.bf16.mxu0 0
        %825 = vmatpush1.bf16.msra.mxu0 %v774
        %826 = vmatprep.subr.bf16.mxu0 0
        %827 = vmatpush1.bf16.msra.mxu0 %v773
        %828 = vmatprep.subr.bf16.mxu0 0
        %829 = vmatpush1.bf16.msra.mxu0 %v772
        %830 = vmatprep.subr.bf16.mxu0 0
        %831 = vmatpush1.bf16.msra.mxu0 %v771
        %832 = vmatprep.subr.bf16.mxu0 0
        %833 = vmatpush1.bf16.msra.mxu0 %v770
        %834 = vmatprep.subr.bf16.mxu0 0
        %835 = vmatpush2.bf16.msra.mxu0 %v785
        %836 = vmatprep.subr.bf16.mxu0 0
        %837 = vmatpush2.bf16.msra.mxu0 %v784
        %838 = vmatprep.subr.bf16.mxu0 0
        %839 = vmatpush2.bf16.msra.mxu0 %v783
        %840 = vmatprep.subr.bf16.mxu0 0
        %841 = vmatpush2.bf16.msra.mxu0 %v782
        %842 = vmatprep.subr.bf16.mxu0 0
        %843 = vmatpush2.bf16.msra.mxu0 %v781
        %844 = vmatprep.subr.bf16.mxu0 0
        %845 = vmatpush2.bf16.msra.mxu0 %v780
        %846 = vmatprep.subr.bf16.mxu0 0
        %847 = vmatpush2.bf16.msra.mxu0 %v779
        %848 = vmatprep.subr.bf16.mxu0 0
        %849 = vmatpush2.bf16.msra.mxu0 %v778
        %850 = vmatprep.mubr.bf16.mxu0 %v579
        %851 = vmatmul.mubr.bf16.gmra.mxu0 %v578
        %v852 = vpop.f32.mrf.mxu0
        %v853 = vadd.f32 0.0, %v852
        %v854 = vpop.f32.mrf.mxu0
        %v855 = vpop.f32.mrf.mxu0
        %v856 = vadd.f32 0.0, %v855
        %v857 = vpop.f32.mrf.mxu0
        %858 = vmatprep.mubr.bf16.mxu0 %v582
        %859 = vmatmul.mubr.bf16.gmra.mxu0 %v581
        %v860 = vpop.f32.mrf.mxu0
        %v861 = vadd.f32 0.0, %v860
        %v862 = vpop.f32.mrf.mxu0
        %v863 = vpop.f32.mrf.mxu0
        %v864 = vadd.f32 0.0, %v863
        %v865 = vpop.f32.mrf.mxu0
        %866 = vmatprep.mubr.bf16.mxu0 %v585
        %867 = vmatmul.mubr.bf16.gmra.mxu0 %v584
        %v868 = vpop.f32.mrf.mxu0
        %v869 = vadd.f32 0.0, %v868
        %v870 = vpop.f32.mrf.mxu0
        %v871 = vpop.f32.mrf.mxu0
        %v872 = vadd.f32 0.0, %v871
        %v873 = vpop.f32.mrf.mxu0
        %874 = vmatprep.mubr.bf16.mxu0 %v588
        %875 = vmatmul.mubr.bf16.gmra.mxu0 %v587
        %v876 = vpop.f32.mrf.mxu0
        %v877 = vadd.f32 0.0, %v876
        %v878 = vpop.f32.mrf.mxu0
        %v879 = vpop.f32.mrf.mxu0
        %v880 = vadd.f32 0.0, %v879
        %v881 = vpop.f32.mrf.mxu0
        %882 = vmatprep.mubr.bf16.mxu0 %v591
        %883 = vmatmul.mubr.bf16.gmra.mxu0 %v590
        %v884 = vpop.f32.mrf.mxu0
        %v885 = vadd.f32 0.0, %v884
        %v886 = vpop.f32.mrf.mxu0
        %v887 = vpop.f32.mrf.mxu0
        %v888 = vadd.f32 0.0, %v887
        %v889 = vpop.f32.mrf.mxu0
        %890 = vmatprep.mubr.bf16.mxu0 %v594
        %891 = vmatmul.mubr.bf16.gmra.mxu0 %v593
        %v892 = vpop.f32.mrf.mxu0
        %v893 = vadd.f32 0.0, %v892
        %v894 = vpop.f32.mrf.mxu0
        %v895 = vpop.f32.mrf.mxu0
        %v896 = vadd.f32 0.0, %v895
        %v897 = vpop.f32.mrf.mxu0
        %898 = vmatprep.mubr.bf16.mxu0 %v597
        %899 = vmatmul.mubr.bf16.gmra.mxu0 %v596
        %v900 = vpop.f32.mrf.mxu0
        %v901 = vadd.f32 0.0, %v900
        %v902 = vpop.f32.mrf.mxu0
        %v903 = vpop.f32.mrf.mxu0
        %v904 = vadd.f32 0.0, %v903
        %v905 = vpop.f32.mrf.mxu0
        %906 = vmatprep.mubr.bf16.mxu0 %v600
        %907 = vmatmul.mubr.bf16.gmra.mxu0 %v599
        %v908 = vpop.f32.mrf.mxu0
        %v909 = vadd.f32 0.0, %v908
        %v910 = vpop.f32.mrf.mxu0
        %v911 = vpop.f32.mrf.mxu0
        %v912 = vadd.f32 0.0, %v911
        %v913 = vpop.f32.mrf.mxu0
        %914 = vmatprep.mubr.bf16.mxu0 %v603
        %915 = vmatmul.mubr.bf16.gmra.mxu0 %v602
        %v916 = vpop.f32.mrf.mxu0
        %v917 = vadd.f32 0.0, %v916
        %v918 = vpop.f32.mrf.mxu0
        %v919 = vpop.f32.mrf.mxu0
        %v920 = vadd.f32 0.0, %v919
        %v921 = vpop.f32.mrf.mxu0
        %922 = vmatprep.mubr.bf16.mxu0 %v606
        %923 = vmatmul.mubr.bf16.gmra.mxu0 %v605
        %v924 = vpop.f32.mrf.mxu0
        %v925 = vadd.f32 0.0, %v924
        %v926 = vpop.f32.mrf.mxu0
        %v927 = vpop.f32.mrf.mxu0
        %v928 = vadd.f32 0.0, %v927
        %v929 = vpop.f32.mrf.mxu0
        %930 = vmatprep.mubr.bf16.mxu0 %v609
        %931 = vmatmul.mubr.bf16.gmra.mxu0 %v608
        %v932 = vpop.f32.mrf.mxu0
        %v933 = vadd.f32 0.0, %v932
        %v934 = vpop.f32.mrf.mxu0
        %v935 = vpop.f32.mrf.mxu0
        %v936 = vadd.f32 0.0, %v935
        %v937 = vpop.f32.mrf.mxu0
        %938 = vmatprep.mubr.bf16.mxu0 %v612
        %939 = vmatmul.mubr.bf16.gmra.mxu0 %v611
        %v940 = vpop.f32.mrf.mxu0
        %v941 = vadd.f32 0.0, %v940
        %v942 = vpop.f32.mrf.mxu0
        %v943 = vpop.f32.mrf.mxu0
        %v944 = vadd.f32 0.0, %v943
        %v945 = vpop.f32.mrf.mxu0
        %946 = vmatprep.mubr.bf16.mxu0 %v615
        %947 = vmatmul.mubr.bf16.gmra.mxu0 %v614
        %v948 = vpop.f32.mrf.mxu0
        %v949 = vadd.f32 0.0, %v948
        %v950 = vpop.f32.mrf.mxu0
        %v951 = vpop.f32.mrf.mxu0
        %v952 = vadd.f32 0.0, %v951
        %v953 = vpop.f32.mrf.mxu0
        %954 = vmatprep.mubr.bf16.mxu0 %v618
        %955 = vmatmul.mubr.bf16.gmra.mxu0 %v617
        %v956 = vpop.f32.mrf.mxu0
        %v957 = vadd.f32 0.0, %v956
        %v958 = vpop.f32.mrf.mxu0
        %v959 = vpop.f32.mrf.mxu0
        %v960 = vadd.f32 0.0, %v959
        %v961 = vpop.f32.mrf.mxu0
        %962 = vmatprep.mubr.bf16.mxu0 %v621
        %963 = vmatmul.mubr.bf16.gmra.mxu0 %v620
        %v964 = vpop.f32.mrf.mxu0
        %v965 = vadd.f32 0.0, %v964
        %v966 = vpop.f32.mrf.mxu0
        %v967 = vpop.f32.mrf.mxu0
        %v968 = vadd.f32 0.0, %v967
        %v969 = vpop.f32.mrf.mxu0
        %970 = vmatprep.mubr.bf16.mxu0 %v624
        %971 = vmatmul.mubr.bf16.gmra.mxu0 %v623
        %v972 = vpop.f32.mrf.mxu0
        %v973 = vadd.f32 0.0, %v972
        %v974 = vpop.f32.mrf.mxu0
        %v975 = vpop.f32.mrf.mxu0
        %v976 = vadd.f32 0.0, %v975
        %v977 = vpop.f32.mrf.mxu0
        %978 = vdwg.mxu0
        %979 = vmatprep.subr.bf16.mxu0 0
        %980 = vmatpush1.bf16.msra.mxu0 %v793
        %981 = vmatprep.subr.bf16.mxu0 0
        %982 = vmatpush1.bf16.msra.mxu0 %v792
        %983 = vmatprep.subr.bf16.mxu0 0
        %984 = vmatpush1.bf16.msra.mxu0 %v791
        %985 = vmatprep.subr.bf16.mxu0 0
        %986 = vmatpush1.bf16.msra.mxu0 %v790
        %987 = vmatprep.subr.bf16.mxu0 0
        %988 = vmatpush1.bf16.msra.mxu0 %v789
        %989 = vmatprep.subr.bf16.mxu0 0
        %990 = vmatpush1.bf16.msra.mxu0 %v788
        %991 = vmatprep.subr.bf16.mxu0 0
        %992 = vmatpush1.bf16.msra.mxu0 %v787
        %993 = vmatprep.subr.bf16.mxu0 0
        %994 = vmatpush1.bf16.msra.mxu0 %v786
        %995 = vmatprep.subr.bf16.mxu0 0
        %996 = vmatpush2.bf16.msra.mxu0 0
        %997 = vmatprep.subr.bf16.mxu0 0
        %998 = vmatpush2.bf16.msra.mxu0 0
        %999 = vmatprep.subr.bf16.mxu0 0
        %1000 = vmatpush2.bf16.msra.mxu0 0
        %1001 = vmatprep.subr.bf16.mxu0 0
        %1002 = vmatpush2.bf16.msra.mxu0 0
        %1003 = vmatprep.subr.bf16.mxu0 0
        %1004 = vmatpush2.bf16.msra.mxu0 0
        %1005 = vmatprep.subr.bf16.mxu0 0
        %1006 = vmatpush2.bf16.msra.mxu0 0
        %1007 = vmatprep.subr.bf16.mxu0 0
        %1008 = vmatpush2.bf16.msra.mxu0 0
        %1009 = vmatprep.subr.bf16.mxu0 0
        %1010 = vmatpush2.bf16.msra.mxu0 0
        %1011 = vmatprep.mubr.bf16.mxu0 0
        %1012 = vmatmul.mubr.bf16.gmra.mxu0 %v580
        %v1013 = vpop.f32.mrf.mxu0
        %v1014 = vadd.f32 %v853, %v1013
        %v1015 = vpop.f32.mrf.mxu0
        %v1016 = vpop.f32.mrf.mxu0
        %v1017 = vadd.f32 %v856, %v1016
        %v1018 = vpop.f32.mrf.mxu0
        %1019 = vmatprep.mubr.bf16.mxu0 0
        %1020 = vmatmul.mubr.bf16.gmra.mxu0 %v583
        %v1021 = vpop.f32.mrf.mxu0
        %v1022 = vadd.f32 %v861, %v1021
        %v1023 = vpop.f32.mrf.mxu0
        %v1024 = vpop.f32.mrf.mxu0
        %v1025 = vadd.f32 %v864, %v1024
        %v1026 = vpop.f32.mrf.mxu0
        %1027 = vmatprep.mubr.bf16.mxu0 0
        %1028 = vmatmul.mubr.bf16.gmra.mxu0 %v586
        %v1029 = vpop.f32.mrf.mxu0
        %v1030 = vadd.f32 %v869, %v1029
        %v1031 = vpop.f32.mrf.mxu0
        %v1032 = vpop.f32.mrf.mxu0
        %v1033 = vadd.f32 %v872, %v1032
        %v1034 = vpop.f32.mrf.mxu0
        %1035 = vmatprep.mubr.bf16.mxu0 0
        %1036 = vmatmul.mubr.bf16.gmra.mxu0 %v589
        %v1037 = vpop.f32.mrf.mxu0
        %v1038 = vadd.f32 %v877, %v1037
        %v1039 = vpop.f32.mrf.mxu0
        %v1040 = vpop.f32.mrf.mxu0
        %v1041 = vadd.f32 %v880, %v1040
        %v1042 = vpop.f32.mrf.mxu0
        %1043 = vmatprep.mubr.bf16.mxu0 0
        %1044 = vmatmul.mubr.bf16.gmra.mxu0 %v592
        %v1045 = vpop.f32.mrf.mxu0
        %v1046 = vadd.f32 %v885, %v1045
        %v1047 = vpop.f32.mrf.mxu0
        %v1048 = vpop.f32.mrf.mxu0
        %v1049 = vadd.f32 %v888, %v1048
        %v1050 = vpop.f32.mrf.mxu0
        %1051 = vmatprep.mubr.bf16.mxu0 0
        %1052 = vmatmul.mubr.bf16.gmra.mxu0 %v595
        %v1053 = vpop.f32.mrf.mxu0
        %v1054 = vadd.f32 %v893, %v1053
        %v1055 = vpop.f32.mrf.mxu0
        %v1056 = vpop.f32.mrf.mxu0
        %v1057 = vadd.f32 %v896, %v1056
        %v1058 = vpop.f32.mrf.mxu0
        %1059 = vmatprep.mubr.bf16.mxu0 0
        %1060 = vmatmul.mubr.bf16.gmra.mxu0 %v598
        %v1061 = vpop.f32.mrf.mxu0
        %v1062 = vadd.f32 %v901, %v1061
        %v1063 = vpop.f32.mrf.mxu0
        %v1064 = vpop.f32.mrf.mxu0
        %v1065 = vadd.f32 %v904, %v1064
        %v1066 = vpop.f32.mrf.mxu0
        %1067 = vmatprep.mubr.bf16.mxu0 0
        %1068 = vmatmul.mubr.bf16.gmra.mxu0 %v601
        %v1069 = vpop.f32.mrf.mxu0
        %v1070 = vadd.f32 %v909, %v1069
        %v1071 = vpop.f32.mrf.mxu0
        %v1072 = vpop.f32.mrf.mxu0
        %v1073 = vadd.f32 %v912, %v1072
        %v1074 = vpop.f32.mrf.mxu0
        %1075 = vmatprep.mubr.bf16.mxu0 0
        %1076 = vmatmul.mubr.bf16.gmra.mxu0 %v604
        %v1077 = vpop.f32.mrf.mxu0
        %v1078 = vadd.f32 %v917, %v1077
        %v1079 = vpop.f32.mrf.mxu0
        %v1080 = vpop.f32.mrf.mxu0
        %v1081 = vadd.f32 %v920, %v1080
        %v1082 = vpop.f32.mrf.mxu0
        %1083 = vmatprep.mubr.bf16.mxu0 0
        %1084 = vmatmul.mubr.bf16.gmra.mxu0 %v607
        %v1085 = vpop.f32.mrf.mxu0
        %v1086 = vadd.f32 %v925, %v1085
        %v1087 = vpop.f32.mrf.mxu0
        %v1088 = vpop.f32.mrf.mxu0
        %v1089 = vadd.f32 %v928, %v1088
        %v1090 = vpop.f32.mrf.mxu0
        %1091 = vmatprep.mubr.bf16.mxu0 0
        %1092 = vmatmul.mubr.bf16.gmra.mxu0 %v610
        %v1093 = vpop.f32.mrf.mxu0
        %v1094 = vadd.f32 %v933, %v1093
        %v1095 = vpop.f32.mrf.mxu0
        %v1096 = vpop.f32.mrf.mxu0
        %v1097 = vadd.f32 %v936, %v1096
        %v1098 = vpop.f32.mrf.mxu0
        %1099 = vmatprep.mubr.bf16.mxu0 0
        %1100 = vmatmul.mubr.bf16.gmra.mxu0 %v613
        %v1101 = vpop.f32.mrf.mxu0
        %v1102 = vadd.f32 %v941, %v1101
        %v1103 = vpop.f32.mrf.mxu0
        %v1104 = vpop.f32.mrf.mxu0
        %v1105 = vadd.f32 %v944, %v1104
        %v1106 = vpop.f32.mrf.mxu0
        %1107 = vmatprep.mubr.bf16.mxu0 0
        %1108 = vmatmul.mubr.bf16.gmra.mxu0 %v616
        %v1109 = vpop.f32.mrf.mxu0
        %v1110 = vadd.f32 %v949, %v1109
        %v1111 = vpop.f32.mrf.mxu0
        %v1112 = vpop.f32.mrf.mxu0
        %v1113 = vadd.f32 %v952, %v1112
        %v1114 = vpop.f32.mrf.mxu0
        %1115 = vmatprep.mubr.bf16.mxu0 0
        %1116 = vmatmul.mubr.bf16.gmra.mxu0 %v619
        %v1117 = vpop.f32.mrf.mxu0
        %v1118 = vadd.f32 %v957, %v1117
        %v1119 = vpop.f32.mrf.mxu0
        %v1120 = vpop.f32.mrf.mxu0
        %v1121 = vadd.f32 %v960, %v1120
        %v1122 = vpop.f32.mrf.mxu0
        %1123 = vmatprep.mubr.bf16.mxu0 0
        %1124 = vmatmul.mubr.bf16.gmra.mxu0 %v622
        %v1125 = vpop.f32.mrf.mxu0
        %v1126 = vadd.f32 %v965, %v1125
        %v1127 = vpop.f32.mrf.mxu0
        %v1128 = vpop.f32.mrf.mxu0
        %v1129 = vadd.f32 %v968, %v1128
        %v1130 = vpop.f32.mrf.mxu0
        %1131 = vmatprep.mubr.bf16.mxu0 0
        %1132 = vmatmul.mubr.bf16.gmra.mxu0 %v625
        %v1133 = vpop.f32.mrf.mxu0
        %v1134 = vadd.f32 %v973, %v1133
        %v1135 = vpop.f32.mrf.mxu0
        %v1136 = vpop.f32.mrf.mxu0
        %v1137 = vadd.f32 %v976, %v1136
        %v1138 = vpop.f32.mrf.mxu0
        %1139 = vdwg.mxu0
        %v1144 = vunpack.c.l.b16 %v253
        %v1145 = vunpack.c.h.b16 %v253
        %v1146 = vunpack.c.l.b16 %v254
        %v1147 = vunpack.c.l.b16 %v255
        %v1148 = vunpack.c.h.b16 %v255
        %v1149 = vunpack.c.l.b16 %v256
        %v1150 = vpack.c.b16 %v1147, %v1144
        %v1151 = vpack.c.b16 %v1148, %v1145
        %v1152 = vpack.c.b16 %v1149, %v1146
        %v1204 = vunpack.c.l.b16 %v317
        %v1205 = vunpack.c.l.b16 %v318
        %v1206 = vunpack.c.l.b16 %v319
        %v1207 = vunpack.c.l.b16 %v320
        %v1208 = vunpack.c.l.b16 %v321
        %v1209 = vunpack.c.l.b16 %v322
        %v1210 = vunpack.c.l.b16 %v323
        %v1211 = vunpack.c.l.b16 %v324
        %v1212 = vunpack.c.l.b16 %v325
        %v1213 = vunpack.c.l.b16 %v326
        %v1214 = vunpack.c.l.b16 %v327
        %v1215 = vunpack.c.l.b16 %v328
        %v1216 = vunpack.c.l.b16 %v329
        %v1217 = vunpack.c.l.b16 %v330
        %v1218 = vunpack.c.l.b16 %v331
        %v1219 = vunpack.c.l.b16 %v332
        %v1220 = vunpack.c.l.b16 %v333
        %v1221 = vunpack.c.l.b16 %v334
        %v1222 = vunpack.c.l.b16 %v335
        %v1223 = vunpack.c.l.b16 %v336
        %v1224 = vunpack.c.l.b16 %v337
        %v1225 = vunpack.c.l.b16 %v338
        %v1226 = vunpack.c.l.b16 %v339
        %v1227 = vunpack.c.l.b16 %v340
        %v1228 = vunpack.c.l.b16 %v341
        %v1229 = vunpack.c.l.b16 %v342
        %v1230 = vunpack.c.l.b16 %v343
        %v1231 = vunpack.c.l.b16 %v344
        %v1232 = vunpack.c.l.b16 %v345
        %v1233 = vunpack.c.l.b16 %v346
        %v1234 = vunpack.c.l.b16 %v347
        %v1235 = vunpack.c.l.b16 %v348
        %v1236 = vunpack.c.l.b16 %v349
        %v1237 = vunpack.c.l.b16 %v350
        %v1238 = vunpack.c.l.b16 %v351
        %v1239 = vunpack.c.l.b16 %v352
        %v1240 = vunpack.c.l.b16 %v353
        %v1241 = vunpack.c.l.b16 %v354
        %v1242 = vunpack.c.l.b16 %v355
        %v1243 = vunpack.c.l.b16 %v356
        %v1244 = vunpack.c.l.b16 %v357
        %v1245 = vunpack.c.l.b16 %v358
        %v1246 = vunpack.c.l.b16 %v359
        %v1247 = vunpack.c.l.b16 %v360
        %v1248 = vunpack.c.l.b16 %v361
        %v1249 = vunpack.c.l.b16 %v362
        %v1250 = vunpack.c.l.b16 %v363
        %v1251 = vunpack.c.l.b16 %v364
        %v1252 = vpack.c.b16 %v1205, %v1204
        %v1253 = vpack.c.b16 %v1207, %v1206
        %v1254 = vpack.c.b16 %v1209, %v1208
        %v1255 = vpack.c.b16 %v1211, %v1210
        %v1256 = vpack.c.b16 %v1213, %v1212
        %v1257 = vpack.c.b16 %v1215, %v1214
        %v1258 = vpack.c.b16 %v1217, %v1216
        %v1259 = vpack.c.b16 %v1219, %v1218
        %v1260 = vpack.c.b16 %v1221, %v1220
        %v1261 = vpack.c.b16 %v1223, %v1222
        %v1262 = vpack.c.b16 %v1225, %v1224
        %v1263 = vpack.c.b16 %v1227, %v1226
        %v1264 = vpack.c.b16 %v1229, %v1228
        %v1265 = vpack.c.b16 %v1231, %v1230
        %v1266 = vpack.c.b16 %v1233, %v1232
        %v1267 = vpack.c.b16 %v1235, %v1234
        %v1268 = vpack.c.b16 %v1237, %v1236
        %v1269 = vpack.c.b16 %v1239, %v1238
        %v1270 = vpack.c.b16 %v1241, %v1240
        %v1271 = vpack.c.b16 %v1243, %v1242
        %v1272 = vpack.c.b16 %v1245, %v1244
        %v1273 = vpack.c.b16 %v1247, %v1246
        %v1274 = vpack.c.b16 %v1249, %v1248
        %v1275 = vpack.c.b16 %v1251, %v1250
        %1300 = vmatprep.subr.bf16.mxu0 0
        %1301 = vmatpush1.bf16.msra.mxu0 %v1259
        %1302 = vmatprep.subr.bf16.mxu0 0
        %1303 = vmatpush1.bf16.msra.mxu0 %v1258
        %1304 = vmatprep.subr.bf16.mxu0 0
        %1305 = vmatpush1.bf16.msra.mxu0 %v1257
        %1306 = vmatprep.subr.bf16.mxu0 0
        %1307 = vmatpush1.bf16.msra.mxu0 %v1256
        %1308 = vmatprep.subr.bf16.mxu0 0
        %1309 = vmatpush1.bf16.msra.mxu0 %v1255
        %1310 = vmatprep.subr.bf16.mxu0 0
        %1311 = vmatpush1.bf16.msra.mxu0 %v1254
        %1312 = vmatprep.subr.bf16.mxu0 0
        %1313 = vmatpush1.bf16.msra.mxu0 %v1253
        %1314 = vmatprep.subr.bf16.mxu0 0
        %1315 = vmatpush1.bf16.msra.mxu0 %v1252
        %1316 = vmatprep.subr.bf16.mxu0 0
        %1317 = vmatpush2.bf16.msra.mxu0 %v1267
        %1318 = vmatprep.subr.bf16.mxu0 0
        %1319 = vmatpush2.bf16.msra.mxu0 %v1266
        %1320 = vmatprep.subr.bf16.mxu0 0
        %1321 = vmatpush2.bf16.msra.mxu0 %v1265
        %1322 = vmatprep.subr.bf16.mxu0 0
        %1323 = vmatpush2.bf16.msra.mxu0 %v1264
        %1324 = vmatprep.subr.bf16.mxu0 0
        %1325 = vmatpush2.bf16.msra.mxu0 %v1263
        %1326 = vmatprep.subr.bf16.mxu0 0
        %1327 = vmatpush2.bf16.msra.mxu0 %v1262
        %1328 = vmatprep.subr.bf16.mxu0 0
        %1329 = vmatpush2.bf16.msra.mxu0 %v1261
        %1330 = vmatprep.subr.bf16.mxu0 0
        %1331 = vmatpush2.bf16.msra.mxu0 %v1260
        %1332 = vmatprep.mubr.bf16.mxu0 %v1151
        %1333 = vmatmul.mubr.bf16.gmra.mxu0 %v1150
        %v1334 = vpop.f32.mrf.mxu0
        %v1335 = vadd.f32 %v1014, %v1334
        %v1336 = vpop.f32.mrf.mxu0
        %v1337 = vpop.f32.mrf.mxu0
        %v1338 = vadd.f32 %v1017, %v1337
        %v1339 = vpop.f32.mrf.mxu0
        %1340 = vmatprep.mubr.bf16.mxu0 %v579
        %1341 = vmatmul.mubr.bf16.gmra.mxu0 %v578
        %v1342 = vpop.f32.mrf.mxu0
        %v1343 = vadd.f32 %v1022, %v1342
        %v1344 = vpop.f32.mrf.mxu0
        %v1345 = vpop.f32.mrf.mxu0
        %v1346 = vadd.f32 %v1025, %v1345
        %v1347 = vpop.f32.mrf.mxu0
        %1348 = vmatprep.mubr.bf16.mxu0 %v582
        %1349 = vmatmul.mubr.bf16.gmra.mxu0 %v581
        %v1350 = vpop.f32.mrf.mxu0
        %v1351 = vadd.f32 %v1030, %v1350
        %v1352 = vpop.f32.mrf.mxu0
        %v1353 = vpop.f32.mrf.mxu0
        %v1354 = vadd.f32 %v1033, %v1353
        %v1355 = vpop.f32.mrf.mxu0
        %1356 = vmatprep.mubr.bf16.mxu0 %v585
        %1357 = vmatmul.mubr.bf16.gmra.mxu0 %v584
        %v1358 = vpop.f32.mrf.mxu0
        %v1359 = vadd.f32 %v1038, %v1358
        %v1360 = vpop.f32.mrf.mxu0
        %v1361 = vpop.f32.mrf.mxu0
        %v1362 = vadd.f32 %v1041, %v1361
        %v1363 = vpop.f32.mrf.mxu0
        %1364 = vmatprep.mubr.bf16.mxu0 %v588
        %1365 = vmatmul.mubr.bf16.gmra.mxu0 %v587
        %v1366 = vpop.f32.mrf.mxu0
        %v1367 = vadd.f32 %v1046, %v1366
        %v1368 = vpop.f32.mrf.mxu0
        %v1369 = vpop.f32.mrf.mxu0
        %v1370 = vadd.f32 %v1049, %v1369
        %v1371 = vpop.f32.mrf.mxu0
        %1372 = vmatprep.mubr.bf16.mxu0 %v591
        %1373 = vmatmul.mubr.bf16.gmra.mxu0 %v590
        %v1374 = vpop.f32.mrf.mxu0
        %v1375 = vadd.f32 %v1054, %v1374
        %v1376 = vpop.f32.mrf.mxu0
        %v1377 = vpop.f32.mrf.mxu0
        %v1378 = vadd.f32 %v1057, %v1377
        %v1379 = vpop.f32.mrf.mxu0
        %1380 = vmatprep.mubr.bf16.mxu0 %v594
        %1381 = vmatmul.mubr.bf16.gmra.mxu0 %v593
        %v1382 = vpop.f32.mrf.mxu0
        %v1383 = vadd.f32 %v1062, %v1382
        %v1384 = vpop.f32.mrf.mxu0
        %v1385 = vpop.f32.mrf.mxu0
        %v1386 = vadd.f32 %v1065, %v1385
        %v1387 = vpop.f32.mrf.mxu0
        %1388 = vmatprep.mubr.bf16.mxu0 %v597
        %1389 = vmatmul.mubr.bf16.gmra.mxu0 %v596
        %v1390 = vpop.f32.mrf.mxu0
        %v1391 = vadd.f32 %v1070, %v1390
        %v1392 = vpop.f32.mrf.mxu0
        %v1393 = vpop.f32.mrf.mxu0
        %v1394 = vadd.f32 %v1073, %v1393
        %v1395 = vpop.f32.mrf.mxu0
        %1396 = vmatprep.mubr.bf16.mxu0 %v600
        %1397 = vmatmul.mubr.bf16.gmra.mxu0 %v599
        %v1398 = vpop.f32.mrf.mxu0
        %v1399 = vadd.f32 %v1078, %v1398
        %v1400 = vpop.f32.mrf.mxu0
        %v1401 = vpop.f32.mrf.mxu0
        %v1402 = vadd.f32 %v1081, %v1401
        %v1403 = vpop.f32.mrf.mxu0
        %1404 = vmatprep.mubr.bf16.mxu0 %v603
        %1405 = vmatmul.mubr.bf16.gmra.mxu0 %v602
        %v1406 = vpop.f32.mrf.mxu0
        %v1407 = vadd.f32 %v1086, %v1406
        %v1408 = vpop.f32.mrf.mxu0
        %v1409 = vpop.f32.mrf.mxu0
        %v1410 = vadd.f32 %v1089, %v1409
        %v1411 = vpop.f32.mrf.mxu0
        %1412 = vmatprep.mubr.bf16.mxu0 %v606
        %1413 = vmatmul.mubr.bf16.gmra.mxu0 %v605
        %v1414 = vpop.f32.mrf.mxu0
        %v1415 = vadd.f32 %v1094, %v1414
        %v1416 = vpop.f32.mrf.mxu0
        %v1417 = vpop.f32.mrf.mxu0
        %v1418 = vadd.f32 %v1097, %v1417
        %v1419 = vpop.f32.mrf.mxu0
        %1420 = vmatprep.mubr.bf16.mxu0 %v609
        %1421 = vmatmul.mubr.bf16.gmra.mxu0 %v608
        %v1422 = vpop.f32.mrf.mxu0
        %v1423 = vadd.f32 %v1102, %v1422
        %v1424 = vpop.f32.mrf.mxu0
        %v1425 = vpop.f32.mrf.mxu0
        %v1426 = vadd.f32 %v1105, %v1425
        %v1427 = vpop.f32.mrf.mxu0
        %1428 = vmatprep.mubr.bf16.mxu0 %v612
        %1429 = vmatmul.mubr.bf16.gmra.mxu0 %v611
        %v1430 = vpop.f32.mrf.mxu0
        %v1431 = vadd.f32 %v1110, %v1430
        %v1432 = vpop.f32.mrf.mxu0
        %v1433 = vpop.f32.mrf.mxu0
        %v1434 = vadd.f32 %v1113, %v1433
        %v1435 = vpop.f32.mrf.mxu0
        %1436 = vmatprep.mubr.bf16.mxu0 %v615
        %1437 = vmatmul.mubr.bf16.gmra.mxu0 %v614
        %v1438 = vpop.f32.mrf.mxu0
        %v1439 = vadd.f32 %v1118, %v1438
        %v1440 = vpop.f32.mrf.mxu0
        %v1441 = vpop.f32.mrf.mxu0
        %v1442 = vadd.f32 %v1121, %v1441
        %v1443 = vpop.f32.mrf.mxu0
        %1444 = vmatprep.mubr.bf16.mxu0 %v618
        %1445 = vmatmul.mubr.bf16.gmra.mxu0 %v617
        %v1446 = vpop.f32.mrf.mxu0
        %v1447 = vadd.f32 %v1126, %v1446
        %v1448 = vpop.f32.mrf.mxu0
        %v1449 = vpop.f32.mrf.mxu0
        %v1450 = vadd.f32 %v1129, %v1449
        %v1451 = vpop.f32.mrf.mxu0
        %1452 = vmatprep.mubr.bf16.mxu0 %v621
        %1453 = vmatmul.mubr.bf16.gmra.mxu0 %v620
        %v1454 = vpop.f32.mrf.mxu0
        %v1455 = vadd.f32 %v1134, %v1454
        %v1456 = vpop.f32.mrf.mxu0
        %v1457 = vpop.f32.mrf.mxu0
        %v1458 = vadd.f32 %v1137, %v1457
        %v1459 = vpop.f32.mrf.mxu0
        %1460 = vdwg.mxu0
        %1461 = vmatprep.subr.bf16.mxu0 0
        %1462 = vmatpush1.bf16.msra.mxu0 %v1275
        %1463 = vmatprep.subr.bf16.mxu0 0
        %1464 = vmatpush1.bf16.msra.mxu0 %v1274
        %1465 = vmatprep.subr.bf16.mxu0 0
        %1466 = vmatpush1.bf16.msra.mxu0 %v1273
        %1467 = vmatprep.subr.bf16.mxu0 0
        %1468 = vmatpush1.bf16.msra.mxu0 %v1272
        %1469 = vmatprep.subr.bf16.mxu0 0
        %1470 = vmatpush1.bf16.msra.mxu0 %v1271
        %1471 = vmatprep.subr.bf16.mxu0 0
        %1472 = vmatpush1.bf16.msra.mxu0 %v1270
        %1473 = vmatprep.subr.bf16.mxu0 0
        %1474 = vmatpush1.bf16.msra.mxu0 %v1269
        %1475 = vmatprep.subr.bf16.mxu0 0
        %1476 = vmatpush1.bf16.msra.mxu0 %v1268
        %1477 = vmatprep.subr.bf16.mxu0 0
        %1478 = vmatpush2.bf16.msra.mxu0 0
        %1479 = vmatprep.subr.bf16.mxu0 0
        %1480 = vmatpush2.bf16.msra.mxu0 0
        %1481 = vmatprep.subr.bf16.mxu0 0
        %1482 = vmatpush2.bf16.msra.mxu0 0
        %1483 = vmatprep.subr.bf16.mxu0 0
        %1484 = vmatpush2.bf16.msra.mxu0 0
        %1485 = vmatprep.subr.bf16.mxu0 0
        %1486 = vmatpush2.bf16.msra.mxu0 0
        %1487 = vmatprep.subr.bf16.mxu0 0
        %1488 = vmatpush2.bf16.msra.mxu0 0
        %1489 = vmatprep.subr.bf16.mxu0 0
        %1490 = vmatpush2.bf16.msra.mxu0 0
        %1491 = vmatprep.subr.bf16.mxu0 0
        %1492 = vmatpush2.bf16.msra.mxu0 0
        %1493 = vmatprep.mubr.bf16.mxu0 0
        %1494 = vmatmul.mubr.bf16.gmra.mxu0 %v1152
        %v1495 = vpop.f32.mrf.mxu0
        %v1496 = vadd.f32 %v1335, %v1495
        %v1497 = vpop.f32.mrf.mxu0
        %v1498 = vpop.f32.mrf.mxu0
        %v1499 = vadd.f32 %v1338, %v1498
        %v1500 = vpop.f32.mrf.mxu0
        %1501 = vmatprep.mubr.bf16.mxu0 0
        %1502 = vmatmul.mubr.bf16.gmra.mxu0 %v580
        %v1503 = vpop.f32.mrf.mxu0
        %v1504 = vadd.f32 %v1343, %v1503
        %v1505 = vpop.f32.mrf.mxu0
        %v1506 = vpop.f32.mrf.mxu0
        %v1507 = vadd.f32 %v1346, %v1506
        %v1508 = vpop.f32.mrf.mxu0
        %1509 = vmatprep.mubr.bf16.mxu0 0
        %1510 = vmatmul.mubr.bf16.gmra.mxu0 %v583
        %v1511 = vpop.f32.mrf.mxu0
        %v1512 = vadd.f32 %v1351, %v1511
        %v1513 = vpop.f32.mrf.mxu0
        %v1514 = vpop.f32.mrf.mxu0
        %v1515 = vadd.f32 %v1354, %v1514
        %v1516 = vpop.f32.mrf.mxu0
        %1517 = vmatprep.mubr.bf16.mxu0 0
        %1518 = vmatmul.mubr.bf16.gmra.mxu0 %v586
        %v1519 = vpop.f32.mrf.mxu0
        %v1520 = vadd.f32 %v1359, %v1519
        %v1521 = vpop.f32.mrf.mxu0
        %v1522 = vpop.f32.mrf.mxu0
        %v1523 = vadd.f32 %v1362, %v1522
        %v1524 = vpop.f32.mrf.mxu0
        %1525 = vmatprep.mubr.bf16.mxu0 0
        %1526 = vmatmul.mubr.bf16.gmra.mxu0 %v589
        %v1527 = vpop.f32.mrf.mxu0
        %v1528 = vadd.f32 %v1367, %v1527
        %v1529 = vpop.f32.mrf.mxu0
        %v1530 = vpop.f32.mrf.mxu0
        %v1531 = vadd.f32 %v1370, %v1530
        %v1532 = vpop.f32.mrf.mxu0
        %1533 = vmatprep.mubr.bf16.mxu0 0
        %1534 = vmatmul.mubr.bf16.gmra.mxu0 %v592
        %v1535 = vpop.f32.mrf.mxu0
        %v1536 = vadd.f32 %v1375, %v1535
        %v1537 = vpop.f32.mrf.mxu0
        %v1538 = vpop.f32.mrf.mxu0
        %v1539 = vadd.f32 %v1378, %v1538
        %v1540 = vpop.f32.mrf.mxu0
        %1541 = vmatprep.mubr.bf16.mxu0 0
        %1542 = vmatmul.mubr.bf16.gmra.mxu0 %v595
        %v1543 = vpop.f32.mrf.mxu0
        %v1544 = vadd.f32 %v1383, %v1543
        %v1545 = vpop.f32.mrf.mxu0
        %v1546 = vpop.f32.mrf.mxu0
        %v1547 = vadd.f32 %v1386, %v1546
        %v1548 = vpop.f32.mrf.mxu0
        %1549 = vmatprep.mubr.bf16.mxu0 0
        %1550 = vmatmul.mubr.bf16.gmra.mxu0 %v598
        %v1551 = vpop.f32.mrf.mxu0
        %v1552 = vadd.f32 %v1391, %v1551
        %v1553 = vpop.f32.mrf.mxu0
        %v1554 = vpop.f32.mrf.mxu0
        %v1555 = vadd.f32 %v1394, %v1554
        %v1556 = vpop.f32.mrf.mxu0
        %1557 = vmatprep.mubr.bf16.mxu0 0
        %1558 = vmatmul.mubr.bf16.gmra.mxu0 %v601
        %v1559 = vpop.f32.mrf.mxu0
        %v1560 = vadd.f32 %v1399, %v1559
        %v1561 = vpop.f32.mrf.mxu0
        %v1562 = vpop.f32.mrf.mxu0
        %v1563 = vadd.f32 %v1402, %v1562
        %v1564 = vpop.f32.mrf.mxu0
        %1565 = vmatprep.mubr.bf16.mxu0 0
        %1566 = vmatmul.mubr.bf16.gmra.mxu0 %v604
        %v1567 = vpop.f32.mrf.mxu0
        %v1568 = vadd.f32 %v1407, %v1567
        %v1569 = vpop.f32.mrf.mxu0
        %v1570 = vpop.f32.mrf.mxu0
        %v1571 = vadd.f32 %v1410, %v1570
        %v1572 = vpop.f32.mrf.mxu0
        %1573 = vmatprep.mubr.bf16.mxu0 0
        %1574 = vmatmul.mubr.bf16.gmra.mxu0 %v607
        %v1575 = vpop.f32.mrf.mxu0
        %v1576 = vadd.f32 %v1415, %v1575
        %v1577 = vpop.f32.mrf.mxu0
        %v1578 = vpop.f32.mrf.mxu0
        %v1579 = vadd.f32 %v1418, %v1578
        %v1580 = vpop.f32.mrf.mxu0
        %1581 = vmatprep.mubr.bf16.mxu0 0
        %1582 = vmatmul.mubr.bf16.gmra.mxu0 %v610
        %v1583 = vpop.f32.mrf.mxu0
        %v1584 = vadd.f32 %v1423, %v1583
        %v1585 = vpop.f32.mrf.mxu0
        %v1586 = vpop.f32.mrf.mxu0
        %v1587 = vadd.f32 %v1426, %v1586
        %v1588 = vpop.f32.mrf.mxu0
        %1589 = vmatprep.mubr.bf16.mxu0 0
        %1590 = vmatmul.mubr.bf16.gmra.mxu0 %v613
        %v1591 = vpop.f32.mrf.mxu0
        %v1592 = vadd.f32 %v1431, %v1591
        %v1593 = vpop.f32.mrf.mxu0
        %v1594 = vpop.f32.mrf.mxu0
        %v1595 = vadd.f32 %v1434, %v1594
        %v1596 = vpop.f32.mrf.mxu0
        %1597 = vmatprep.mubr.bf16.mxu0 0
        %1598 = vmatmul.mubr.bf16.gmra.mxu0 %v616
        %v1599 = vpop.f32.mrf.mxu0
        %v1600 = vadd.f32 %v1439, %v1599
        %v1601 = vpop.f32.mrf.mxu0
        %v1602 = vpop.f32.mrf.mxu0
        %v1603 = vadd.f32 %v1442, %v1602
        %v1604 = vpop.f32.mrf.mxu0
        %1605 = vmatprep.mubr.bf16.mxu0 0
        %1606 = vmatmul.mubr.bf16.gmra.mxu0 %v619
        %v1607 = vpop.f32.mrf.mxu0
        %v1608 = vadd.f32 %v1447, %v1607
        %v1609 = vpop.f32.mrf.mxu0
        %v1610 = vpop.f32.mrf.mxu0
        %v1611 = vadd.f32 %v1450, %v1610
        %v1612 = vpop.f32.mrf.mxu0
        %1613 = vmatprep.mubr.bf16.mxu0 0
        %1614 = vmatmul.mubr.bf16.gmra.mxu0 %v622
        %v1615 = vpop.f32.mrf.mxu0
        %v1616 = vadd.f32 %v1455, %v1615
        %v1617 = vpop.f32.mrf.mxu0
        %v1618 = vpop.f32.mrf.mxu0
        %v1619 = vadd.f32 %v1458, %v1618
        %v1620 = vpop.f32.mrf.mxu0
        %1621 = vdwg.mxu0
        %v1622 = vld [vmem:[%s221 + $0x30] sm:$0xff]
        %v1623 = vld [vmem:[%s221 + $0x38] sm:$0xf]
        %v1624 = vld [vmem:[%s221 + $0x3c] sm:$0xff]
        %v1625 = vld [vmem:[%s221 + $0x44] sm:$0xf]
        %v1626 = vld [vmem:[%s221 + $0x48] sm:$0xff]
        %v1627 = vld [vmem:[%s221 + $0x50] sm:$0xf]
        %v1628 = vld [vmem:[%s221 + $0x54] sm:$0xff]
        %v1629 = vld [vmem:[%s221 + $0x5c] sm:$0xf]
        %v1630 = vld [vmem:[%s221 + $0x60] sm:$0xff]
        %v1631 = vld [vmem:[%s221 + $0x68] sm:$0xf]
        %v1632 = vld [vmem:[%s221 + $0x6c] sm:$0xff]
        %v1633 = vld [vmem:[%s221 + $0x74] sm:$0xf]
        %v1634 = vld [vmem:[%s221 + $0x78] sm:$0xff]
        %v1635 = vld [vmem:[%s221 + $0x80] sm:$0xf]
        %v1636 = vld [vmem:[%s221 + $0x84] sm:$0xff]
        %v1637 = vld [vmem:[%s221 + $0x8c] sm:$0xf]
        %v1638 = vld [vmem:[%s221 + $0x90] sm:$0xff]
        %v1639 = vld [vmem:[%s221 + $0x98] sm:$0xf]
        %v1640 = vld [vmem:[%s221 + $0x9c] sm:$0xff]
        %v1641 = vld [vmem:[%s221 + $0xa4] sm:$0xf]
        %v1642 = vld [vmem:[%s221 + $0xa8] sm:$0xff]
        %v1643 = vld [vmem:[%s221 + $0xb0] sm:$0xf]
        %v1644 = vld [vmem:[%s221 + $0xb4] sm:$0xff]
        %v1645 = vld [vmem:[%s221 + $0xbc] sm:$0xf]
        %v1646 = vld [vmem:[%s221 + $0xc0] sm:$0xff]
        %v1647 = vld [vmem:[%s221 + $0xc8] sm:$0xf]
        %v1648 = vld [vmem:[%s221 + $0xcc] sm:$0xff]
        %v1649 = vld [vmem:[%s221 + $0xd4] sm:$0xf]
        %v1650 = vld [vmem:[%s221 + $0xd8] sm:$0xff]
        %v1651 = vld [vmem:[%s221 + $0xe0] sm:$0xf]
        %v1652 = vld [vmem:[%s221 + $0xe4] sm:$0xff]
        %v1653 = vld [vmem:[%s221 + $0xec] sm:$0xf]
        %v1654 = vld [vmem:[%s221 + $0xf0] sm:$0xff]
        %v1655 = vld [vmem:[%s221 + $0xf8] sm:$0xf]
        %v1656 = vld [vmem:[%s221 + $0xfc] sm:$0xff]
        %v1657 = vld [vmem:[%s221 + $0x104] sm:$0xf]
        %v1658 = vld [vmem:[%s221 + $0x108] sm:$0xff]
        %v1659 = vld [vmem:[%s221 + $0x110] sm:$0xf]
        %v1660 = vld [vmem:[%s221 + $0x114] sm:$0xff]
        %v1661 = vld [vmem:[%s221 + $0x11c] sm:$0xf]
        %v1662 = vld [vmem:[%s221 + $0x120] sm:$0xff]
        %v1663 = vld [vmem:[%s221 + $0x128] sm:$0xf]
        %v1664 = vld [vmem:[%s221 + $0x12c] sm:$0xff]
        %v1665 = vld [vmem:[%s221 + $0x134] sm:$0xf]
        %v1666 = vld [vmem:[%s221 + $0x138] sm:$0xff]
        %v1667 = vld [vmem:[%s221 + $0x140] sm:$0xf]
        %v1668 = vld [vmem:[%s221 + $0x144] sm:$0xff]
        %v1669 = vld [vmem:[%s221 + $0x14c] sm:$0xf]
        %v1670 = vld [vmem:[%s221 + $0x150] sm:$0xff]
        %v1671 = vld [vmem:[%s221 + $0x158] sm:$0xf]
        %v1672 = vld [vmem:[%s221 + $0x15c] sm:$0xff]
        %v1673 = vld [vmem:[%s221 + $0x164] sm:$0xf]
        %v1674 = vld [vmem:[%s221 + $0x168] sm:$0xff]
        %v1675 = vld [vmem:[%s221 + $0x170] sm:$0xf]
        %v1676 = vld [vmem:[%s221 + $0x174] sm:$0xff]
        %v1677 = vld [vmem:[%s221 + $0x17c] sm:$0xf]
        %v1678 = vld [vmem:[%s221 + $0x180] sm:$0xff]
        %v1679 = vld [vmem:[%s221 + $0x188] sm:$0xf]
        %v1680 = vld [vmem:[%s221 + $0x18c] sm:$0xff]
        %v1681 = vld [vmem:[%s221 + $0x194] sm:$0xf]
        %v1682 = vld [vmem:[%s221 + $0x198] sm:$0xff]
        %v1683 = vld [vmem:[%s221 + $0x1a0] sm:$0xf]
        %v1684 = vld [vmem:[%s221 + $0x1a4] sm:$0xff]
        %v1685 = vld [vmem:[%s221 + $0x1ac] sm:$0xf]
        %s1686 = scalar_lea.vmem [#allocation5], 384
        %v1687 = vld [vmem:[%s1686] sm:$0xf]
        %v1688 = vld [vmem:[%s1686 + $0x4] sm:$0xf]
        %v1689 = vld [vmem:[%s1686 + $0x8] sm:$0xf]
        %v1690 = vld [vmem:[%s1686 + $0xc] sm:$0xf]
        %v1691 = vld [vmem:[%s1686 + $0x10] sm:$0xf]
        %v1692 = vld [vmem:[%s1686 + $0x14] sm:$0xf]
        %v1693 = vld [vmem:[%s1686 + $0x18] sm:$0xf]
        %v1694 = vld [vmem:[%s1686 + $0x1c] sm:$0xf]
        %v1695 = vld [vmem:[%s1686 + $0x20] sm:$0xf]
        %v1696 = vld [vmem:[%s1686 + $0x24] sm:$0xf]
        %v1697 = vld [vmem:[%s1686 + $0x28] sm:$0xf]
        %v1698 = vld [vmem:[%s1686 + $0x2c] sm:$0xf]
        %v1699 = vld [vmem:[%s1686 + $0x30] sm:$0xf]
        %v1700 = vld [vmem:[%s1686 + $0x34] sm:$0xf]
        %v1701 = vld [vmem:[%s1686 + $0x38] sm:$0xf]
        %v1702 = vld [vmem:[%s1686 + $0x3c] sm:$0xf]
        %v1703 = vld [vmem:[%s1686 + $0x40] sm:$0xf]
        %v1704 = vld [vmem:[%s1686 + $0x44] sm:$0xf]
        %v1705 = vld [vmem:[%s1686 + $0x48] sm:$0xf]
        %v1706 = vld [vmem:[%s1686 + $0x4c] sm:$0xf]
        %v1707 = vld [vmem:[%s1686 + $0x50] sm:$0xf]
        %v1708 = vld [vmem:[%s1686 + $0x54] sm:$0xf]
        %v1709 = vld [vmem:[%s1686 + $0x58] sm:$0xf]
        %v1710 = vld [vmem:[%s1686 + $0x5c] sm:$0xf]
        %v1711 = vld [vmem:[%s1686 + $0x60] sm:$0xf]
        %v1712 = vld [vmem:[%s1686 + $0x64] sm:$0xf]
        %v1713 = vld [vmem:[%s1686 + $0x68] sm:$0xf]
        %v1714 = vld [vmem:[%s1686 + $0x6c] sm:$0xf]
        %v1715 = vld [vmem:[%s1686 + $0x70] sm:$0xf]
        %v1716 = vld [vmem:[%s1686 + $0x74] sm:$0xf]
        %v1717 = vld [vmem:[%s1686 + $0x78] sm:$0xf]
        %v1718 = vld [vmem:[%s1686 + $0x7c] sm:$0xf]
        %v1719 = vld [vmem:[%s1686 + $0x80] sm:$0xf]
        %v1720 = vld [vmem:[%s1686 + $0x84] sm:$0xf]
        %v1721 = vld [vmem:[%s1686 + $0x88] sm:$0xf]
        %v1722 = vld [vmem:[%s1686 + $0x8c] sm:$0xf]
        %v1723 = vld [vmem:[%s1686 + $0x90] sm:$0xf]
        %v1724 = vld [vmem:[%s1686 + $0x94] sm:$0xf]
        %v1725 = vld [vmem:[%s1686 + $0x98] sm:$0xf]
        %v1726 = vld [vmem:[%s1686 + $0x9c] sm:$0xf]
        %v1727 = vld [vmem:[%s1686 + $0xa0] sm:$0xf]
        %v1728 = vld [vmem:[%s1686 + $0xa4] sm:$0xf]
        %v1729 = vld [vmem:[%s1686 + $0xa8] sm:$0xf]
        %v1730 = vld [vmem:[%s1686 + $0xac] sm:$0xf]
        %v1731 = vld [vmem:[%s1686 + $0xb0] sm:$0xf]
        %v1732 = vld [vmem:[%s1686 + $0xb4] sm:$0xf]
        %v1733 = vld [vmem:[%s1686 + $0xb8] sm:$0xf]
        %v1734 = vld [vmem:[%s1686 + $0xbc] sm:$0xf]
        %v1799 = vunpack.c.l.b16 %v1622
        %v1800 = vunpack.c.h.b16 %v1622
        %v1801 = vunpack.c.l.b16 %v1623
        %v1802 = vunpack.c.l.b16 %v1624
        %v1803 = vunpack.c.h.b16 %v1624
        %v1804 = vunpack.c.l.b16 %v1625
        %v1805 = vunpack.c.l.b16 %v1626
        %v1806 = vunpack.c.h.b16 %v1626
        %v1807 = vunpack.c.l.b16 %v1627
        %v1808 = vunpack.c.l.b16 %v1628
        %v1809 = vunpack.c.h.b16 %v1628
        %v1810 = vunpack.c.l.b16 %v1629
        %v1811 = vunpack.c.l.b16 %v1630
        %v1812 = vunpack.c.h.b16 %v1630
        %v1813 = vunpack.c.l.b16 %v1631
        %v1814 = vunpack.c.l.b16 %v1632
        %v1815 = vunpack.c.h.b16 %v1632
        %v1816 = vunpack.c.l.b16 %v1633
        %v1817 = vunpack.c.l.b16 %v1634
        %v1818 = vunpack.c.h.b16 %v1634
        %v1819 = vunpack.c.l.b16 %v1635
        %v1820 = vunpack.c.l.b16 %v1636
        %v1821 = vunpack.c.h.b16 %v1636
        %v1822 = vunpack.c.l.b16 %v1637
        %v1823 = vunpack.c.l.b16 %v1638
        %v1824 = vunpack.c.h.b16 %v1638
        %v1825 = vunpack.c.l.b16 %v1639
        %v1826 = vunpack.c.l.b16 %v1640
        %v1827 = vunpack.c.h.b16 %v1640
        %v1828 = vunpack.c.l.b16 %v1641
        %v1829 = vunpack.c.l.b16 %v1642
        %v1830 = vunpack.c.h.b16 %v1642
        %v1831 = vunpack.c.l.b16 %v1643
        %v1832 = vunpack.c.l.b16 %v1644
        %v1833 = vunpack.c.h.b16 %v1644
        %v1834 = vunpack.c.l.b16 %v1645
        %v1835 = vunpack.c.l.b16 %v1646
        %v1836 = vunpack.c.h.b16 %v1646
        %v1837 = vunpack.c.l.b16 %v1647
        %v1838 = vunpack.c.l.b16 %v1648
        %v1839 = vunpack.c.h.b16 %v1648
        %v1840 = vunpack.c.l.b16 %v1649
        %v1841 = vunpack.c.l.b16 %v1650
        %v1842 = vunpack.c.h.b16 %v1650
        %v1843 = vunpack.c.l.b16 %v1651
        %v1844 = vunpack.c.l.b16 %v1652
        %v1845 = vunpack.c.h.b16 %v1652
        %v1846 = vunpack.c.l.b16 %v1653
        %v1847 = vunpack.c.l.b16 %v1654
        %v1848 = vunpack.c.h.b16 %v1654
        %v1849 = vunpack.c.l.b16 %v1655
        %v1850 = vunpack.c.l.b16 %v1656
        %v1851 = vunpack.c.h.b16 %v1656
        %v1852 = vunpack.c.l.b16 %v1657
        %v1853 = vunpack.c.l.b16 %v1658
        %v1854 = vunpack.c.h.b16 %v1658
        %v1855 = vunpack.c.l.b16 %v1659
        %v1856 = vunpack.c.l.b16 %v1660
        %v1857 = vunpack.c.h.b16 %v1660
        %v1858 = vunpack.c.l.b16 %v1661
        %v1859 = vunpack.c.l.b16 %v1662
        %v1860 = vunpack.c.h.b16 %v1662
        %v1861 = vunpack.c.l.b16 %v1663
        %v1862 = vunpack.c.l.b16 %v1664
        %v1863 = vunpack.c.h.b16 %v1664
        %v1864 = vunpack.c.l.b16 %v1665
        %v1865 = vunpack.c.l.b16 %v1666
        %v1866 = vunpack.c.h.b16 %v1666
        %v1867 = vunpack.c.l.b16 %v1667
        %v1868 = vunpack.c.l.b16 %v1668
        %v1869 = vunpack.c.h.b16 %v1668
        %v1870 = vunpack.c.l.b16 %v1669
        %v1871 = vunpack.c.l.b16 %v1670
        %v1872 = vunpack.c.h.b16 %v1670
        %v1873 = vunpack.c.l.b16 %v1671
        %v1874 = vunpack.c.l.b16 %v1672
        %v1875 = vunpack.c.h.b16 %v1672
        %v1876 = vunpack.c.l.b16 %v1673
        %v1877 = vunpack.c.l.b16 %v1674
        %v1878 = vunpack.c.h.b16 %v1674
        %v1879 = vunpack.c.l.b16 %v1675
        %v1880 = vunpack.c.l.b16 %v1676
        %v1881 = vunpack.c.h.b16 %v1676
        %v1882 = vunpack.c.l.b16 %v1677
        %v1883 = vunpack.c.l.b16 %v1678
        %v1884 = vunpack.c.h.b16 %v1678
        %v1885 = vunpack.c.l.b16 %v1679
        %v1886 = vunpack.c.l.b16 %v1680
        %v1887 = vunpack.c.h.b16 %v1680
        %v1888 = vunpack.c.l.b16 %v1681
        %v1889 = vunpack.c.l.b16 %v1682
        %v1890 = vunpack.c.h.b16 %v1682
        %v1891 = vunpack.c.l.b16 %v1683
        %v1892 = vunpack.c.l.b16 %v1684
        %v1893 = vunpack.c.h.b16 %v1684
        %v1894 = vunpack.c.l.b16 %v1685
        %v1895 = vpack.c.b16 %v1802, %v1799
        %v1896 = vpack.c.b16 %v1803, %v1800
        %v1897 = vpack.c.b16 %v1804, %v1801
        %v1898 = vpack.c.b16 %v1808, %v1805
        %v1899 = vpack.c.b16 %v1809, %v1806
        %v1900 = vpack.c.b16 %v1810, %v1807
        %v1901 = vpack.c.b16 %v1814, %v1811
        %v1902 = vpack.c.b16 %v1815, %v1812
        %v1903 = vpack.c.b16 %v1816, %v1813
        %v1904 = vpack.c.b16 %v1820, %v1817
        %v1905 = vpack.c.b16 %v1821, %v1818
        %v1906 = vpack.c.b16 %v1822, %v1819
        %v1907 = vpack.c.b16 %v1826, %v1823
        %v1908 = vpack.c.b16 %v1827, %v1824
        %v1909 = vpack.c.b16 %v1828, %v1825
        %v1910 = vpack.c.b16 %v1832, %v1829
        %v1911 = vpack.c.b16 %v1833, %v1830
        %v1912 = vpack.c.b16 %v1834, %v1831
        %v1913 = vpack.c.b16 %v1838, %v1835
        %v1914 = vpack.c.b16 %v1839, %v1836
        %v1915 = vpack.c.b16 %v1840, %v1837
        %v1916 = vpack.c.b16 %v1844, %v1841
        %v1917 = vpack.c.b16 %v1845, %v1842
        %v1918 = vpack.c.b16 %v1846, %v1843
        %v1919 = vpack.c.b16 %v1850, %v1847
        %v1920 = vpack.c.b16 %v1851, %v1848
        %v1921 = vpack.c.b16 %v1852, %v1849
        %v1922 = vpack.c.b16 %v1856, %v1853
        %v1923 = vpack.c.b16 %v1857, %v1854
        %v1924 = vpack.c.b16 %v1858, %v1855
        %v1925 = vpack.c.b16 %v1862, %v1859
        %v1926 = vpack.c.b16 %v1863, %v1860
        %v1927 = vpack.c.b16 %v1864, %v1861
        %v1928 = vpack.c.b16 %v1868, %v1865
        %v1929 = vpack.c.b16 %v1869, %v1866
        %v1930 = vpack.c.b16 %v1870, %v1867
        %v1931 = vpack.c.b16 %v1874, %v1871
        %v1932 = vpack.c.b16 %v1875, %v1872
        %v1933 = vpack.c.b16 %v1876, %v1873
        %v1934 = vpack.c.b16 %v1880, %v1877
        %v1935 = vpack.c.b16 %v1881, %v1878
        %v1936 = vpack.c.b16 %v1882, %v1879
        %v1937 = vpack.c.b16 %v1886, %v1883
        %v1938 = vpack.c.b16 %v1887, %v1884
        %v1939 = vpack.c.b16 %v1888, %v1885
        %v1940 = vpack.c.b16 %v1892, %v1889
        %v1941 = vpack.c.b16 %v1893, %v1890
        %v1942 = vpack.c.b16 %v1894, %v1891
        %v2039 = vunpack.c.l.b16 %v1687
        %v2040 = vunpack.c.l.b16 %v1688
        %v2041 = vunpack.c.l.b16 %v1689
        %v2042 = vunpack.c.l.b16 %v1690
        %v2043 = vunpack.c.l.b16 %v1691
        %v2044 = vunpack.c.l.b16 %v1692
        %v2045 = vunpack.c.l.b16 %v1693
        %v2046 = vunpack.c.l.b16 %v1694
        %v2047 = vunpack.c.l.b16 %v1695
        %v2048 = vunpack.c.l.b16 %v1696
        %v2049 = vunpack.c.l.b16 %v1697
        %v2050 = vunpack.c.l.b16 %v1698
        %v2051 = vunpack.c.l.b16 %v1699
        %v2052 = vunpack.c.l.b16 %v1700
        %v2053 = vunpack.c.l.b16 %v1701
        %v2054 = vunpack.c.l.b16 %v1702
        %v2055 = vunpack.c.l.b16 %v1703
        %v2056 = vunpack.c.l.b16 %v1704
        %v2057 = vunpack.c.l.b16 %v1705
        %v2058 = vunpack.c.l.b16 %v1706
        %v2059 = vunpack.c.l.b16 %v1707
        %v2060 = vunpack.c.l.b16 %v1708
        %v2061 = vunpack.c.l.b16 %v1709
        %v2062 = vunpack.c.l.b16 %v1710
        %v2063 = vunpack.c.l.b16 %v1711
        %v2064 = vunpack.c.l.b16 %v1712
        %v2065 = vunpack.c.l.b16 %v1713
        %v2066 = vunpack.c.l.b16 %v1714
        %v2067 = vunpack.c.l.b16 %v1715
        %v2068 = vunpack.c.l.b16 %v1716
        %v2069 = vunpack.c.l.b16 %v1717
        %v2070 = vunpack.c.l.b16 %v1718
        %v2071 = vunpack.c.l.b16 %v1719
        %v2072 = vunpack.c.l.b16 %v1720
        %v2073 = vunpack.c.l.b16 %v1721
        %v2074 = vunpack.c.l.b16 %v1722
        %v2075 = vunpack.c.l.b16 %v1723
        %v2076 = vunpack.c.l.b16 %v1724
        %v2077 = vunpack.c.l.b16 %v1725
        %v2078 = vunpack.c.l.b16 %v1726
        %v2079 = vunpack.c.l.b16 %v1727
        %v2080 = vunpack.c.l.b16 %v1728
        %v2081 = vunpack.c.l.b16 %v1729
        %v2082 = vunpack.c.l.b16 %v1730
        %v2083 = vunpack.c.l.b16 %v1731
        %v2084 = vunpack.c.l.b16 %v1732
        %v2085 = vunpack.c.l.b16 %v1733
        %v2086 = vunpack.c.l.b16 %v1734
        %v2087 = vpack.c.b16 %v2040, %v2039
        %v2088 = vpack.c.b16 %v2042, %v2041
        %v2089 = vpack.c.b16 %v2044, %v2043
        %v2090 = vpack.c.b16 %v2046, %v2045
        %v2091 = vpack.c.b16 %v2048, %v2047
        %v2092 = vpack.c.b16 %v2050, %v2049
        %v2093 = vpack.c.b16 %v2052, %v2051
        %v2094 = vpack.c.b16 %v2054, %v2053
        %v2095 = vpack.c.b16 %v2056, %v2055
        %v2096 = vpack.c.b16 %v2058, %v2057
        %v2097 = vpack.c.b16 %v2060, %v2059
        %v2098 = vpack.c.b16 %v2062, %v2061
        %v2099 = vpack.c.b16 %v2064, %v2063
        %v2100 = vpack.c.b16 %v2066, %v2065
        %v2101 = vpack.c.b16 %v2068, %v2067
        %v2102 = vpack.c.b16 %v2070, %v2069
        %v2103 = vpack.c.b16 %v2072, %v2071
        %v2104 = vpack.c.b16 %v2074, %v2073
        %v2105 = vpack.c.b16 %v2076, %v2075
        %v2106 = vpack.c.b16 %v2078, %v2077
        %v2107 = vpack.c.b16 %v2080, %v2079
        %v2108 = vpack.c.b16 %v2082, %v2081
        %v2109 = vpack.c.b16 %v2084, %v2083
        %v2110 = vpack.c.b16 %v2086, %v2085
        %2135 = vmatprep.subr.bf16.mxu0 0
        %2136 = vmatpush1.bf16.msra.mxu0 %v2094
        %2137 = vmatprep.subr.bf16.mxu0 0
        %2138 = vmatpush1.bf16.msra.mxu0 %v2093
        %2139 = vmatprep.subr.bf16.mxu0 0
        %2140 = vmatpush1.bf16.msra.mxu0 %v2092
        %2141 = vmatprep.subr.bf16.mxu0 0
        %2142 = vmatpush1.bf16.msra.mxu0 %v2091
        %2143 = vmatprep.subr.bf16.mxu0 0
        %2144 = vmatpush1.bf16.msra.mxu0 %v2090
        %2145 = vmatprep.subr.bf16.mxu0 0
        %2146 = vmatpush1.bf16.msra.mxu0 %v2089
        %2147 = vmatprep.subr.bf16.mxu0 0
        %2148 = vmatpush1.bf16.msra.mxu0 %v2088
        %2149 = vmatprep.subr.bf16.mxu0 0
        %2150 = vmatpush1.bf16.msra.mxu0 %v2087
        %2151 = vmatprep.subr.bf16.mxu0 0
        %2152 = vmatpush2.bf16.msra.mxu0 %v2102
        %2153 = vmatprep.subr.bf16.mxu0 0
        %2154 = vmatpush2.bf16.msra.mxu0 %v2101
        %2155 = vmatprep.subr.bf16.mxu0 0
        %2156 = vmatpush2.bf16.msra.mxu0 %v2100
        %2157 = vmatprep.subr.bf16.mxu0 0
        %2158 = vmatpush2.bf16.msra.mxu0 %v2099
        %2159 = vmatprep.subr.bf16.mxu0 0
        %2160 = vmatpush2.bf16.msra.mxu0 %v2098
        %2161 = vmatprep.subr.bf16.mxu0 0
        %2162 = vmatpush2.bf16.msra.mxu0 %v2097
        %2163 = vmatprep.subr.bf16.mxu0 0
        %2164 = vmatpush2.bf16.msra.mxu0 %v2096
        %2165 = vmatprep.subr.bf16.mxu0 0
        %2166 = vmatpush2.bf16.msra.mxu0 %v2095
        %2167 = vmatprep.mubr.bf16.mxu0 %v1896
        %2168 = vmatmul.mubr.bf16.gmra.mxu0 %v1895
        %v2169 = vpop.f32.mrf.mxu0
        %v2170 = vadd.f32 0.0, %v2169
        %v2171 = vpop.f32.mrf.mxu0
        %v2172 = vpop.f32.mrf.mxu0
        %v2173 = vadd.f32 0.0, %v2172
        %v2174 = vpop.f32.mrf.mxu0
        %2175 = vmatprep.mubr.bf16.mxu0 %v1899
        %2176 = vmatmul.mubr.bf16.gmra.mxu0 %v1898
        %v2177 = vpop.f32.mrf.mxu0
        %v2178 = vadd.f32 0.0, %v2177
        %v2179 = vpop.f32.mrf.mxu0
        %v2180 = vpop.f32.mrf.mxu0
        %v2181 = vadd.f32 0.0, %v2180
        %v2182 = vpop.f32.mrf.mxu0
        %2183 = vmatprep.mubr.bf16.mxu0 %v1902
        %2184 = vmatmul.mubr.bf16.gmra.mxu0 %v1901
        %v2185 = vpop.f32.mrf.mxu0
        %v2186 = vadd.f32 0.0, %v2185
        %v2187 = vpop.f32.mrf.mxu0
        %v2188 = vpop.f32.mrf.mxu0
        %v2189 = vadd.f32 0.0, %v2188
        %v2190 = vpop.f32.mrf.mxu0
        %2191 = vmatprep.mubr.bf16.mxu0 %v1905
        %2192 = vmatmul.mubr.bf16.gmra.mxu0 %v1904
        %v2193 = vpop.f32.mrf.mxu0
        %v2194 = vadd.f32 0.0, %v2193
        %v2195 = vpop.f32.mrf.mxu0
        %v2196 = vpop.f32.mrf.mxu0
        %v2197 = vadd.f32 0.0, %v2196
        %v2198 = vpop.f32.mrf.mxu0
        %2199 = vmatprep.mubr.bf16.mxu0 %v1908
        %2200 = vmatmul.mubr.bf16.gmra.mxu0 %v1907
        %v2201 = vpop.f32.mrf.mxu0
        %v2202 = vadd.f32 0.0, %v2201
        %v2203 = vpop.f32.mrf.mxu0
        %v2204 = vpop.f32.mrf.mxu0
        %v2205 = vadd.f32 0.0, %v2204
        %v2206 = vpop.f32.mrf.mxu0
        %2207 = vmatprep.mubr.bf16.mxu0 %v1911
        %2208 = vmatmul.mubr.bf16.gmra.mxu0 %v1910
        %v2209 = vpop.f32.mrf.mxu0
        %v2210 = vadd.f32 0.0, %v2209
        %v2211 = vpop.f32.mrf.mxu0
        %v2212 = vpop.f32.mrf.mxu0
        %v2213 = vadd.f32 0.0, %v2212
        %v2214 = vpop.f32.mrf.mxu0
        %2215 = vmatprep.mubr.bf16.mxu0 %v1914
        %2216 = vmatmul.mubr.bf16.gmra.mxu0 %v1913
        %v2217 = vpop.f32.mrf.mxu0
        %v2218 = vadd.f32 0.0, %v2217
        %v2219 = vpop.f32.mrf.mxu0
        %v2220 = vpop.f32.mrf.mxu0
        %v2221 = vadd.f32 0.0, %v2220
        %v2222 = vpop.f32.mrf.mxu0
        %2223 = vmatprep.mubr.bf16.mxu0 %v1917
        %2224 = vmatmul.mubr.bf16.gmra.mxu0 %v1916
        %v2225 = vpop.f32.mrf.mxu0
        %v2226 = vadd.f32 0.0, %v2225
        %v2227 = vpop.f32.mrf.mxu0
        %v2228 = vpop.f32.mrf.mxu0
        %v2229 = vadd.f32 0.0, %v2228
        %v2230 = vpop.f32.mrf.mxu0
        %2231 = vmatprep.mubr.bf16.mxu0 %v1920
        %2232 = vmatmul.mubr.bf16.gmra.mxu0 %v1919
        %v2233 = vpop.f32.mrf.mxu0
        %v2234 = vadd.f32 0.0, %v2233
        %v2235 = vpop.f32.mrf.mxu0
        %v2236 = vpop.f32.mrf.mxu0
        %v2237 = vadd.f32 0.0, %v2236
        %v2238 = vpop.f32.mrf.mxu0
        %2239 = vmatprep.mubr.bf16.mxu0 %v1923
        %2240 = vmatmul.mubr.bf16.gmra.mxu0 %v1922
        %v2241 = vpop.f32.mrf.mxu0
        %v2242 = vadd.f32 0.0, %v2241
        %v2243 = vpop.f32.mrf.mxu0
        %v2244 = vpop.f32.mrf.mxu0
        %v2245 = vadd.f32 0.0, %v2244
        %v2246 = vpop.f32.mrf.mxu0
        %2247 = vmatprep.mubr.bf16.mxu0 %v1926
        %2248 = vmatmul.mubr.bf16.gmra.mxu0 %v1925
        %v2249 = vpop.f32.mrf.mxu0
        %v2250 = vadd.f32 0.0, %v2249
        %v2251 = vpop.f32.mrf.mxu0
        %v2252 = vpop.f32.mrf.mxu0
        %v2253 = vadd.f32 0.0, %v2252
        %v2254 = vpop.f32.mrf.mxu0
        %2255 = vmatprep.mubr.bf16.mxu0 %v1929
        %2256 = vmatmul.mubr.bf16.gmra.mxu0 %v1928
        %v2257 = vpop.f32.mrf.mxu0
        %v2258 = vadd.f32 0.0, %v2257
        %v2259 = vpop.f32.mrf.mxu0
        %v2260 = vpop.f32.mrf.mxu0
        %v2261 = vadd.f32 0.0, %v2260
        %v2262 = vpop.f32.mrf.mxu0
        %2263 = vmatprep.mubr.bf16.mxu0 %v1932
        %2264 = vmatmul.mubr.bf16.gmra.mxu0 %v1931
        %v2265 = vpop.f32.mrf.mxu0
        %v2266 = vadd.f32 0.0, %v2265
        %v2267 = vpop.f32.mrf.mxu0
        %v2268 = vpop.f32.mrf.mxu0
        %v2269 = vadd.f32 0.0, %v2268
        %v2270 = vpop.f32.mrf.mxu0
        %2271 = vmatprep.mubr.bf16.mxu0 %v1935
        %2272 = vmatmul.mubr.bf16.gmra.mxu0 %v1934
        %v2273 = vpop.f32.mrf.mxu0
        %v2274 = vadd.f32 0.0, %v2273
        %v2275 = vpop.f32.mrf.mxu0
        %v2276 = vpop.f32.mrf.mxu0
        %v2277 = vadd.f32 0.0, %v2276
        %v2278 = vpop.f32.mrf.mxu0
        %2279 = vmatprep.mubr.bf16.mxu0 %v1938
        %2280 = vmatmul.mubr.bf16.gmra.mxu0 %v1937
        %v2281 = vpop.f32.mrf.mxu0
        %v2282 = vadd.f32 0.0, %v2281
        %v2283 = vpop.f32.mrf.mxu0
        %v2284 = vpop.f32.mrf.mxu0
        %v2285 = vadd.f32 0.0, %v2284
        %v2286 = vpop.f32.mrf.mxu0
        %2287 = vmatprep.mubr.bf16.mxu0 %v1941
        %2288 = vmatmul.mubr.bf16.gmra.mxu0 %v1940
        %v2289 = vpop.f32.mrf.mxu0
        %v2290 = vadd.f32 0.0, %v2289
        %v2291 = vpop.f32.mrf.mxu0
        %v2292 = vpop.f32.mrf.mxu0
        %v2293 = vadd.f32 0.0, %v2292
        %v2294 = vpop.f32.mrf.mxu0
        %2295 = vdwg.mxu0
        %2296 = vmatprep.subr.bf16.mxu0 0
        %2297 = vmatpush1.bf16.msra.mxu0 %v2110
        %2298 = vmatprep.subr.bf16.mxu0 0
        %2299 = vmatpush1.bf16.msra.mxu0 %v2109
        %2300 = vmatprep.subr.bf16.mxu0 0
        %2301 = vmatpush1.bf16.msra.mxu0 %v2108
        %2302 = vmatprep.subr.bf16.mxu0 0
        %2303 = vmatpush1.bf16.msra.mxu0 %v2107
        %2304 = vmatprep.subr.bf16.mxu0 0
        %2305 = vmatpush1.bf16.msra.mxu0 %v2106
        %2306 = vmatprep.subr.bf16.mxu0 0
        %2307 = vmatpush1.bf16.msra.mxu0 %v2105
        %2308 = vmatprep.subr.bf16.mxu0 0
        %2309 = vmatpush1.bf16.msra.mxu0 %v2104
        %2310 = vmatprep.subr.bf16.mxu0 0
        %2311 = vmatpush1.bf16.msra.mxu0 %v2103
        %2312 = vmatprep.subr.bf16.mxu0 0
        %2313 = vmatpush2.bf16.msra.mxu0 0
        %2314 = vmatprep.subr.bf16.mxu0 0
        %2315 = vmatpush2.bf16.msra.mxu0 0
        %2316 = vmatprep.subr.bf16.mxu0 0
        %2317 = vmatpush2.bf16.msra.mxu0 0
        %2318 = vmatprep.subr.bf16.mxu0 0
        %2319 = vmatpush2.bf16.msra.mxu0 0
        %2320 = vmatprep.subr.bf16.mxu0 0
        %2321 = vmatpush2.bf16.msra.mxu0 0
        %2322 = vmatprep.subr.bf16.mxu0 0
        %2323 = vmatpush2.bf16.msra.mxu0 0
        %2324 = vmatprep.subr.bf16.mxu0 0
        %2325 = vmatpush2.bf16.msra.mxu0 0
        %2326 = vmatprep.subr.bf16.mxu0 0
        %2327 = vmatpush2.bf16.msra.mxu0 0
        %2328 = vmatprep.mubr.bf16.mxu0 0
        %2329 = vmatmul.mubr.bf16.gmra.mxu0 %v1897
        %v2330 = vpop.f32.mrf.mxu0
        %v2331 = vadd.f32 %v2170, %v2330
        %v2332 = vpop.f32.mrf.mxu0
        %v2333 = vpop.f32.mrf.mxu0
        %v2334 = vadd.f32 %v2173, %v2333
        %v2335 = vpop.f32.mrf.mxu0
        %2336 = vmatprep.mubr.bf16.mxu0 0
        %2337 = vmatmul.mubr.bf16.gmra.mxu0 %v1900
        %v2338 = vpop.f32.mrf.mxu0
        %v2339 = vadd.f32 %v2178, %v2338
        %v2340 = vpop.f32.mrf.mxu0
        %v2341 = vpop.f32.mrf.mxu0
        %v2342 = vadd.f32 %v2181, %v2341
        %v2343 = vpop.f32.mrf.mxu0
        %2344 = vmatprep.mubr.bf16.mxu0 0
        %2345 = vmatmul.mubr.bf16.gmra.mxu0 %v1903
        %v2346 = vpop.f32.mrf.mxu0
        %v2347 = vadd.f32 %v2186, %v2346
        %v2348 = vpop.f32.mrf.mxu0
        %v2349 = vpop.f32.mrf.mxu0
        %v2350 = vadd.f32 %v2189, %v2349
        %v2351 = vpop.f32.mrf.mxu0
        %2352 = vmatprep.mubr.bf16.mxu0 0
        %2353 = vmatmul.mubr.bf16.gmra.mxu0 %v1906
        %v2354 = vpop.f32.mrf.mxu0
        %v2355 = vadd.f32 %v2194, %v2354
        %v2356 = vpop.f32.mrf.mxu0
        %v2357 = vpop.f32.mrf.mxu0
        %v2358 = vadd.f32 %v2197, %v2357
        %v2359 = vpop.f32.mrf.mxu0
        %2360 = vmatprep.mubr.bf16.mxu0 0
        %2361 = vmatmul.mubr.bf16.gmra.mxu0 %v1909
        %v2362 = vpop.f32.mrf.mxu0
        %v2363 = vadd.f32 %v2202, %v2362
        %v2364 = vpop.f32.mrf.mxu0
        %v2365 = vpop.f32.mrf.mxu0
        %v2366 = vadd.f32 %v2205, %v2365
        %v2367 = vpop.f32.mrf.mxu0
        %2368 = vmatprep.mubr.bf16.mxu0 0
        %2369 = vmatmul.mubr.bf16.gmra.mxu0 %v1912
        %v2370 = vpop.f32.mrf.mxu0
        %v2371 = vadd.f32 %v2210, %v2370
        %v2372 = vpop.f32.mrf.mxu0
        %v2373 = vpop.f32.mrf.mxu0
        %v2374 = vadd.f32 %v2213, %v2373
        %v2375 = vpop.f32.mrf.mxu0
        %2376 = vmatprep.mubr.bf16.mxu0 0
        %2377 = vmatmul.mubr.bf16.gmra.mxu0 %v1915
        %v2378 = vpop.f32.mrf.mxu0
        %v2379 = vadd.f32 %v2218, %v2378
        %v2380 = vpop.f32.mrf.mxu0
        %v2381 = vpop.f32.mrf.mxu0
        %v2382 = vadd.f32 %v2221, %v2381
        %v2383 = vpop.f32.mrf.mxu0
        %2384 = vmatprep.mubr.bf16.mxu0 0
        %2385 = vmatmul.mubr.bf16.gmra.mxu0 %v1918
        %v2386 = vpop.f32.mrf.mxu0
        %v2387 = vadd.f32 %v2226, %v2386
        %v2388 = vpop.f32.mrf.mxu0
        %v2389 = vpop.f32.mrf.mxu0
        %v2390 = vadd.f32 %v2229, %v2389
        %v2391 = vpop.f32.mrf.mxu0
        %2392 = vmatprep.mubr.bf16.mxu0 0
        %2393 = vmatmul.mubr.bf16.gmra.mxu0 %v1921
        %v2394 = vpop.f32.mrf.mxu0
        %v2395 = vadd.f32 %v2234, %v2394
        %v2396 = vpop.f32.mrf.mxu0
        %v2397 = vpop.f32.mrf.mxu0
        %v2398 = vadd.f32 %v2237, %v2397
        %v2399 = vpop.f32.mrf.mxu0
        %2400 = vmatprep.mubr.bf16.mxu0 0
        %2401 = vmatmul.mubr.bf16.gmra.mxu0 %v1924
        %v2402 = vpop.f32.mrf.mxu0
        %v2403 = vadd.f32 %v2242, %v2402
        %v2404 = vpop.f32.mrf.mxu0
        %v2405 = vpop.f32.mrf.mxu0
        %v2406 = vadd.f32 %v2245, %v2405
        %v2407 = vpop.f32.mrf.mxu0
        %2408 = vmatprep.mubr.bf16.mxu0 0
        %2409 = vmatmul.mubr.bf16.gmra.mxu0 %v1927
        %v2410 = vpop.f32.mrf.mxu0
        %v2411 = vadd.f32 %v2250, %v2410
        %v2412 = vpop.f32.mrf.mxu0
        %v2413 = vpop.f32.mrf.mxu0
        %v2414 = vadd.f32 %v2253, %v2413
        %v2415 = vpop.f32.mrf.mxu0
        %2416 = vmatprep.mubr.bf16.mxu0 0
        %2417 = vmatmul.mubr.bf16.gmra.mxu0 %v1930
        %v2418 = vpop.f32.mrf.mxu0
        %v2419 = vadd.f32 %v2258, %v2418
        %v2420 = vpop.f32.mrf.mxu0
        %v2421 = vpop.f32.mrf.mxu0
        %v2422 = vadd.f32 %v2261, %v2421
        %v2423 = vpop.f32.mrf.mxu0
        %2424 = vmatprep.mubr.bf16.mxu0 0
        %2425 = vmatmul.mubr.bf16.gmra.mxu0 %v1933
        %v2426 = vpop.f32.mrf.mxu0
        %v2427 = vadd.f32 %v2266, %v2426
        %v2428 = vpop.f32.mrf.mxu0
        %v2429 = vpop.f32.mrf.mxu0
        %v2430 = vadd.f32 %v2269, %v2429
        %v2431 = vpop.f32.mrf.mxu0
        %2432 = vmatprep.mubr.bf16.mxu0 0
        %2433 = vmatmul.mubr.bf16.gmra.mxu0 %v1936
        %v2434 = vpop.f32.mrf.mxu0
        %v2435 = vadd.f32 %v2274, %v2434
        %v2436 = vpop.f32.mrf.mxu0
        %v2437 = vpop.f32.mrf.mxu0
        %v2438 = vadd.f32 %v2277, %v2437
        %v2439 = vpop.f32.mrf.mxu0
        %2440 = vmatprep.mubr.bf16.mxu0 0
        %2441 = vmatmul.mubr.bf16.gmra.mxu0 %v1939
        %v2442 = vpop.f32.mrf.mxu0
        %v2443 = vadd.f32 %v2282, %v2442
        %v2444 = vpop.f32.mrf.mxu0
        %v2445 = vpop.f32.mrf.mxu0
        %v2446 = vadd.f32 %v2285, %v2445
        %v2447 = vpop.f32.mrf.mxu0
        %2448 = vmatprep.mubr.bf16.mxu0 0
        %2449 = vmatmul.mubr.bf16.gmra.mxu0 %v1942
        %v2450 = vpop.f32.mrf.mxu0
        %v2451 = vadd.f32 %v2290, %v2450
        %v2452 = vpop.f32.mrf.mxu0
        %v2453 = vpop.f32.mrf.mxu0
        %v2454 = vadd.f32 %v2293, %v2453
        %v2455 = vpop.f32.mrf.mxu0
        %2456 = vdwg.mxu0
        %v2457 = vadd.f32 %v1496, %v2331
        %v2458 = vadd.f32 %v1499, %v2334
        %v2459 = vadd.f32 %v1504, %v2339
        %v2460 = vadd.f32 %v1507, %v2342
        %v2461 = vadd.f32 %v1512, %v2347
        %v2462 = vadd.f32 %v1515, %v2350
        %v2463 = vadd.f32 %v1520, %v2355
        %v2464 = vadd.f32 %v1523, %v2358
        %v2465 = vadd.f32 %v1528, %v2363
        %v2466 = vadd.f32 %v1531, %v2366
        %v2467 = vadd.f32 %v1536, %v2371
        %v2468 = vadd.f32 %v1539, %v2374
        %v2469 = vadd.f32 %v1544, %v2379
        %v2470 = vadd.f32 %v1547, %v2382
        %v2471 = vadd.f32 %v1552, %v2387
        %v2472 = vadd.f32 %v1555, %v2390
        %v2473 = vadd.f32 %v1560, %v2395
        %v2474 = vadd.f32 %v1563, %v2398
        %v2475 = vadd.f32 %v1568, %v2403
        %v2476 = vadd.f32 %v1571, %v2406
        %v2477 = vadd.f32 %v1576, %v2411
        %v2478 = vadd.f32 %v1579, %v2414
        %v2479 = vadd.f32 %v1584, %v2419
        %v2480 = vadd.f32 %v1587, %v2422
        %v2481 = vadd.f32 %v1592, %v2427
        %v2482 = vadd.f32 %v1595, %v2430
        %v2483 = vadd.f32 %v1600, %v2435
        %v2484 = vadd.f32 %v1603, %v2438
        %v2485 = vadd.f32 %v1608, %v2443
        %v2486 = vadd.f32 %v1611, %v2446
        %v2487 = vadd.f32 %v1616, %v2451
        %v2488 = vadd.f32 %v1619, %v2454
        %v2489 = vpack.c.bf16 %v2458, %v2457
        %v2490 = vpack.c.bf16 %v2460, %v2459
        %v2491 = vpack.c.bf16 %v2462, %v2461
        %v2492 = vpack.c.bf16 %v2464, %v2463
        %v2493 = vpack.c.bf16 %v2466, %v2465
        %v2494 = vpack.c.bf16 %v2468, %v2467
        %v2495 = vpack.c.bf16 %v2470, %v2469
        %v2496 = vpack.c.bf16 %v2472, %v2471
        %v2497 = vpack.c.bf16 %v2474, %v2473
        %v2498 = vpack.c.bf16 %v2476, %v2475
        %v2499 = vpack.c.bf16 %v2478, %v2477
        %v2500 = vpack.c.bf16 %v2480, %v2479
        %v2501 = vpack.c.bf16 %v2482, %v2481
        %v2502 = vpack.c.bf16 %v2484, %v2483
        %v2503 = vpack.c.bf16 %v2486, %v2485
        %v2504 = vpack.c.bf16 %v2488, %v2487
        %v2521 = vunpack.c.l.b16 %v2489
        %v2522 = vunpack.c.h.b16 %v2489
        %v2523 = vunpack.c.l.b16 %v2490
        %v2524 = vunpack.c.h.b16 %v2490
        %v2525 = vunpack.c.l.b16 %v2491
        %v2526 = vunpack.c.h.b16 %v2491
        %v2527 = vunpack.c.l.b16 %v2492
        %v2528 = vunpack.c.h.b16 %v2492
        %v2529 = vunpack.c.l.b16 %v2493
        %v2530 = vunpack.c.h.b16 %v2493
        %v2531 = vunpack.c.l.b16 %v2494
        %v2532 = vunpack.c.h.b16 %v2494
        %v2533 = vunpack.c.l.b16 %v2495
        %v2534 = vunpack.c.h.b16 %v2495
        %v2535 = vunpack.c.l.b16 %v2496
        %v2536 = vunpack.c.h.b16 %v2496
        %v2537 = vunpack.c.l.b16 %v2497
        %v2538 = vunpack.c.h.b16 %v2497
        %v2539 = vunpack.c.l.b16 %v2498
        %v2540 = vunpack.c.h.b16 %v2498
        %v2541 = vunpack.c.l.b16 %v2499
        %v2542 = vunpack.c.h.b16 %v2499
        %v2543 = vunpack.c.l.b16 %v2500
        %v2544 = vunpack.c.h.b16 %v2500
        %v2545 = vunpack.c.l.b16 %v2501
        %v2546 = vunpack.c.h.b16 %v2501
        %v2547 = vunpack.c.l.b16 %v2502
        %v2548 = vunpack.c.h.b16 %v2502
        %v2549 = vunpack.c.l.b16 %v2503
        %v2550 = vunpack.c.h.b16 %v2503
        %v2551 = vunpack.c.l.b16 %v2504
        %v2552 = vunpack.c.h.b16 %v2504
        %v2553 = vpack.c.b16 %v2521, %v2521
        %v2554 = vpack.c.b16 %v2522, %v2522
        %v2555 = vpack.c.b16 %v2523, %v2523
        %v2556 = vpack.c.b16 %v2524, %v2524
        %v2557 = vpack.c.b16 %v2525, %v2525
        %v2558 = vpack.c.b16 %v2526, %v2526
        %v2559 = vpack.c.b16 %v2527, %v2527
        %v2560 = vpack.c.b16 %v2528, %v2528
        %v2561 = vpack.c.b16 %v2529, %v2529
        %v2562 = vpack.c.b16 %v2530, %v2530
        %v2563 = vpack.c.b16 %v2531, %v2531
        %v2564 = vpack.c.b16 %v2532, %v2532
        %v2565 = vpack.c.b16 %v2533, %v2533
        %v2566 = vpack.c.b16 %v2534, %v2534
        %v2567 = vpack.c.b16 %v2535, %v2535
        %v2568 = vpack.c.b16 %v2536, %v2536
        %v2569 = vpack.c.b16 %v2537, %v2537
        %v2570 = vpack.c.b16 %v2538, %v2538
        %v2571 = vpack.c.b16 %v2539, %v2539
        %v2572 = vpack.c.b16 %v2540, %v2540
        %v2573 = vpack.c.b16 %v2541, %v2541
        %v2574 = vpack.c.b16 %v2542, %v2542
        %v2575 = vpack.c.b16 %v2543, %v2543
        %v2576 = vpack.c.b16 %v2544, %v2544
        %v2577 = vpack.c.b16 %v2545, %v2545
        %v2578 = vpack.c.b16 %v2546, %v2546
        %v2579 = vpack.c.b16 %v2547, %v2547
        %v2580 = vpack.c.b16 %v2548, %v2548
        %v2581 = vpack.c.b16 %v2549, %v2549
        %v2582 = vpack.c.b16 %v2550, %v2550
        %v2583 = vpack.c.b16 %v2551, %v2551
        %v2584 = vpack.c.b16 %v2552, %v2552
        %2617 = vst [vmem:[%s245] sm:$0xf] %v2553
        %2618 = vst [vmem:[%s245 + $0x4] sm:$0xf] %v2554
        %2619 = vst [vmem:[%s245 + $0x8] sm:$0xf] %v2555
        %2620 = vst [vmem:[%s245 + $0xc] sm:$0xf] %v2556
        %2621 = vst [vmem:[%s245 + $0x10] sm:$0xf] %v2557
        %2622 = vst [vmem:[%s245 + $0x14] sm:$0xf] %v2558
        %2623 = vst [vmem:[%s245 + $0x18] sm:$0xf] %v2559
        %2624 = vst [vmem:[%s245 + $0x1c] sm:$0xf] %v2560
        %2625 = vst [vmem:[%s245 + $0x20] sm:$0xf] %v2561
        %2626 = vst [vmem:[%s245 + $0x24] sm:$0xf] %v2562
        %2627 = vst [vmem:[%s245 + $0x28] sm:$0xf] %v2563
        %2628 = vst [vmem:[%s245 + $0x2c] sm:$0xf] %v2564
        %2629 = vst [vmem:[%s245 + $0x30] sm:$0xf] %v2565
        %2630 = vst [vmem:[%s245 + $0x34] sm:$0xf] %v2566
        %2631 = vst [vmem:[%s245 + $0x38] sm:$0xf] %v2567
        %2632 = vst [vmem:[%s245 + $0x3c] sm:$0xf] %v2568
        %2633 = vst [vmem:[%s245 + $0x40] sm:$0xf] %v2569
        %2634 = vst [vmem:[%s245 + $0x44] sm:$0xf] %v2570
        %2635 = vst [vmem:[%s245 + $0x48] sm:$0xf] %v2571
        %2636 = vst [vmem:[%s245 + $0x4c] sm:$0xf] %v2572
        %2637 = vst [vmem:[%s245 + $0x50] sm:$0xf] %v2573
        %2638 = vst [vmem:[%s245 + $0x54] sm:$0xf] %v2574
        %2639 = vst [vmem:[%s245 + $0x58] sm:$0xf] %v2575
        %2640 = vst [vmem:[%s245 + $0x5c] sm:$0xf] %v2576
        %2641 = vst [vmem:[%s245 + $0x60] sm:$0xf] %v2577
        %2642 = vst [vmem:[%s245 + $0x64] sm:$0xf] %v2578
        %2643 = vst [vmem:[%s245 + $0x68] sm:$0xf] %v2579
        %2644 = vst [vmem:[%s245 + $0x6c] sm:$0xf] %v2580
        %2645 = vst [vmem:[%s245 + $0x70] sm:$0xf] %v2581
        %2646 = vst [vmem:[%s245 + $0x74] sm:$0xf] %v2582
        %2647 = vst [vmem:[%s245 + $0x78] sm:$0xf] %v2583
        %2648 = vst [vmem:[%s245 + $0x7c] sm:$0xf] %v2584
        %v2649 = vadd.f32 %v2457, %v2458
        %v2650 = vadd.f32 %v2649, %v2459
        %v2651 = vadd.f32 %v2650, %v2460
        %v2652 = vadd.f32 %v2651, %v2461
        %v2653 = vadd.f32 %v2652, %v2462
        %v2654 = vadd.f32 %v2653, %v2463
        %v2655 = vadd.f32 %v2654, %v2464
        %v2656 = vadd.f32 %v2655, %v2465
        %v2657 = vadd.f32 %v2656, %v2466
        %v2658 = vadd.f32 %v2657, %v2467
        %v2659 = vadd.f32 %v2658, %v2468
        %v2660 = vadd.f32 %v2659, %v2469
        %v2661 = vadd.f32 %v2660, %v2470
        %v2662 = vadd.f32 %v2661, %v2471
        %v2663 = vadd.f32 %v2662, %v2472
        %v2664 = vadd.f32 %v2663, %v2473
        %v2665 = vadd.f32 %v2664, %v2474
        %v2666 = vadd.f32 %v2665, %v2475
        %v2667 = vadd.f32 %v2666, %v2476
        %v2668 = vadd.f32 %v2667, %v2477
        %v2669 = vadd.f32 %v2668, %v2478
        %v2670 = vadd.f32 %v2669, %v2479
        %v2671 = vadd.f32 %v2670, %v2480
        %v2672 = vadd.f32 %v2671, %v2481
        %v2673 = vadd.f32 %v2672, %v2482
        %v2674 = vadd.f32 %v2673, %v2483
        %v2675 = vadd.f32 %v2674, %v2484
        %v2676 = vadd.f32 %v2675, %v2485
        %v2677 = vadd.f32 %v2676, %v2486
        %v2678 = vadd.f32 %v2677, %v2487
        %v2679 = vadd.f32 %v2678, %v2488
        %v2680 = vrot.slane %v2679, 4
        %v2681 = vadd.f32 %v2679, %v2680
        %v2682 = vrot.slane %v2681, 2
        %v2683 = vadd.f32 %v2681, %v2682
        %v2684 = vrot.slane %v2683, 1
        %v2685 = vadd.f32 %v2683, %v2684
        %v2686 = vmul.f32 %v2685, 0.00390625
        %v2687 = vsub.f32 %v2457, %v2686
        %v2688 = vsub.f32 %v2458, %v2686
        %v2689 = vsub.f32 %v2459, %v2686
        %v2690 = vsub.f32 %v2460, %v2686
        %v2691 = vsub.f32 %v2461, %v2686
        %v2692 = vsub.f32 %v2462, %v2686
        %v2693 = vsub.f32 %v2463, %v2686
        %v2694 = vsub.f32 %v2464, %v2686
        %v2695 = vsub.f32 %v2465, %v2686
        %v2696 = vsub.f32 %v2466, %v2686
        %v2697 = vsub.f32 %v2467, %v2686
        %v2698 = vsub.f32 %v2468, %v2686
        %v2699 = vsub.f32 %v2469, %v2686
        %v2700 = vsub.f32 %v2470, %v2686
        %v2701 = vsub.f32 %v2471, %v2686
        %v2702 = vsub.f32 %v2472, %v2686
        %v2703 = vsub.f32 %v2473, %v2686
        %v2704 = vsub.f32 %v2474, %v2686
        %v2705 = vsub.f32 %v2475, %v2686
        %v2706 = vsub.f32 %v2476, %v2686
        %v2707 = vsub.f32 %v2477, %v2686
        %v2708 = vsub.f32 %v2478, %v2686
        %v2709 = vsub.f32 %v2479, %v2686
        %v2710 = vsub.f32 %v2480, %v2686
        %v2711 = vsub.f32 %v2481, %v2686
        %v2712 = vsub.f32 %v2482, %v2686
        %v2713 = vsub.f32 %v2483, %v2686
        %v2714 = vsub.f32 %v2484, %v2686
        %v2715 = vsub.f32 %v2485, %v2686
        %v2716 = vsub.f32 %v2486, %v2686
        %v2717 = vsub.f32 %v2487, %v2686
        %v2718 = vsub.f32 %v2488, %v2686
        %v2719 = vmul.f32 %v2687, %v2687
        %v2720 = vmul.f32 %v2688, %v2688
        %v2721 = vmul.f32 %v2689, %v2689
        %v2722 = vmul.f32 %v2690, %v2690
        %v2723 = vmul.f32 %v2691, %v2691
        %v2724 = vmul.f32 %v2692, %v2692
        %v2725 = vmul.f32 %v2693, %v2693
        %v2726 = vmul.f32 %v2694, %v2694
        %v2727 = vmul.f32 %v2695, %v2695
        %v2728 = vmul.f32 %v2696, %v2696
        %v2729 = vmul.f32 %v2697, %v2697
        %v2730 = vmul.f32 %v2698, %v2698
        %v2731 = vmul.f32 %v2699, %v2699
        %v2732 = vmul.f32 %v2700, %v2700
        %v2733 = vmul.f32 %v2701, %v2701
        %v2734 = vmul.f32 %v2702, %v2702
        %v2735 = vmul.f32 %v2703, %v2703
        %v2736 = vmul.f32 %v2704, %v2704
        %v2737 = vmul.f32 %v2705, %v2705
        %v2738 = vmul.f32 %v2706, %v2706
        %v2739 = vmul.f32 %v2707, %v2707
        %v2740 = vmul.f32 %v2708, %v2708
        %v2741 = vmul.f32 %v2709, %v2709
        %v2742 = vmul.f32 %v2710, %v2710
        %v2743 = vmul.f32 %v2711, %v2711
        %v2744 = vmul.f32 %v2712, %v2712
        %v2745 = vmul.f32 %v2713, %v2713
        %v2746 = vmul.f32 %v2714, %v2714
        %v2747 = vmul.f32 %v2715, %v2715
        %v2748 = vmul.f32 %v2716, %v2716
        %v2749 = vmul.f32 %v2717, %v2717
        %v2750 = vmul.f32 %v2718, %v2718
        %v2751 = vadd.f32 %v2719, %v2720
        %v2752 = vadd.f32 %v2751, %v2721
        %v2753 = vadd.f32 %v2752, %v2722
        %v2754 = vadd.f32 %v2753, %v2723
        %v2755 = vadd.f32 %v2754, %v2724
        %v2756 = vadd.f32 %v2755, %v2725
        %v2757 = vadd.f32 %v2756, %v2726
        %v2758 = vadd.f32 %v2757, %v2727
        %v2759 = vadd.f32 %v2758, %v2728
        %v2760 = vadd.f32 %v2759, %v2729
        %v2761 = vadd.f32 %v2760, %v2730
        %v2762 = vadd.f32 %v2761, %v2731
        %v2763 = vadd.f32 %v2762, %v2732
        %v2764 = vadd.f32 %v2763, %v2733
        %v2765 = vadd.f32 %v2764, %v2734
        %v2766 = vadd.f32 %v2765, %v2735
        %v2767 = vadd.f32 %v2766, %v2736
        %v2768 = vadd.f32 %v2767, %v2737
        %v2769 = vadd.f32 %v2768, %v2738
        %v2770 = vadd.f32 %v2769, %v2739
        %v2771 = vadd.f32 %v2770, %v2740
        %v2772 = vadd.f32 %v2771, %v2741
        %v2773 = vadd.f32 %v2772, %v2742
        %v2774 = vadd.f32 %v2773, %v2743
        %v2775 = vadd.f32 %v2774, %v2744
        %v2776 = vadd.f32 %v2775, %v2745
        %v2777 = vadd.f32 %v2776, %v2746
        %v2778 = vadd.f32 %v2777, %v2747
        %v2779 = vadd.f32 %v2778, %v2748
        %v2780 = vadd.f32 %v2779, %v2749
        %v2781 = vadd.f32 %v2780, %v2750
        %v2782 = vrot.slane %v2781, 4
        %v2783 = vadd.f32 %v2781, %v2782
        %v2784 = vrot.slane %v2783, 2
        %v2785 = vadd.f32 %v2783, %v2784
        %v2786 = vrot.slane %v2785, 1
        %v2787 = vadd.f32 %v2785, %v2786
        %p2788 = scmp.eq.s32.totalorder %s26, 0
        // Predicated region
        $region37: #{tpu_custom_call.1} parent=27 // pred_check
          %p2789 = pneg %p2788
        $region38: #{tpu_custom_call.1} parent=27 // pred_check_branch
          %2791 = sbr.rel (%p2789) target = $region40
        $region39: #{tpu_custom_call.1} parent=27 // pred_region
          %2792 = vst [vmem:[#allocation8] sm:$0x1] 0.0
          %2793 = vst [vmem:[#allocation10] sm:$0x1] 0.0
          %2794 = vst [vmem:[#allocation11] sm:$0x1] 0.0
        $region40: #{tpu_custom_call.1} parent=27 // pred_fallthru
          _
        %v2795 = vld [vmem:[#allocation8] sm:$0x1]
        %v2796 = vadd.f32 %v2795, %v2685
        %2797 = vst [vmem:[#allocation8] sm:$0x1] %v2796
        %v2798 = vld [vmem:[#allocation10] sm:$0x1]
        %v2799 = vadd.f32 %v2798, %v2787
        %2800 = vst [vmem:[#allocation10] sm:$0x1] %v2799
        %v2801 = vld [vmem:[#allocation11] sm:$0x1]
        %v2802 = vmul.f32 %v2686, %v2686
        %v2803 = vadd.f32 %v2801, %v2802
        %2804 = vst [vmem:[#allocation11] sm:$0x1] %v2803
        %s2805 = sand.u32 %s81, 1
        %s2806 = scalar_lea.sflag [#allocation4], %s2805
        %s2807 = sand.u32 %s81, 1
        %s2808 = smul.addr %s2807, 128
        %s2809 = scalar_lea.vmem [#allocation7], %s2808
        // Predicated region
        $region41: #{tpu_custom_call.1} parent=27 // pred_check
          %p2810 = pneg %p91
        $region42: #{tpu_custom_call.1} parent=27 // pred_check_branch
          %2812 = sbr.rel (%p2810) target = $region44
        $region43: #{tpu_custom_call.1} parent=27 // pred_region
          %s2814 = ssub.s32 2048, 2048
          %2815 = vsyncadd %s2806, %s2814
          %s2816 = smul.addr %s26, 32
          %s2817 = smul.addr %s2816, 64
          %s2818 = scalar_lea.hbm %s2, %s2817
          %s2819 = sshll.u32 %s2809, 4
          %s2820 = int_to_ptr.vmem [resolvable:$true] %s2819
          %2825 = dma.vmem_to_hbm [thread:$0]  %s2820, 2048, %s2818, %s2806, 64, 64, 4
        $region44: #{tpu_custom_call.1} parent=27 // pred_fallthru
          _
        // Predicated region
        $region45: #{tpu_custom_call.1} parent=27 // pred_check
          %p2826 = pneg %p112
        $region46: #{tpu_custom_call.1} parent=27 // pred_check_branch
          %2828 = sbr.rel (%p2826) target = $region48
        $region47: #{tpu_custom_call.1} parent=27 // pred_region
          %s2830 = ssub.s32 16, 16
          %2831 = vsyncadd [#allocation9], %s2830
          %s2833 = sshll.u32 [#allocation8], 4
          %s2834 = int_to_ptr.vmem [resolvable:$true] %s2833
          %2836 = dma.vmem_to_hbm [thread:$0]  %s2834, 16, %s3, [#allocation9]
        $region48: #{tpu_custom_call.1} parent=27 // pred_fallthru
          _
        // Predicated region
        $region49: #{tpu_custom_call.1} parent=27 // pred_check
          %p2837 = pneg %p133
        $region50: #{tpu_custom_call.1} parent=27 // pred_check_branch
          %2839 = sbr.rel (%p2837) target = $region52
        $region51: #{tpu_custom_call.1} parent=27 // pred_region
          %s2841 = ssub.s32 16, 16
          %2842 = vsyncadd [#allocation9], %s2841
          %s2844 = sshll.u32 [#allocation10], 4
          %s2845 = int_to_ptr.vmem [resolvable:$true] %s2844
          %2847 = dma.vmem_to_hbm [thread:$0]  %s2845, 16, %s4, [#allocation9]
        $region52: #{tpu_custom_call.1} parent=27 // pred_fallthru
          _
        // Predicated region
        $region53: #{tpu_custom_call.1} parent=27 // pred_check
          %p2848 = pneg %p154
        $region54: #{tpu_custom_call.1} parent=27 // pred_check_branch
          %2850 = sbr.rel (%p2848) target = $region56
        $region55: #{tpu_custom_call.1} parent=27 // pred_region
          %s2852 = ssub.s32 16, 16
          %2853 = vsyncadd [#allocation12], %s2852
          %s2855 = sshll.u32 [#allocation11], 4
          %s2856 = int_to_ptr.vmem [resolvable:$true] %s2855
          %2858 = dma.vmem_to_hbm [thread:$0]  %s2856, 16, %s5, [#allocation12]
        $region56: #{tpu_custom_call.1} parent=27 // pred_fallthru
          _
        // Predicated region
        $region57: #{tpu_custom_call.1} parent=27 // pred_check
          %p2859 = pneg %p112
        $region58: #{tpu_custom_call.1} parent=27 // pred_check_branch
          %2861 = sbr.rel (%p2859) target = $region60
        $region59: #{tpu_custom_call.1} parent=27 // pred_region
          %2862 = dma.done [#allocation9], 16
        $region60: #{tpu_custom_call.1} parent=27 // pred_fallthru
          _
        // Predicated region
        $region61: #{tpu_custom_call.1} parent=27 // pred_check
          %p2863 = pneg %p133
        $region62: #{tpu_custom_call.1} parent=27 // pred_check_branch
          %2865 = sbr.rel (%p2863) target = $region64
        $region63: #{tpu_custom_call.1} parent=27 // pred_region
          %2866 = dma.done [#allocation9], 16
        $region64: #{tpu_custom_call.1} parent=27 // pred_fallthru
          _
        // Predicated region
        $region65: #{tpu_custom_call.1} parent=27 // pred_check
          %p2867 = pneg %p154
        $region66: #{tpu_custom_call.1} parent=27 // pred_check_branch
          %2869 = sbr.rel (%p2867) target = $region68
        $region67: #{tpu_custom_call.1} parent=27 // pred_region
          %2870 = dma.done [#allocation12], 16
        $region68: #{tpu_custom_call.1} parent=27 // pred_fallthru
          _
      $region28: #{tpu_custom_call.1} parent=5 // pred_fallthru
        _
      %p2871 = scmp.le.s32.totalorder 2, %s21
      // Predicated region
      $region69: #{tpu_custom_call.1} parent=5 // pred_check
        %p2872 = pneg %p2871
      $region70: #{tpu_custom_call.1} parent=5 // pred_check_branch
        %2874 = sbr.rel (%p2872) target = $region72
      $region71: #{tpu_custom_call.1} parent=5 // pred_region
        %s2875 = ssub.s32 %s21, 2
        // Predicated region
        $region73: #{tpu_custom_call.1} parent=71 // pred_check
          %p2876 = pneg %p97
        $region74: #{tpu_custom_call.1} parent=71 // pred_check_branch
          %2878 = sbr.rel (%p2876) target = $region76
        $region75: #{tpu_custom_call.1} parent=71 // pred_region
          %s2879 = sand.u32 %s82, 1
          %s2880 = scalar_lea.sflag [#allocation4], %s2879
          %s2881 = sand.u32 %s82, 1
          %s2882 = smul.addr %s2881, 128
          %s2883 = scalar_lea.vmem [#allocation7], %s2882
          %2884 = dma.done %s2880, 2048
        $region76: #{tpu_custom_call.1} parent=71 // pred_fallthru
          _
      $region72: #{tpu_custom_call.1} parent=5 // pred_fallthru
        _
    $region6: #{tpu_custom_call.1} parent=1 // loop_footer
      %s25 = sadd.s32 1, %s21
    $region7: #{tpu_custom_call.1} parent=1 // loop_footer_branch
      %20 = sbr.rel target = $region3
    $region8: #{tpu_custom_call.1} parent=1 // loop_exit
      _
    %2885 = vsyncpa [#allocation3], 1
    %s2886 = scalar_lea.sflag [#allocation3], 1
    %2887 = vsyncpa %s2886, 1
    %2888 = vsyncpa [#allocation6], 1
    %2889 = vsyncpa [#allocation4], 1
    %s2890 = scalar_lea.sflag [#allocation4], 1
    %2891 = vsyncpa %s2890, 1
    %2892 = vsyncpa [#allocation9], 1
    %2893 = vsyncpa [#allocation12], 1

// kernel: tpu_custom_call.1
$region0: #{tpu_custom_call.1}
  #allocation0 [shape = 'u32[]', space=smem, size = 0x4, offset = 0x4, fixed_abs, tag = 'smem constant byte address 0x4 - core index']
  #allocation1 [shape = 'u32[144,128]{1,0:T(1,128)}', space=vmem, size = 0x12000, scoped, tag = 'internal scratch']
  %s0 = inlined_call_operand.hbm [shape: bf16[2,288,384], index: 0, kind: input, shape index: {}]
  %s1 = inlined_call_operand.hbm [shape: bf16[3,384,128], index: 1, kind: input, shape index: {}]
  %s2 = inlined_call_operand.hbm [shape: bf16[2,256,128], index: 2, kind: output, shape index: {0}]
  %s3 = inlined_call_operand.hbm [shape: f32[1,128], index: 3, kind: output, shape index: {1}]
  %s4 = inlined_call_operand.hbm [shape: f32[1,128], index: 4, kind: output, shape index: {2}]
  %s5 = inlined_call_operand.hbm [shape: f32[1,128], index: 5, kind: output, shape index: {3}]
  %6 = xla_tuple %s2, %s3, %s4, %s5
  %s7 = sld [smem:[#allocation0]]
  $region77: #{tpu_custom_call.1} parent=0
    _
  %s9 = ssub.s32 1, %s7
  %s10 = scalar_select 0, %s9, %s7
  $region1: #{tpu_custom_call.1} parent=0
    #allocation2 [shape = 'u8[442368]{0}', space=vmem, size = 0x6c000, scoped, tag = 'input window, operand 0']
    #allocation3 [shape = 's32[2]{0}', space=sflag, size = 0x8, scoped, tag = 'scoped memory for tpu_custom_call.1']
    #allocation4 [shape = 's32[2]{0}', space=sflag, size = 0x8, scoped, tag = 'scoped memory for tpu_custom_call.1']
    #allocation5 [shape = 'u8[294912]{0}', space=vmem, size = 0x48000, scoped, tag = 'input window, operand 1, single buffered']
    #allocation6 [shape = 's32[1]{0}', space=sflag, size = 0x4, scoped, tag = 'scoped memory for tpu_custom_call.1']
    #allocation7 [shape = 'u8[131072]{0}', space=vmem, size = 0x20000, scoped, tag = 'output window, operand 0']
    #allocation8 [shape = 'u8[512]{0}', space=vmem, size = 0x400, scoped, tag = 'output window, operand 1, single buffered']
    #allocation9 [shape = 's32[1]{0}', space=sflag, size = 0x4, scoped, tag = 'scoped memory for tpu_custom_call.1']
    #allocation10 [shape = 'u8[512]{0}', space=vmem, size = 0x400, scoped, tag = 'output window, operand 2, single buffered']
    #allocation11 [shape = 'u8[512]{0}', space=vmem, size = 0x400, scoped, tag = 'output window, operand 3, single buffered']
    #allocation12 [shape = 's32[1]{0}', space=sflag, size = 0x4, scoped, tag = 'scoped memory for tpu_custom_call.1']
    %11 = vsyncpa [#allocation3], 0
    %s12 = scalar_lea.sflag [#allocation3], 1
    %13 = vsyncpa %s12, 0
    %14 = vsyncpa [#allocation6], 0
    %15 = vsyncpa [#allocation4], 0
    %s16 = scalar_lea.sflag [#allocation4], 1
    %17 = vsyncpa %s16, 0
    %18 = vsyncpa [#allocation9], 0
    %19 = vsyncpa [#allocation12], 0
    loop: start=0, step=1, limit=4
    $region2: #{tpu_custom_call.1} parent=1 // loop_pre_header
      _
    $region3: #{tpu_custom_call.1} parent=1 // loop_header
      %s21 = sphi 0, %s25
      %p22 = scmp.ge.s32.totalorder %s21, 4
      %s31 = sphi 0, %s33
      %s34 = sphi 0, %s31
      %s35 = sphi 0, %s34
      %s51 = sphi 0, %s35
      %s55 = sphi 0, %s55
      %s57 = sphi 0, %s55
      %s58 = sphi 0, %s57
      %s72 = sphi 0, %s58
      %s78 = sphi 0, %s80
      %s81 = sphi 0, %s78
      %s82 = sphi 0, %s81
      %s98 = sphi 0, %s82
      %s102 = sphi 0, %s102
      %s104 = sphi 0, %s102
      %s105 = sphi 0, %s104
      %s119 = sphi 0, %s105
      %s123 = sphi 0, %s123
      %s125 = sphi 0, %s123
      %s126 = sphi 0, %s125
      %s140 = sphi 0, %s126
      %s144 = sphi 0, %s144
      %s146 = sphi 0, %s144
      %s147 = sphi 0, %s146
      %s161 = sphi 0, %s147
    $region4: #{tpu_custom_call.1} parent=1 // loop_header_branch
      %24 = sbr.rel (%p22) target = $region8
    $region5: #{tpu_custom_call.1} parent=1 // loop_body
      %s26 = ssub.s32 %s21, 1
      %s27 = ssub.s32 %s21, 2
      %s28 = sadd.s32 %s21, 1
      %s29 = ssub.s32 %s21, %s28
      %p30 = scmp.eq.s32.totalorder %s29, 0
      %s32 = sadd.s32 %s31, 1
      %s33 = scalar_select %p30, %s31, %s32
      %p36 = pneg %p30
      %p37 = scmp.eq.s32.totalorder %s21, 1
      %p38 = por %p36, %p37
      %p39 = scmp.ne.s32.totalorder %s31, %s34
      %p40 = scmp.eq.s32.totalorder %s21, 0
      %p41 = por %p39, %p40
      %p42 = scmp.ne.s32.totalorder %s31, %s34
      %p43 = scmp.eq.s32.totalorder %s26, 1
      %p44 = por %p42, %p43
      %p45 = scmp.ne.s32.totalorder %s34, %s35
      %p46 = scmp.eq.s32.totalorder %s26, 0
      %p47 = por %p45, %p46
      %p48 = scmp.ne.s32.totalorder %s34, %s35
      %p49 = scmp.eq.s32.totalorder %s27, 1
      %p50 = por %p48, %p49
      %p52 = scmp.ne.s32.totalorder %s35, %s51
      %p53 = scmp.eq.s32.totalorder %s27, 0
      %p54 = por %p52, %p53
      %s56 = sadd.s32 %s55, 1
      %p59 = scmp.eq.s32.totalorder %s21, 1
      %p60 = scmp.ne.s32.totalorder %s55, %s57
      %p61 = scmp.eq.s32.totalorder %s21, 0
      %p62 = por %p60, %p61
      %p63 = scmp.ne.s32.totalorder %s55, %s57
      %p64 = scmp.eq.s32.totalorder %s26, 1
      %p65 = por %p63, %p64
      %p66 = scmp.ne.s32.totalorder %s57, %s58
      %p67 = scmp.eq.s32.totalorder %s26, 0
      %p68 = por %p66, %p67
      %p69 = scmp.ne.s32.totalorder %s57, %s58
      %p70 = scmp.eq.s32.totalorder %s27, 1
      %p71 = por %p69, %p70
      %p73 = scmp.ne.s32.totalorder %s58, %s72
      %p74 = scmp.eq.s32.totalorder %s27, 0
      %p75 = por %p73, %p74
      %s76 = ssub.s32 %s21, %s28
      %p77 = scmp.eq.s32.totalorder %s76, 0
      %s79 = sadd.s32 %s78, 1
      %s80 = scalar_select %p77, %s78, %s79
      %p83 = pneg %p77
      %p84 = scmp.eq.s32.totalorder %s21, 1
      %p85 = por %p83, %p84
      %p86 = scmp.ne.s32.totalorder %s78, %s81
      %p87 = scmp.eq.s32.totalorder %s21, 0
      %p88 = por %p86, %p87
      %p89 = scmp.ne.s32.totalorder %s78, %s81
      %p90 = scmp.eq.s32.totalorder %s26, 1
      %p91 = por %p89, %p90
      %p92 = scmp.ne.s32.totalorder %s81, %s82
      %p93 = scmp.eq.s32.totalorder %s26, 0
      %p94 = por %p92, %p93
      %p95 = scmp.ne.s32.totalorder %s81, %s82
      %p96 = scmp.eq.s32.totalorder %s27, 1
      %p97 = por %p95, %p96
      %p99 = scmp.ne.s32.totalorder %s82, %s98
      %p100 = scmp.eq.s32.totalorder %s27, 0
      %p101 = por %p99, %p100
      %s103 = sadd.s32 %s102, 1
      %p106 = scmp.eq.s32.totalorder %s21, 1
      %p107 = scmp.ne.s32.totalorder %s102, %s104
      %p108 = scmp.eq.s32.totalorder %s21, 0
      %p109 = por %p107, %p108
      %p110 = scmp.ne.s32.totalorder %s102, %s104
      %p111 = scmp.eq.s32.totalorder %s26, 1
      %p112 = por %p110, %p111
      %p113 = scmp.ne.s32.totalorder %s104, %s105
      %p114 = scmp.eq.s32.totalorder %s26, 0
      %p115 = por %p113, %p114
      %p116 = scmp.ne.s32.totalorder %s104, %s105
      %p117 = scmp.eq.s32.totalorder %s27, 1
      %p118 = por %p116, %p117
      %p120 = scmp.ne.s32.totalorder %s105, %s119
      %p121 = scmp.eq.s32.totalorder %s27, 0
      %p122 = por %p120, %p121
      %s124 = sadd.s32 %s123, 1
      %p127 = scmp.eq.s32.totalorder %s21, 1
      %p128 = scmp.ne.s32.totalorder %s123, %s125
      %p129 = scmp.eq.s32.totalorder %s21, 0
      %p130 = por %p128, %p129
      %p131 = scmp.ne.s32.totalorder %s123, %s125
      %p132 = scmp.eq.s32.totalorder %s26, 1
      %p133 = por %p131, %p132
      %p134 = scmp.ne.s32.totalorder %s125, %s126
      %p135 = scmp.eq.s32.totalorder %s26, 0
      %p136 = por %p134, %p135
      %p137 = scmp.ne.s32.totalorder %s125, %s126
      %p138 = scmp.eq.s32.totalorder %s27, 1
      %p139 = por %p137, %p138
      %p141 = scmp.ne.s32.totalorder %s126, %s140
      %p142 = scmp.eq.s32.totalorder %s27, 0
      %p143 = por %p141, %p142
      %s145 = sadd.s32 %s144, 1
      %p148 = scmp.eq.s32.totalorder %s21, 1
      %p149 = scmp.ne.s32.totalorder %s144, %s146
      %p150 = scmp.eq.s32.totalorder %s21, 0
      %p151 = por %p149, %p150
      %p152 = scmp.ne.s32.totalorder %s144, %s146
      %p153 = scmp.eq.s32.totalorder %s26, 1
      %p154 = por %p152, %p153
      %p155 = scmp.ne.s32.totalorder %s146, %s147
      %p156 = scmp.eq.s32.totalorder %s26, 0
      %p157 = por %p155, %p156
      %p158 = scmp.ne.s32.totalorder %s146, %s147
      %p159 = scmp.eq.s32.totalorder %s27, 1
      %p160 = por %p158, %p159
      %p162 = scmp.ne.s32.totalorder %s147, %s161
      %p163 = scmp.eq.s32.totalorder %s27, 0
      %p164 = por %p162, %p163
      %p165 = scmp.le.s32.totalorder 1, %s21
      %p166 = scmp.lt.s32.totalorder %s21, 3
      %p167 = pnand %p165, %p166
      %p168 = pneg %p167
      // Predicated region
      $region9: #{tpu_custom_call.1} parent=5 // pred_check
        _
      $region10: #{tpu_custom_call.1} parent=5 // pred_check_branch
        %170 = sbr.rel (%p167) target = $region12
      $region11: #{tpu_custom_call.1} parent=5 // pred_region
        %s171 = ssub.s32 %s21, 1
        // Predicated region
        $region13: #{tpu_custom_call.1} parent=11 // pred_check
          %p172 = pneg %p68
        $region14: #{tpu_custom_call.1} parent=11 // pred_check_branch
          %174 = sbr.rel (%p172) target = $region16
        $region15: #{tpu_custom_call.1} parent=11 // pred_region
          %s176 = ssub.s32 9216, 9216
          %177 = vsyncadd [#allocation6], %s176
          %s178 = sshll.u32 [#allocation5], 4
          %s179 = int_to_ptr.vmem [resolvable:$true] %s178
          %184 = dma.hbm_to_vmem [thread:$0]  %s1, 9216, %s179, [#allocation6], 64, 64, 4
        $region16: #{tpu_custom_call.1} parent=11 // pred_fallthru
          _
      $region12: #{tpu_custom_call.1} parent=5 // pred_fallthru
        _
      %p185 = scmp.lt.s32.totalorder %s21, 2
      // Predicated region
      $region17: #{tpu_custom_call.1} parent=5 // pred_check
        %p186 = pneg %p185
      $region18: #{tpu_custom_call.1} parent=5 // pred_check_branch
        %188 = sbr.rel (%p186) target = $region20
      $region19: #{tpu_custom_call.1} parent=5 // pred_region
        // Predicated region
        $region21: #{tpu_custom_call.1} parent=19 // pred_check
          %p189 = pneg %p41
        $region22: #{tpu_custom_call.1} parent=19 // pred_check_branch
          %191 = sbr.rel (%p189) target = $region24
        $region23: #{tpu_custom_call.1} parent=19 // pred_region
          %s192 = sand.u32 %s31, 1
          %s193 = scalar_lea.sflag [#allocation3], %s192
          %s194 = sand.u32 %s31, 1
          %s195 = smul.addr %s194, 432
          %s196 = scalar_lea.vmem [#allocation2], %s195
          %s198 = ssub.s32 6912, 6912
          %199 = vsyncadd %s193, %s198
          %s200 = smul.addr %s21, 108
          %s201 = smul.addr %s200, 64
          %s202 = scalar_lea.hbm %s0, %s201
          %s203 = sshll.u32 %s196, 4
          %s204 = int_to_ptr.vmem [resolvable:$true] %s203
          %209 = dma.hbm_to_vmem [thread:$0]  %s202, 6912, %s204, %s193, 192, 192, 12
        $region24: #{tpu_custom_call.1} parent=19 // pred_fallthru
          _
      $region20: #{tpu_custom_call.1} parent=5 // pred_fallthru
        _
      %p210 = scmp.le.s32.totalorder 1, %s21
      %p211 = scmp.lt.s32.totalorder %s21, 3
      %p212 = pnand %p210, %p211
      %p213 = pneg %p212
      // Predicated region
      $region25: #{tpu_custom_call.1} parent=5 // pred_check
        _
      $region26: #{tpu_custom_call.1} parent=5 // pred_check_branch
        %215 = sbr.rel (%p212) target = $region28
      $region27: #{tpu_custom_call.1} parent=5 // pred_region
        %s216 = ssub.s32 %s21, 1
        %s217 = sand.u32 %s34, 1
        %s218 = scalar_lea.sflag [#allocation3], %s217
        %s219 = sand.u32 %s34, 1
        %s220 = smul.addr %s219, 432
        %s221 = scalar_lea.vmem [#allocation2], %s220
        // Predicated region
        $region29: #{tpu_custom_call.1} parent=27 // pred_check
          %p222 = pneg %p47
        $region30: #{tpu_custom_call.1} parent=27 // pred_check_branch
          %224 = sbr.rel (%p222) target = $region32
        $region31: #{tpu_custom_call.1} parent=27 // pred_region
          %225 = dma.done %s218, 6912
        $region32: #{tpu_custom_call.1} parent=27 // pred_fallthru
          _
        // Predicated region
        $region33: #{tpu_custom_call.1} parent=27 // pred_check
          %p226 = pneg %p68
        $region34: #{tpu_custom_call.1} parent=27 // pred_check_branch
          %228 = sbr.rel (%p226) target = $region36
        $region35: #{tpu_custom_call.1} parent=27 // pred_region
          %229 = dma.done [#allocation6], 9216
        $region36: #{tpu_custom_call.1} parent=27 // pred_fallthru
          _
        %s230 = sand.u32 %s34, 1
        %s231 = scalar_lea.sflag [#allocation3], %s230
        %s232 = sand.u32 %s34, 1
        %s233 = smul.addr %s232, 432
        %s234 = scalar_lea.vmem [#allocation2], %s233
        %p235 = pneg %p47
        %p236 = pneg %p44
        %p237 = pneg %p68
        %p238 = pneg %p65
        %p239 = pneg %p94
        %p240 = pneg %p91
        %s241 = sand.u32 %s81, 1
        %s242 = scalar_lea.sflag [#allocation4], %s241
        %s243 = sand.u32 %s81, 1
        %s244 = smul.addr %s243, 128
        %s245 = scalar_lea.vmem [#allocation7], %s244
        %p246 = pneg %p115
        %p247 = pneg %p112
        %p248 = pneg %p136
        %p249 = pneg %p133
        %p250 = pneg %p157
        %p251 = pneg %p154
        %v253 = vld [vmem:[%s221] sm:$0xff]
        %v254 = vld [vmem:[%s221 + $0x8] sm:$0xf]
        %v255 = vld [vmem:[%s221 + $0xc] sm:$0xff]
        %v256 = vld [vmem:[%s221 + $0x14] sm:$0xf]
        %v257 = vld [vmem:[%s221 + $0x18] sm:$0xff]
        %v258 = vld [vmem:[%s221 + $0x20] sm:$0xf]
        %v259 = vld [vmem:[%s221 + $0x24] sm:$0xff]
        %v260 = vld [vmem:[%s221 + $0x2c] sm:$0xf]
        %v261 = vld [vmem:[%s221 + $0x30] sm:$0xff]
        %v262 = vld [vmem:[%s221 + $0x38] sm:$0xf]
        %v263 = vld [vmem:[%s221 + $0x3c] sm:$0xff]
        %v264 = vld [vmem:[%s221 + $0x44] sm:$0xf]
        %v265 = vld [vmem:[%s221 + $0x48] sm:$0xff]
        %v266 = vld [vmem:[%s221 + $0x50] sm:$0xf]
        %v267 = vld [vmem:[%s221 + $0x54] sm:$0xff]
        %v268 = vld [vmem:[%s221 + $0x5c] sm:$0xf]
        %v269 = vld [vmem:[%s221 + $0x60] sm:$0xff]
        %v270 = vld [vmem:[%s221 + $0x68] sm:$0xf]
        %v271 = vld [vmem:[%s221 + $0x6c] sm:$0xff]
        %v272 = vld [vmem:[%s221 + $0x74] sm:$0xf]
        %v273 = vld [vmem:[%s221 + $0x78] sm:$0xff]
        %v274 = vld [vmem:[%s221 + $0x80] sm:$0xf]
        %v275 = vld [vmem:[%s221 + $0x84] sm:$0xff]
        %v276 = vld [vmem:[%s221 + $0x8c] sm:$0xf]
        %v277 = vld [vmem:[%s221 + $0x90] sm:$0xff]
        %v278 = vld [vmem:[%s221 + $0x98] sm:$0xf]
        %v279 = vld [vmem:[%s221 + $0x9c] sm:$0xff]
        %v280 = vld [vmem:[%s221 + $0xa4] sm:$0xf]
        %v281 = vld [vmem:[%s221 + $0xa8] sm:$0xff]
        %v282 = vld [vmem:[%s221 + $0xb0] sm:$0xf]
        %v283 = vld [vmem:[%s221 + $0xb4] sm:$0xff]
        %v284 = vld [vmem:[%s221 + $0xbc] sm:$0xf]
        %v285 = vld [vmem:[%s221 + $0xc0] sm:$0xff]
        %v286 = vld [vmem:[%s221 + $0xc8] sm:$0xf]
        %v287 = vld [vmem:[%s221 + $0xcc] sm:$0xff]
        %v288 = vld [vmem:[%s221 + $0xd4] sm:$0xf]
        %v289 = vld [vmem:[%s221 + $0xd8] sm:$0xff]
        %v290 = vld [vmem:[%s221 + $0xe0] sm:$0xf]
        %v291 = vld [vmem:[%s221 + $0xe4] sm:$0xff]
        %v292 = vld [vmem:[%s221 + $0xec] sm:$0xf]
        %v293 = vld [vmem:[%s221 + $0xf0] sm:$0xff]
        %v294 = vld [vmem:[%s221 + $0xf8] sm:$0xf]
        %v295 = vld [vmem:[%s221 + $0xfc] sm:$0xff]
        %v296 = vld [vmem:[%s221 + $0x104] sm:$0xf]
        %v297 = vld [vmem:[%s221 + $0x108] sm:$0xff]
        %v298 = vld [vmem:[%s221 + $0x110] sm:$0xf]
        %v299 = vld [vmem:[%s221 + $0x114] sm:$0xff]
        %v300 = vld [vmem:[%s221 + $0x11c] sm:$0xf]
        %v301 = vld [vmem:[%s221 + $0x120] sm:$0xff]
        %v302 = vld [vmem:[%s221 + $0x128] sm:$0xf]
        %v303 = vld [vmem:[%s221 + $0x12c] sm:$0xff]
        %v304 = vld [vmem:[%s221 + $0x134] sm:$0xf]
        %v305 = vld [vmem:[%s221 + $0x138] sm:$0xff]
        %v306 = vld [vmem:[%s221 + $0x140] sm:$0xf]
        %v307 = vld [vmem:[%s221 + $0x144] sm:$0xff]
        %v308 = vld [vmem:[%s221 + $0x14c] sm:$0xf]
        %v309 = vld [vmem:[%s221 + $0x150] sm:$0xff]
        %v310 = vld [vmem:[%s221 + $0x158] sm:$0xf]
        %v311 = vld [vmem:[%s221 + $0x15c] sm:$0xff]
        %v312 = vld [vmem:[%s221 + $0x164] sm:$0xf]
        %v313 = vld [vmem:[%s221 + $0x168] sm:$0xff]
        %v314 = vld [vmem:[%s221 + $0x170] sm:$0xf]
        %v315 = vld [vmem:[%s221 + $0x174] sm:$0xff]
        %v316 = vld [vmem:[%s221 + $0x17c] sm:$0xf]
        %v317 = vld [vmem:[#allocation5] sm:$0xf]
        %v318 = vld [vmem:[#allocation5 + $0x4] sm:$0xf]
        %v319 = vld [vmem:[#allocation5 + $0x8] sm:$0xf]
        %v320 = vld [vmem:[#allocation5 + $0xc] sm:$0xf]
        %v321 = vld [vmem:[#allocation5 + $0x10] sm:$0xf]
        %v322 = vld [vmem:[#allocation5 + $0x14] sm:$0xf]
        %v323 = vld [vmem:[#allocation5 + $0x18] sm:$0xf]
        %v324 = vld [vmem:[#allocation5 + $0x1c] sm:$0xf]
        %v325 = vld [vmem:[#allocation5 + $0x20] sm:$0xf]
        %v326 = vld [vmem:[#allocation5 + $0x24] sm:$0xf]
        %v327 = vld [vmem:[#allocation5 + $0x28] sm:$0xf]
        %v328 = vld [vmem:[#allocation5 + $0x2c] sm:$0xf]
        %v329 = vld [vmem:[#allocation5 + $0x30] sm:$0xf]
        %v330 = vld [vmem:[#allocation5 + $0x34] sm:$0xf]
        %v331 = vld [vmem:[#allocation5 + $0x38] sm:$0xf]
        %v332 = vld [vmem:[#allocation5 + $0x3c] sm:$0xf]
        %v333 = vld [vmem:[#allocation5 + $0x40] sm:$0xf]
        %v334 = vld [vmem:[#allocation5 + $0x44] sm:$0xf]
        %v335 = vld [vmem:[#allocation5 + $0x48] sm:$0xf]
        %v336 = vld [vmem:[#allocation5 + $0x4c] sm:$0xf]
        %v337 = vld [vmem:[#allocation5 + $0x50] sm:$0xf]
        %v338 = vld [vmem:[#allocation5 + $0x54] sm:$0xf]
        %v339 = vld [vmem:[#allocation5 + $0x58] sm:$0xf]
        %v340 = vld [vmem:[#allocation5 + $0x5c] sm:$0xf]
        %v341 = vld [vmem:[#allocation5 + $0x60] sm:$0xf]
        %v342 = vld [vmem:[#allocation5 + $0x64] sm:$0xf]
        %v343 = vld [vmem:[#allocation5 + $0x68] sm:$0xf]
        %v344 = vld [vmem:[#allocation5 + $0x6c] sm:$0xf]
        %v345 = vld [vmem:[#allocation5 + $0x70] sm:$0xf]
        %v346 = vld [vmem:[#allocation5 + $0x74] sm:$0xf]
        %v347 = vld [vmem:[#allocation5 + $0x78] sm:$0xf]
        %v348 = vld [vmem:[#allocation5 + $0x7c] sm:$0xf]
        %v349 = vld [vmem:[#allocation5 + $0x80] sm:$0xf]
        %v350 = vld [vmem:[#allocation5 + $0x84] sm:$0xf]
        %v351 = vld [vmem:[#allocation5 + $0x88] sm:$0xf]
        %v352 = vld [vmem:[#allocation5 + $0x8c] sm:$0xf]
        %v353 = vld [vmem:[#allocation5 + $0x90] sm:$0xf]
        %v354 = vld [vmem:[#allocation5 + $0x94] sm:$0xf]
        %v355 = vld [vmem:[#allocation5 + $0x98] sm:$0xf]
        %v356 = vld [vmem:[#allocation5 + $0x9c] sm:$0xf]
        %v357 = vld [vmem:[#allocation5 + $0xa0] sm:$0xf]
        %v358 = vld [vmem:[#allocation5 + $0xa4] sm:$0xf]
        %v359 = vld [vmem:[#allocation5 + $0xa8] sm:$0xf]
        %v360 = vld [vmem:[#allocation5 + $0xac] sm:$0xf]
        %v361 = vld [vmem:[#allocation5 + $0xb0] sm:$0xf]
        %v362 = vld [vmem:[#allocation5 + $0xb4] sm:$0xf]
        %v363 = vld [vmem:[#allocation5 + $0xb8] sm:$0xf]
        %v364 = vld [vmem:[#allocation5 + $0xbc] sm:$0xf]
        %v365 = vld [vmem:[%s221 + $0x180] sm:$0xff]
        %v366 = vld [vmem:[%s221 + $0x188] sm:$0xf]
        %v367 = vld [vmem:[%s221 + $0x18c] sm:$0xff]
        %v368 = vld [vmem:[%s221 + $0x194] sm:$0xf]
        %s369 = scalar_lea.vmem [#allocation5], 192
        %v370 = vld [vmem:[%s369] sm:$0xf]
        %v371 = vld [vmem:[%s369 + $0x4] sm:$0xf]
        %v372 = vld [vmem:[%s369 + $0x8] sm:$0xf]
        %v373 = vld [vmem:[%s369 + $0xc] sm:$0xf]
        %v374 = vld [vmem:[%s369 + $0x10] sm:$0xf]
        %v375 = vld [vmem:[%s369 + $0x14] sm:$0xf]
        %v376 = vld [vmem:[%s369 + $0x18] sm:$0xf]
        %v377 = vld [vmem:[%s369 + $0x1c] sm:$0xf]
        %v378 = vld [vmem:[%s369 + $0x20] sm:$0xf]
        %v379 = vld [vmem:[%s369 + $0x24] sm:$0xf]
        %v380 = vld [vmem:[%s369 + $0x28] sm:$0xf]
        %v381 = vld [vmem:[%s369 + $0x2c] sm:$0xf]
        %v382 = vld [vmem:[%s369 + $0x30] sm:$0xf]
        %v383 = vld [vmem:[%s369 + $0x34] sm:$0xf]
        %v384 = vld [vmem:[%s369 + $0x38] sm:$0xf]
        %v385 = vld [vmem:[%s369 + $0x3c] sm:$0xf]
        %v386 = vld [vmem:[%s369 + $0x40] sm:$0xf]
        %v387 = vld [vmem:[%s369 + $0x44] sm:$0xf]
        %v388 = vld [vmem:[%s369 + $0x48] sm:$0xf]
        %v389 = vld [vmem:[%s369 + $0x4c] sm:$0xf]
        %v390 = vld [vmem:[%s369 + $0x50] sm:$0xf]
        %v391 = vld [vmem:[%s369 + $0x54] sm:$0xf]
        %v392 = vld [vmem:[%s369 + $0x58] sm:$0xf]
        %v393 = vld [vmem:[%s369 + $0x5c] sm:$0xf]
        %v394 = vld [vmem:[%s369 + $0x60] sm:$0xf]
        %v395 = vld [vmem:[%s369 + $0x64] sm:$0xf]
        %v396 = vld [vmem:[%s369 + $0x68] sm:$0xf]
        %v397 = vld [vmem:[%s369 + $0x6c] sm:$0xf]
        %v398 = vld [vmem:[%s369 + $0x70] sm:$0xf]
        %v399 = vld [vmem:[%s369 + $0x74] sm:$0xf]
        %v400 = vld [vmem:[%s369 + $0x78] sm:$0xf]
        %v401 = vld [vmem:[%s369 + $0x7c] sm:$0xf]
        %v402 = vld [vmem:[%s369 + $0x80] sm:$0xf]
        %v403 = vld [vmem:[%s369 + $0x84] sm:$0xf]
        %v404 = vld [vmem:[%s369 + $0x88] sm:$0xf]
        %v405 = vld [vmem:[%s369 + $0x8c] sm:$0xf]
        %v406 = vld [vmem:[%s369 + $0x90] sm:$0xf]
        %v407 = vld [vmem:[%s369 + $0x94] sm:$0xf]
        %v408 = vld [vmem:[%s369 + $0x98] sm:$0xf]
        %v409 = vld [vmem:[%s369 + $0x9c] sm:$0xf]
        %v410 = vld [vmem:[%s369 + $0xa0] sm:$0xf]
        %v411 = vld [vmem:[%s369 + $0xa4] sm:$0xf]
        %v412 = vld [vmem:[%s369 + $0xa8] sm:$0xf]
        %v413 = vld [vmem:[%s369 + $0xac] sm:$0xf]
        %v414 = vld [vmem:[%s369 + $0xb0] sm:$0xf]
        %v415 = vld [vmem:[%s369 + $0xb4] sm:$0xf]
        %v416 = vld [vmem:[%s369 + $0xb8] sm:$0xf]
        %v417 = vld [vmem:[%s369 + $0xbc] sm:$0xf]
        %v482 = vunpack.c.l.b16 %v257
        %v483 = vunpack.c.h.b16 %v257
        %v484 = vunpack.c.l.b16 %v258
        %v485 = vunpack.c.l.b16 %v259
        %v486 = vunpack.c.h.b16 %v259
        %v487 = vunpack.c.l.b16 %v260
        %v488 = vunpack.c.l.b16 %v261
        %v489 = vunpack.c.h.b16 %v261
        %v490 = vunpack.c.l.b16 %v262
        %v491 = vunpack.c.l.b16 %v263
        %v492 = vunpack.c.h.b16 %v263
        %v493 = vunpack.c.l.b16 %v264
        %v494 = vunpack.c.l.b16 %v265
        %v495 = vunpack.c.h.b16 %v265
        %v496 = vunpack.c.l.b16 %v266
        %v497 = vunpack.c.l.b16 %v267
        %v498 = vunpack.c.h.b16 %v267
        %v499 = vunpack.c.l.b16 %v268
        %v500 = vunpack.c.l.b16 %v269
        %v501 = vunpack.c.h.b16 %v269
        %v502 = vunpack.c.l.b16 %v270
        %v503 = vunpack.c.l.b16 %v271
        %v504 = vunpack.c.h.b16 %v271
        %v505 = vunpack.c.l.b16 %v272
        %v506 = vunpack.c.l.b16 %v273
        %v507 = vunpack.c.h.b16 %v273
        %v508 = vunpack.c.l.b16 %v274
        %v509 = vunpack.c.l.b16 %v275
        %v510 = vunpack.c.h.b16 %v275
        %v511 = vunpack.c.l.b16 %v276
        %v512 = vunpack.c.l.b16 %v277
        %v513 = vunpack.c.h.b16 %v277
        %v514 = vunpack.c.l.b16 %v278
        %v515 = vunpack.c.l.b16 %v279
        %v516 = vunpack.c.h.b16 %v279
        %v517 = vunpack.c.l.b16 %v280
        %v518 = vunpack.c.l.b16 %v281
        %v519 = vunpack.c.h.b16 %v281
        %v520 = vunpack.c.l.b16 %v282
        %v521 = vunpack.c.l.b16 %v283
        %v522 = vunpack.c.h.b16 %v283
        %v523 = vunpack.c.l.b16 %v284
        %v524 = vunpack.c.l.b16 %v285
        %v525 = vunpack.c.h.b16 %v285
        %v526 = vunpack.c.l.b16 %v286
        %v527 = vunpack.c.l.b16 %v287
        %v528 = vunpack.c.h.b16 %v287
        %v529 = vunpack.c.l.b16 %v288
        %v530 = vunpack.c.l.b16 %v289
        %v531 = vunpack.c.h.b16 %v289
        %v532 = vunpack.c.l.b16 %v290
        %v533 = vunpack.c.l.b16 %v291
        %v534 = vunpack.c.h.b16 %v291
        %v535 = vunpack.c.l.b16 %v292
        %v536 = vunpack.c.l.b16 %v293
        %v537 = vunpack.c.h.b16 %v293
        %v538 = vunpack.c.l.b16 %v294
        %v539 = vunpack.c.l.b16 %v295
        %v540 = vunpack.c.h.b16 %v295
        %v541 = vunpack.c.l.b16 %v296
        %v542 = vunpack.c.l.b16 %v297
        %v543 = vunpack.c.h.b16 %v297
        %v544 = vunpack.c.l.b16 %v298
        %v545 = vunpack.c.l.b16 %v299
        %v546 = vunpack.c.h.b16 %v299
        %v547 = vunpack.c.l.b16 %v300
        %v548 = vunpack.c.l.b16 %v301
        %v549 = vunpack.c.h.b16 %v301
        %v550 = vunpack.c.l.b16 %v302
        %v551 = vunpack.c.l.b16 %v303
        %v552 = vunpack.c.h.b16 %v303
        %v553 = vunpack.c.l.b16 %v304
        %v554 = vunpack.c.l.b16 %v305
        %v555 = vunpack.c.h.b16 %v305
        %v556 = vunpack.c.l.b16 %v306
        %v557 = vunpack.c.l.b16 %v307
        %v558 = vunpack.c.h.b16 %v307
        %v559 = vunpack.c.l.b16 %v308
        %v560 = vunpack.c.l.b16 %v309
        %v561 = vunpack.c.h.b16 %v309
        %v562 = vunpack.c.l.b16 %v310
        %v563 = vunpack.c.l.b16 %v311
        %v564 = vunpack.c.h.b16 %v311
        %v565 = vunpack.c.l.b16 %v312
        %v566 = vunpack.c.l.b16 %v313
        %v567 = vunpack.c.h.b16 %v313
        %v568 = vunpack.c.l.b16 %v314
        %v569 = vunpack.c.l.b16 %v315
        %v570 = vunpack.c.h.b16 %v315
        %v571 = vunpack.c.l.b16 %v316
        %v572 = vunpack.c.l.b16 %v365
        %v573 = vunpack.c.h.b16 %v365
        %v574 = vunpack.c.l.b16 %v366
        %v575 = vunpack.c.l.b16 %v367
        %v576 = vunpack.c.h.b16 %v367
        %v577 = vunpack.c.l.b16 %v368
        %v578 = vpack.c.b16 %v485, %v482
        %v579 = vpack.c.b16 %v486, %v483
        %v580 = vpack.c.b16 %v487, %v484
        %v581 = vpack.c.b16 %v491, %v488
        %v582 = vpack.c.b16 %v492, %v489
        %v583 = vpack.c.b16 %v493, %v490
        %v584 = vpack.c.b16 %v497, %v494
        %v585 = vpack.c.b16 %v498, %v495
        %v586 = vpack.c.b16 %v499, %v496
        %v587 = vpack.c.b16 %v503, %v500
        %v588 = vpack.c.b16 %v504, %v501
        %v589 = vpack.c.b16 %v505, %v502
        %v590 = vpack.c.b16 %v509, %v506
        %v591 = vpack.c.b16 %v510, %v507
        %v592 = vpack.c.b16 %v511, %v508
        %v593 = vpack.c.b16 %v515, %v512
        %v594 = vpack.c.b16 %v516, %v513
        %v595 = vpack.c.b16 %v517, %v514
        %v596 = vpack.c.b16 %v521, %v518
        %v597 = vpack.c.b16 %v522, %v519
        %v598 = vpack.c.b16 %v523, %v520
        %v599 = vpack.c.b16 %v527, %v524
        %v600 = vpack.c.b16 %v528, %v525
        %v601 = vpack.c.b16 %v529, %v526
        %v602 = vpack.c.b16 %v533, %v530
        %v603 = vpack.c.b16 %v534, %v531
        %v604 = vpack.c.b16 %v535, %v532
        %v605 = vpack.c.b16 %v539, %v536
        %v606 = vpack.c.b16 %v540, %v537
        %v607 = vpack.c.b16 %v541, %v538
        %v608 = vpack.c.b16 %v545, %v542
        %v609 = vpack.c.b16 %v546, %v543
        %v610 = vpack.c.b16 %v547, %v544
        %v611 = vpack.c.b16 %v551, %v548
        %v612 = vpack.c.b16 %v552, %v549
        %v613 = vpack.c.b16 %v553, %v550
        %v614 = vpack.c.b16 %v557, %v554
        %v615 = vpack.c.b16 %v558, %v555
        %v616 = vpack.c.b16 %v559, %v556
        %v617 = vpack.c.b16 %v563, %v560
        %v618 = vpack.c.b16 %v564, %v561
        %v619 = vpack.c.b16 %v565, %v562
        %v620 = vpack.c.b16 %v569, %v566
        %v621 = vpack.c.b16 %v570, %v567
        %v622 = vpack.c.b16 %v571, %v568
        %v623 = vpack.c.b16 %v575, %v572
        %v624 = vpack.c.b16 %v576, %v573
        %v625 = vpack.c.b16 %v577, %v574
        %v722 = vunpack.c.l.b16 %v370
        %v723 = vunpack.c.l.b16 %v371
        %v724 = vunpack.c.l.b16 %v372
        %v725 = vunpack.c.l.b16 %v373
        %v726 = vunpack.c.l.b16 %v374
        %v727 = vunpack.c.l.b16 %v375
        %v728 = vunpack.c.l.b16 %v376
        %v729 = vunpack.c.l.b16 %v377
        %v730 = vunpack.c.l.b16 %v378
        %v731 = vunpack.c.l.b16 %v379
        %v732 = vunpack.c.l.b16 %v380
        %v733 = vunpack.c.l.b16 %v381
        %v734 = vunpack.c.l.b16 %v382
        %v735 = vunpack.c.l.b16 %v383
        %v736 = vunpack.c.l.b16 %v384
        %v737 = vunpack.c.l.b16 %v385
        %v738 = vunpack.c.l.b16 %v386
        %v739 = vunpack.c.l.b16 %v387
        %v740 = vunpack.c.l.b16 %v388
        %v741 = vunpack.c.l.b16 %v389
        %v742 = vunpack.c.l.b16 %v390
        %v743 = vunpack.c.l.b16 %v391
        %v744 = vunpack.c.l.b16 %v392
        %v745 = vunpack.c.l.b16 %v393
        %v746 = vunpack.c.l.b16 %v394
        %v747 = vunpack.c.l.b16 %v395
        %v748 = vunpack.c.l.b16 %v396
        %v749 = vunpack.c.l.b16 %v397
        %v750 = vunpack.c.l.b16 %v398
        %v751 = vunpack.c.l.b16 %v399
        %v752 = vunpack.c.l.b16 %v400
        %v753 = vunpack.c.l.b16 %v401
        %v754 = vunpack.c.l.b16 %v402
        %v755 = vunpack.c.l.b16 %v403
        %v756 = vunpack.c.l.b16 %v404
        %v757 = vunpack.c.l.b16 %v405
        %v758 = vunpack.c.l.b16 %v406
        %v759 = vunpack.c.l.b16 %v407
        %v760 = vunpack.c.l.b16 %v408
        %v761 = vunpack.c.l.b16 %v409
        %v762 = vunpack.c.l.b16 %v410
        %v763 = vunpack.c.l.b16 %v411
        %v764 = vunpack.c.l.b16 %v412
        %v765 = vunpack.c.l.b16 %v413
        %v766 = vunpack.c.l.b16 %v414
        %v767 = vunpack.c.l.b16 %v415
        %v768 = vunpack.c.l.b16 %v416
        %v769 = vunpack.c.l.b16 %v417
        %v770 = vpack.c.b16 %v723, %v722
        %v771 = vpack.c.b16 %v725, %v724
        %v772 = vpack.c.b16 %v727, %v726
        %v773 = vpack.c.b16 %v729, %v728
        %v774 = vpack.c.b16 %v731, %v730
        %v775 = vpack.c.b16 %v733, %v732
        %v776 = vpack.c.b16 %v735, %v734
        %v777 = vpack.c.b16 %v737, %v736
        %v778 = vpack.c.b16 %v739, %v738
        %v779 = vpack.c.b16 %v741, %v740
        %v780 = vpack.c.b16 %v743, %v742
        %v781 = vpack.c.b16 %v745, %v744
        %v782 = vpack.c.b16 %v747, %v746
        %v783 = vpack.c.b16 %v749, %v748
        %v784 = vpack.c.b16 %v751, %v750
        %v785 = vpack.c.b16 %v753, %v752
        %v786 = vpack.c.b16 %v755, %v754
        %v787 = vpack.c.b16 %v757, %v756
        %v788 = vpack.c.b16 %v759, %v758
        %v789 = vpack.c.b16 %v761, %v760
        %v790 = vpack.c.b16 %v763, %v762
        %v791 = vpack.c.b16 %v765, %v764
        %v792 = vpack.c.b16 %v767, %v766
        %v793 = vpack.c.b16 %v769, %v768
        %818 = vmatprep.subr.bf16.mxu0 0
        %819 = vmatpush1.bf16.msra.mxu0 %v777
        %820 = vmatprep.subr.bf16.mxu0 0
        %821 = vmatpush1.bf16.msra.mxu0 %v776
        %822 = vmatprep.subr.bf16.mxu0 0
        %823 = vmatpush1.bf16.msra.mxu0 %v775
        %824 = vmatprep.subr.bf16.mxu0 0
        %825 = vmatpush1.bf16.msra.mxu0 %v774
        %826 = vmatprep.subr.bf16.mxu0 0
        %827 = vmatpush1.bf16.msra.mxu0 %v773
        %828 = vmatprep.subr.bf16.mxu0 0
        %829 = vmatpush1.bf16.msra.mxu0 %v772
        %830 = vmatprep.subr.bf16.mxu0 0
        %831 = vmatpush1.bf16.msra.mxu0 %v771
        %832 = vmatprep.subr.bf16.mxu0 0
        %833 = vmatpush1.bf16.msra.mxu0 %v770
        %834 = vmatprep.subr.bf16.mxu0 0
        %835 = vmatpush2.bf16.msra.mxu0 %v785
        %836 = vmatprep.subr.bf16.mxu0 0
        %837 = vmatpush2.bf16.msra.mxu0 %v784
        %838 = vmatprep.subr.bf16.mxu0 0
        %839 = vmatpush2.bf16.msra.mxu0 %v783
        %840 = vmatprep.subr.bf16.mxu0 0
        %841 = vmatpush2.bf16.msra.mxu0 %v782
        %842 = vmatprep.subr.bf16.mxu0 0
        %843 = vmatpush2.bf16.msra.mxu0 %v781
        %844 = vmatprep.subr.bf16.mxu0 0
        %845 = vmatpush2.bf16.msra.mxu0 %v780
        %846 = vmatprep.subr.bf16.mxu0 0
        %847 = vmatpush2.bf16.msra.mxu0 %v779
        %848 = vmatprep.subr.bf16.mxu0 0
        %849 = vmatpush2.bf16.msra.mxu0 %v778
        %850 = vmatprep.mubr.bf16.mxu0 %v579
        %851 = vmatmul.mubr.bf16.gmra.mxu0 %v578
        %v852 = vpop.f32.mrf.mxu0
        %v853 = vadd.f32 0.0, %v852
        %v854 = vpop.f32.mrf.mxu0
        %v855 = vpop.f32.mrf.mxu0
        %v856 = vadd.f32 0.0, %v855
        %v857 = vpop.f32.mrf.mxu0
        %858 = vmatprep.mubr.bf16.mxu0 %v582
        %859 = vmatmul.mubr.bf16.gmra.mxu0 %v581
        %v860 = vpop.f32.mrf.mxu0
        %v861 = vadd.f32 0.0, %v860
        %v862 = vpop.f32.mrf.mxu0
        %v863 = vpop.f32.mrf.mxu0
        %v864 = vadd.f32 0.0, %v863
        %v865 = vpop.f32.mrf.mxu0
        %866 = vmatprep.mubr.bf16.mxu0 %v585
        %867 = vmatmul.mubr.bf16.gmra.mxu0 %v584
        %v868 = vpop.f32.mrf.mxu0
        %v869 = vadd.f32 0.0, %v868
        %v870 = vpop.f32.mrf.mxu0
        %v871 = vpop.f32.mrf.mxu0
        %v872 = vadd.f32 0.0, %v871
        %v873 = vpop.f32.mrf.mxu0
        %874 = vmatprep.mubr.bf16.mxu0 %v588
        %875 = vmatmul.mubr.bf16.gmra.mxu0 %v587
        %v876 = vpop.f32.mrf.mxu0
        %v877 = vadd.f32 0.0, %v876
        %v878 = vpop.f32.mrf.mxu0
        %v879 = vpop.f32.mrf.mxu0
        %v880 = vadd.f32 0.0, %v879
        %v881 = vpop.f32.mrf.mxu0
        %882 = vmatprep.mubr.bf16.mxu0 %v591
        %883 = vmatmul.mubr.bf16.gmra.mxu0 %v590
        %v884 = vpop.f32.mrf.mxu0
        %v885 = vadd.f32 0.0, %v884
        %v886 = vpop.f32.mrf.mxu0
        %v887 = vpop.f32.mrf.mxu0
        %v888 = vadd.f32 0.0, %v887
        %v889 = vpop.f32.mrf.mxu0
        %890 = vmatprep.mubr.bf16.mxu0 %v594
        %891 = vmatmul.mubr.bf16.gmra.mxu0 %v593
        %v892 = vpop.f32.mrf.mxu0
        %v893 = vadd.f32 0.0, %v892
        %v894 = vpop.f32.mrf.mxu0
        %v895 = vpop.f32.mrf.mxu0
        %v896 = vadd.f32 0.0, %v895
        %v897 = vpop.f32.mrf.mxu0
        %898 = vmatprep.mubr.bf16.mxu0 %v597
        %899 = vmatmul.mubr.bf16.gmra.mxu0 %v596
        %v900 = vpop.f32.mrf.mxu0
        %v901 = vadd.f32 0.0, %v900
        %v902 = vpop.f32.mrf.mxu0
        %v903 = vpop.f32.mrf.mxu0
        %v904 = vadd.f32 0.0, %v903
        %v905 = vpop.f32.mrf.mxu0
        %906 = vmatprep.mubr.bf16.mxu0 %v600
        %907 = vmatmul.mubr.bf16.gmra.mxu0 %v599
        %v908 = vpop.f32.mrf.mxu0
        %v909 = vadd.f32 0.0, %v908
        %v910 = vpop.f32.mrf.mxu0
        %v911 = vpop.f32.mrf.mxu0
        %v912 = vadd.f32 0.0, %v911
        %v913 = vpop.f32.mrf.mxu0
        %914 = vmatprep.mubr.bf16.mxu0 %v603
        %915 = vmatmul.mubr.bf16.gmra.mxu0 %v602
        %v916 = vpop.f32.mrf.mxu0
        %v917 = vadd.f32 0.0, %v916
        %v918 = vpop.f32.mrf.mxu0
        %v919 = vpop.f32.mrf.mxu0
        %v920 = vadd.f32 0.0, %v919
        %v921 = vpop.f32.mrf.mxu0
        %922 = vmatprep.mubr.bf16.mxu0 %v606
        %923 = vmatmul.mubr.bf16.gmra.mxu0 %v605
        %v924 = vpop.f32.mrf.mxu0
        %v925 = vadd.f32 0.0, %v924
        %v926 = vpop.f32.mrf.mxu0
        %v927 = vpop.f32.mrf.mxu0
        %v928 = vadd.f32 0.0, %v927
        %v929 = vpop.f32.mrf.mxu0
        %930 = vmatprep.mubr.bf16.mxu0 %v609
        %931 = vmatmul.mubr.bf16.gmra.mxu0 %v608
        %v932 = vpop.f32.mrf.mxu0
        %v933 = vadd.f32 0.0, %v932
        %v934 = vpop.f32.mrf.mxu0
        %v935 = vpop.f32.mrf.mxu0
        %v936 = vadd.f32 0.0, %v935
        %v937 = vpop.f32.mrf.mxu0
        %938 = vmatprep.mubr.bf16.mxu0 %v612
        %939 = vmatmul.mubr.bf16.gmra.mxu0 %v611
        %v940 = vpop.f32.mrf.mxu0
        %v941 = vadd.f32 0.0, %v940
        %v942 = vpop.f32.mrf.mxu0
        %v943 = vpop.f32.mrf.mxu0
        %v944 = vadd.f32 0.0, %v943
        %v945 = vpop.f32.mrf.mxu0
        %946 = vmatprep.mubr.bf16.mxu0 %v615
        %947 = vmatmul.mubr.bf16.gmra.mxu0 %v614
        %v948 = vpop.f32.mrf.mxu0
        %v949 = vadd.f32 0.0, %v948
        %v950 = vpop.f32.mrf.mxu0
        %v951 = vpop.f32.mrf.mxu0
        %v952 = vadd.f32 0.0, %v951
        %v953 = vpop.f32.mrf.mxu0
        %954 = vmatprep.mubr.bf16.mxu0 %v618
        %955 = vmatmul.mubr.bf16.gmra.mxu0 %v617
        %v956 = vpop.f32.mrf.mxu0
        %v957 = vadd.f32 0.0, %v956
        %v958 = vpop.f32.mrf.mxu0
        %v959 = vpop.f32.mrf.mxu0
        %v960 = vadd.f32 0.0, %v959
        %v961 = vpop.f32.mrf.mxu0
        %962 = vmatprep.mubr.bf16.mxu0 %v621
        %963 = vmatmul.mubr.bf16.gmra.mxu0 %v620
        %v964 = vpop.f32.mrf.mxu0
        %v965 = vadd.f32 0.0, %v964
        %v966 = vpop.f32.mrf.mxu0
        %v967 = vpop.f32.mrf.mxu0
        %v968 = vadd.f32 0.0, %v967
        %v969 = vpop.f32.mrf.mxu0
        %970 = vmatprep.mubr.bf16.mxu0 %v624
        %971 = vmatmul.mubr.bf16.gmra.mxu0 %v623
        %v972 = vpop.f32.mrf.mxu0
        %v973 = vadd.f32 0.0, %v972
        %v974 = vpop.f32.mrf.mxu0
        %v975 = vpop.f32.mrf.mxu0
        %v976 = vadd.f32 0.0, %v975
        %v977 = vpop.f32.mrf.mxu0
        %978 = vdwg.mxu0
        %979 = vmatprep.subr.bf16.mxu0 0
        %980 = vmatpush1.bf16.msra.mxu0 %v793
        %981 = vmatprep.subr.bf16.mxu0 0
        %982 = vmatpush1.bf16.msra.mxu0 %v792
        %983 = vmatprep.subr.bf16.mxu0 0
        %984 = vmatpush1.bf16.msra.mxu0 %v791
        %985 = vmatprep.subr.bf16.mxu0 0
        %986 = vmatpush1.bf16.msra.mxu0 %v790
        %987 = vmatprep.subr.bf16.mxu0 0
        %988 = vmatpush1.bf16.msra.mxu0 %v789
        %989 = vmatprep.subr.bf16.mxu0 0
        %990 = vmatpush1.bf16.msra.mxu0 %v788
        %991 = vmatprep.subr.bf16.mxu0 0
        %992 = vmatpush1.bf16.msra.mxu0 %v787
        %993 = vmatprep.subr.bf16.mxu0 0
        %994 = vmatpush1.bf16.msra.mxu0 %v786
        %995 = vmatprep.subr.bf16.mxu0 0
        %996 = vmatpush2.bf16.msra.mxu0 0
        %997 = vmatprep.subr.bf16.mxu0 0
        %998 = vmatpush2.bf16.msra.mxu0 0
        %999 = vmatprep.subr.bf16.mxu0 0
        %1000 = vmatpush2.bf16.msra.mxu0 0
        %1001 = vmatprep.subr.bf16.mxu0 0
        %1002 = vmatpush2.bf16.msra.mxu0 0
        %1003 = vmatprep.subr.bf16.mxu0 0
        %1004 = vmatpush2.bf16.msra.mxu0 0
        %1005 = vmatprep.subr.bf16.mxu0 0
        %1006 = vmatpush2.bf16.msra.mxu0 0
        %1007 = vmatprep.subr.bf16.mxu0 0
        %1008 = vmatpush2.bf16.msra.mxu0 0
        %1009 = vmatprep.subr.bf16.mxu0 0
        %1010 = vmatpush2.bf16.msra.mxu0 0
        %1011 = vmatprep.mubr.bf16.mxu0 0
        %1012 = vmatmul.mubr.bf16.gmra.mxu0 %v580
        %v1013 = vpop.f32.mrf.mxu0
        %v1014 = vadd.f32 %v853, %v1013
        %v1015 = vpop.f32.mrf.mxu0
        %v1016 = vpop.f32.mrf.mxu0
        %v1017 = vadd.f32 %v856, %v1016
        %v1018 = vpop.f32.mrf.mxu0
        %1019 = vmatprep.mubr.bf16.mxu0 0
        %1020 = vmatmul.mubr.bf16.gmra.mxu0 %v583
        %v1021 = vpop.f32.mrf.mxu0
        %v1022 = vadd.f32 %v861, %v1021
        %v1023 = vpop.f32.mrf.mxu0
        %v1024 = vpop.f32.mrf.mxu0
        %v1025 = vadd.f32 %v864, %v1024
        %v1026 = vpop.f32.mrf.mxu0
        %1027 = vmatprep.mubr.bf16.mxu0 0
        %1028 = vmatmul.mubr.bf16.gmra.mxu0 %v586
        %v1029 = vpop.f32.mrf.mxu0
        %v1030 = vadd.f32 %v869, %v1029
        %v1031 = vpop.f32.mrf.mxu0
        %v1032 = vpop.f32.mrf.mxu0
        %v1033 = vadd.f32 %v872, %v1032
        %v1034 = vpop.f32.mrf.mxu0
        %1035 = vmatprep.mubr.bf16.mxu0 0
        %1036 = vmatmul.mubr.bf16.gmra.mxu0 %v589
        %v1037 = vpop.f32.mrf.mxu0
        %v1038 = vadd.f32 %v877, %v1037
        %v1039 = vpop.f32.mrf.mxu0
        %v1040 = vpop.f32.mrf.mxu0
        %v1041 = vadd.f32 %v880, %v1040
        %v1042 = vpop.f32.mrf.mxu0
        %1043 = vmatprep.mubr.bf16.mxu0 0
        %1044 = vmatmul.mubr.bf16.gmra.mxu0 %v592
        %v1045 = vpop.f32.mrf.mxu0
        %v1046 = vadd.f32 %v885, %v1045
        %v1047 = vpop.f32.mrf.mxu0
        %v1048 = vpop.f32.mrf.mxu0
        %v1049 = vadd.f32 %v888, %v1048
        %v1050 = vpop.f32.mrf.mxu0
        %1051 = vmatprep.mubr.bf16.mxu0 0
        %1052 = vmatmul.mubr.bf16.gmra.mxu0 %v595
        %v1053 = vpop.f32.mrf.mxu0
        %v1054 = vadd.f32 %v893, %v1053
        %v1055 = vpop.f32.mrf.mxu0
        %v1056 = vpop.f32.mrf.mxu0
        %v1057 = vadd.f32 %v896, %v1056
        %v1058 = vpop.f32.mrf.mxu0
        %1059 = vmatprep.mubr.bf16.mxu0 0
        %1060 = vmatmul.mubr.bf16.gmra.mxu0 %v598
        %v1061 = vpop.f32.mrf.mxu0
        %v1062 = vadd.f32 %v901, %v1061
        %v1063 = vpop.f32.mrf.mxu0
        %v1064 = vpop.f32.mrf.mxu0
        %v1065 = vadd.f32 %v904, %v1064
        %v1066 = vpop.f32.mrf.mxu0
        %1067 = vmatprep.mubr.bf16.mxu0 0
        %1068 = vmatmul.mubr.bf16.gmra.mxu0 %v601
        %v1069 = vpop.f32.mrf.mxu0
        %v1070 = vadd.f32 %v909, %v1069
        %v1071 = vpop.f32.mrf.mxu0
        %v1072 = vpop.f32.mrf.mxu0
        %v1073 = vadd.f32 %v912, %v1072
        %v1074 = vpop.f32.mrf.mxu0
        %1075 = vmatprep.mubr.bf16.mxu0 0
        %1076 = vmatmul.mubr.bf16.gmra.mxu0 %v604
        %v1077 = vpop.f32.mrf.mxu0
        %v1078 = vadd.f32 %v917, %v1077
        %v1079 = vpop.f32.mrf.mxu0
        %v1080 = vpop.f32.mrf.mxu0
        %v1081 = vadd.f32 %v920, %v1080
        %v1082 = vpop.f32.mrf.mxu0
        %1083 = vmatprep.mubr.bf16.mxu0 0
        %1084 = vmatmul.mubr.bf16.gmra.mxu0 %v607
        %v1085 = vpop.f32.mrf.mxu0
        %v1086 = vadd.f32 %v925, %v1085
        %v1087 = vpop.f32.mrf.mxu0
        %v1088 = vpop.f32.mrf.mxu0
        %v1089 = vadd.f32 %v928, %v1088
        %v1090 = vpop.f32.mrf.mxu0
        %1091 = vmatprep.mubr.bf16.mxu0 0
        %1092 = vmatmul.mubr.bf16.gmra.mxu0 %v610
        %v1093 = vpop.f32.mrf.mxu0
        %v1094 = vadd.f32 %v933, %v1093
        %v1095 = vpop.f32.mrf.mxu0
        %v1096 = vpop.f32.mrf.mxu0
        %v1097 = vadd.f32 %v936, %v1096
        %v1098 = vpop.f32.mrf.mxu0
        %1099 = vmatprep.mubr.bf16.mxu0 0
        %1100 = vmatmul.mubr.bf16.gmra.mxu0 %v613
        %v1101 = vpop.f32.mrf.mxu0
        %v1102 = vadd.f32 %v941, %v1101
        %v1103 = vpop.f32.mrf.mxu0
        %v1104 = vpop.f32.mrf.mxu0
        %v1105 = vadd.f32 %v944, %v1104
        %v1106 = vpop.f32.mrf.mxu0
        %1107 = vmatprep.mubr.bf16.mxu0 0
        %1108 = vmatmul.mubr.bf16.gmra.mxu0 %v616
        %v1109 = vpop.f32.mrf.mxu0
        %v1110 = vadd.f32 %v949, %v1109
        %v1111 = vpop.f32.mrf.mxu0
        %v1112 = vpop.f32.mrf.mxu0
        %v1113 = vadd.f32 %v952, %v1112
        %v1114 = vpop.f32.mrf.mxu0
        %1115 = vmatprep.mubr.bf16.mxu0 0
        %1116 = vmatmul.mubr.bf16.gmra.mxu0 %v619
        %v1117 = vpop.f32.mrf.mxu0
        %v1118 = vadd.f32 %v957, %v1117
        %v1119 = vpop.f32.mrf.mxu0
        %v1120 = vpop.f32.mrf.mxu0
        %v1121 = vadd.f32 %v960, %v1120
        %v1122 = vpop.f32.mrf.mxu0
        %1123 = vmatprep.mubr.bf16.mxu0 0
        %1124 = vmatmul.mubr.bf16.gmra.mxu0 %v622
        %v1125 = vpop.f32.mrf.mxu0
        %v1126 = vadd.f32 %v965, %v1125
        %v1127 = vpop.f32.mrf.mxu0
        %v1128 = vpop.f32.mrf.mxu0
        %v1129 = vadd.f32 %v968, %v1128
        %v1130 = vpop.f32.mrf.mxu0
        %1131 = vmatprep.mubr.bf16.mxu0 0
        %1132 = vmatmul.mubr.bf16.gmra.mxu0 %v625
        %v1133 = vpop.f32.mrf.mxu0
        %v1134 = vadd.f32 %v973, %v1133
        %v1135 = vpop.f32.mrf.mxu0
        %v1136 = vpop.f32.mrf.mxu0
        %v1137 = vadd.f32 %v976, %v1136
        %v1138 = vpop.f32.mrf.mxu0
        %1139 = vdwg.mxu0
        %v1144 = vunpack.c.l.b16 %v253
        %v1145 = vunpack.c.h.b16 %v253
        %v1146 = vunpack.c.l.b16 %v254
        %v1147 = vunpack.c.l.b16 %v255
        %v1148 = vunpack.c.h.b16 %v255
        %v1149 = vunpack.c.l.b16 %v256
        %v1150 = vpack.c.b16 %v1147, %v1144
        %v1151 = vpack.c.b16 %v1148, %v1145
        %v1152 = vpack.c.b16 %v1149, %v1146
        %v1204 = vunpack.c.l.b16 %v317
        %v1205 = vunpack.c.l.b16 %v318
        %v1206 = vunpack.c.l.b16 %v319
        %v1207 = vunpack.c.l.b16 %v320
        %v1208 = vunpack.c.l.b16 %v321
        %v1209 = vunpack.c.l.b16 %v322
        %v1210 = vunpack.c.l.b16 %v323
        %v1211 = vunpack.c.l.b16 %v324
        %v1212 = vunpack.c.l.b16 %v325
        %v1213 = vunpack.c.l.b16 %v326
        %v1214 = vunpack.c.l.b16 %v327
        %v1215 = vunpack.c.l.b16 %v328
        %v1216 = vunpack.c.l.b16 %v329
        %v1217 = vunpack.c.l.b16 %v330
        %v1218 = vunpack.c.l.b16 %v331
        %v1219 = vunpack.c.l.b16 %v332
        %v1220 = vunpack.c.l.b16 %v333
        %v1221 = vunpack.c.l.b16 %v334
        %v1222 = vunpack.c.l.b16 %v335
        %v1223 = vunpack.c.l.b16 %v336
        %v1224 = vunpack.c.l.b16 %v337
        %v1225 = vunpack.c.l.b16 %v338
        %v1226 = vunpack.c.l.b16 %v339
        %v1227 = vunpack.c.l.b16 %v340
        %v1228 = vunpack.c.l.b16 %v341
        %v1229 = vunpack.c.l.b16 %v342
        %v1230 = vunpack.c.l.b16 %v343
        %v1231 = vunpack.c.l.b16 %v344
        %v1232 = vunpack.c.l.b16 %v345
        %v1233 = vunpack.c.l.b16 %v346
        %v1234 = vunpack.c.l.b16 %v347
        %v1235 = vunpack.c.l.b16 %v348
        %v1236 = vunpack.c.l.b16 %v349
        %v1237 = vunpack.c.l.b16 %v350
        %v1238 = vunpack.c.l.b16 %v351
        %v1239 = vunpack.c.l.b16 %v352
        %v1240 = vunpack.c.l.b16 %v353
        %v1241 = vunpack.c.l.b16 %v354
        %v1242 = vunpack.c.l.b16 %v355
        %v1243 = vunpack.c.l.b16 %v356
        %v1244 = vunpack.c.l.b16 %v357
        %v1245 = vunpack.c.l.b16 %v358
        %v1246 = vunpack.c.l.b16 %v359
        %v1247 = vunpack.c.l.b16 %v360
        %v1248 = vunpack.c.l.b16 %v361
        %v1249 = vunpack.c.l.b16 %v362
        %v1250 = vunpack.c.l.b16 %v363
        %v1251 = vunpack.c.l.b16 %v364
        %v1252 = vpack.c.b16 %v1205, %v1204
        %v1253 = vpack.c.b16 %v1207, %v1206
        %v1254 = vpack.c.b16 %v1209, %v1208
        %v1255 = vpack.c.b16 %v1211, %v1210
        %v1256 = vpack.c.b16 %v1213, %v1212
        %v1257 = vpack.c.b16 %v1215, %v1214
        %v1258 = vpack.c.b16 %v1217, %v1216
        %v1259 = vpack.c.b16 %v1219, %v1218
        %v1260 = vpack.c.b16 %v1221, %v1220
        %v1261 = vpack.c.b16 %v1223, %v1222
        %v1262 = vpack.c.b16 %v1225, %v1224
        %v1263 = vpack.c.b16 %v1227, %v1226
        %v1264 = vpack.c.b16 %v1229, %v1228
        %v1265 = vpack.c.b16 %v1231, %v1230
        %v1266 = vpack.c.b16 %v1233, %v1232
        %v1267 = vpack.c.b16 %v1235, %v1234
        %v1268 = vpack.c.b16 %v1237, %v1236
        %v1269 = vpack.c.b16 %v1239, %v1238
        %v1270 = vpack.c.b16 %v1241, %v1240
        %v1271 = vpack.c.b16 %v1243, %v1242
        %v1272 = vpack.c.b16 %v1245, %v1244
        %v1273 = vpack.c.b16 %v1247, %v1246
        %v1274 = vpack.c.b16 %v1249, %v1248
        %v1275 = vpack.c.b16 %v1251, %v1250
        %1300 = vmatprep.subr.bf16.mxu0 0
        %1301 = vmatpush1.bf16.msra.mxu0 %v1259
        %1302 = vmatprep.subr.bf16.mxu0 0
        %1303 = vmatpush1.bf16.msra.mxu0 %v1258
        %1304 = vmatprep.subr.bf16.mxu0 0
        %1305 = vmatpush1.bf16.msra.mxu0 %v1257
        %1306 = vmatprep.subr.bf16.mxu0 0
        %1307 = vmatpush1.bf16.msra.mxu0 %v1256
        %1308 = vmatprep.subr.bf16.mxu0 0
        %1309 = vmatpush1.bf16.msra.mxu0 %v1255
        %1310 = vmatprep.subr.bf16.mxu0 0
        %1311 = vmatpush1.bf16.msra.mxu0 %v1254
        %1312 = vmatprep.subr.bf16.mxu0 0
        %1313 = vmatpush1.bf16.msra.mxu0 %v1253
        %1314 = vmatprep.subr.bf16.mxu0 0
        %1315 = vmatpush1.bf16.msra.mxu0 %v1252
        %1316 = vmatprep.subr.bf16.mxu0 0
        %1317 = vmatpush2.bf16.msra.mxu0 %v1267
        %1318 = vmatprep.subr.bf16.mxu0 0
        %1319 = vmatpush2.bf16.msra.mxu0 %v1266
        %1320 = vmatprep.subr.bf16.mxu0 0
        %1321 = vmatpush2.bf16.msra.mxu0 %v1265
        %1322 = vmatprep.subr.bf16.mxu0 0
        %1323 = vmatpush2.bf16.msra.mxu0 %v1264
        %1324 = vmatprep.subr.bf16.mxu0 0
        %1325 = vmatpush2.bf16.msra.mxu0 %v1263
        %1326 = vmatprep.subr.bf16.mxu0 0
        %1327 = vmatpush2.bf16.msra.mxu0 %v1262
        %1328 = vmatprep.subr.bf16.mxu0 0
        %1329 = vmatpush2.bf16.msra.mxu0 %v1261
        %1330 = vmatprep.subr.bf16.mxu0 0
        %1331 = vmatpush2.bf16.msra.mxu0 %v1260
        %1332 = vmatprep.mubr.bf16.mxu0 %v1151
        %1333 = vmatmul.mubr.bf16.gmra.mxu0 %v1150
        %v1334 = vpop.f32.mrf.mxu0
        %v1335 = vadd.f32 %v1014, %v1334
        %v1336 = vpop.f32.mrf.mxu0
        %v1337 = vpop.f32.mrf.mxu0
        %v1338 = vadd.f32 %v1017, %v1337
        %v1339 = vpop.f32.mrf.mxu0
        %1340 = vmatprep.mubr.bf16.mxu0 %v579
        %1341 = vmatmul.mubr.bf16.gmra.mxu0 %v578
        %v1342 = vpop.f32.mrf.mxu0
        %v1343 = vadd.f32 %v1022, %v1342
        %v1344 = vpop.f32.mrf.mxu0
        %v1345 = vpop.f32.mrf.mxu0
        %v1346 = vadd.f32 %v1025, %v1345
        %v1347 = vpop.f32.mrf.mxu0
        %1348 = vmatprep.mubr.bf16.mxu0 %v582
        %1349 = vmatmul.mubr.bf16.gmra.mxu0 %v581
        %v1350 = vpop.f32.mrf.mxu0
        %v1351 = vadd.f32 %v1030, %v1350
        %v1352 = vpop.f32.mrf.mxu0
        %v1353 = vpop.f32.mrf.mxu0
        %v1354 = vadd.f32 %v1033, %v1353
        %v1355 = vpop.f32.mrf.mxu0
        %1356 = vmatprep.mubr.bf16.mxu0 %v585
        %1357 = vmatmul.mubr.bf16.gmra.mxu0 %v584
        %v1358 = vpop.f32.mrf.mxu0
        %v1359 = vadd.f32 %v1038, %v1358
        %v1360 = vpop.f32.mrf.mxu0
        %v1361 = vpop.f32.mrf.mxu0
        %v1362 = vadd.f32 %v1041, %v1361
        %v1363 = vpop.f32.mrf.mxu0
        %1364 = vmatprep.mubr.bf16.mxu0 %v588
        %1365 = vmatmul.mubr.bf16.gmra.mxu0 %v587
        %v1366 = vpop.f32.mrf.mxu0
        %v1367 = vadd.f32 %v1046, %v1366
        %v1368 = vpop.f32.mrf.mxu0
        %v1369 = vpop.f32.mrf.mxu0
        %v1370 = vadd.f32 %v1049, %v1369
        %v1371 = vpop.f32.mrf.mxu0
        %1372 = vmatprep.mubr.bf16.mxu0 %v591
        %1373 = vmatmul.mubr.bf16.gmra.mxu0 %v590
        %v1374 = vpop.f32.mrf.mxu0
        %v1375 = vadd.f32 %v1054, %v1374
        %v1376 = vpop.f32.mrf.mxu0
        %v1377 = vpop.f32.mrf.mxu0
        %v1378 = vadd.f32 %v1057, %v1377
        %v1379 = vpop.f32.mrf.mxu0
        %1380 = vmatprep.mubr.bf16.mxu0 %v594
        %1381 = vmatmul.mubr.bf16.gmra.mxu0 %v593
        %v1382 = vpop.f32.mrf.mxu0
        %v1383 = vadd.f32 %v1062, %v1382
        %v1384 = vpop.f32.mrf.mxu0
        %v1385 = vpop.f32.mrf.mxu0
        %v1386 = vadd.f32 %v1065, %v1385
        %v1387 = vpop.f32.mrf.mxu0
        %1388 = vmatprep.mubr.bf16.mxu0 %v597
        %1389 = vmatmul.mubr.bf16.gmra.mxu0 %v596
        %v1390 = vpop.f32.mrf.mxu0
        %v1391 = vadd.f32 %v1070, %v1390
        %v1392 = vpop.f32.mrf.mxu0
        %v1393 = vpop.f32.mrf.mxu0
        %v1394 = vadd.f32 %v1073, %v1393
        %v1395 = vpop.f32.mrf.mxu0
        %1396 = vmatprep.mubr.bf16.mxu0 %v600
        %1397 = vmatmul.mubr.bf16.gmra.mxu0 %v599
        %v1398 = vpop.f32.mrf.mxu0
        %v1399 = vadd.f32 %v1078, %v1398
        %v1400 = vpop.f32.mrf.mxu0
        %v1401 = vpop.f32.mrf.mxu0
        %v1402 = vadd.f32 %v1081, %v1401
        %v1403 = vpop.f32.mrf.mxu0
        %1404 = vmatprep.mubr.bf16.mxu0 %v603
        %1405 = vmatmul.mubr.bf16.gmra.mxu0 %v602
        %v1406 = vpop.f32.mrf.mxu0
        %v1407 = vadd.f32 %v1086, %v1406
        %v1408 = vpop.f32.mrf.mxu0
        %v1409 = vpop.f32.mrf.mxu0
        %v1410 = vadd.f32 %v1089, %v1409
        %v1411 = vpop.f32.mrf.mxu0
        %1412 = vmatprep.mubr.bf16.mxu0 %v606
        %1413 = vmatmul.mubr.bf16.gmra.mxu0 %v605
        %v1414 = vpop.f32.mrf.mxu0
        %v1415 = vadd.f32 %v1094, %v1414
        %v1416 = vpop.f32.mrf.mxu0
        %v1417 = vpop.f32.mrf.mxu0
        %v1418 = vadd.f32 %v1097, %v1417
        %v1419 = vpop.f32.mrf.mxu0
        %1420 = vmatprep.mubr.bf16.mxu0 %v609
        %1421 = vmatmul.mubr.bf16.gmra.mxu0 %v608
        %v1422 = vpop.f32.mrf.mxu0
        %v1423 = vadd.f32 %v1102, %v1422
        %v1424 = vpop.f32.mrf.mxu0
        %v1425 = vpop.f32.mrf.mxu0
        %v1426 = vadd.f32 %v1105, %v1425
        %v1427 = vpop.f32.mrf.mxu0
        %1428 = vmatprep.mubr.bf16.mxu0 %v612
        %1429 = vmatmul.mubr.bf16.gmra.mxu0 %v611
        %v1430 = vpop.f32.mrf.mxu0
        %v1431 = vadd.f32 %v1110, %v1430
        %v1432 = vpop.f32.mrf.mxu0
        %v1433 = vpop.f32.mrf.mxu0
        %v1434 = vadd.f32 %v1113, %v1433
        %v1435 = vpop.f32.mrf.mxu0
        %1436 = vmatprep.mubr.bf16.mxu0 %v615
        %1437 = vmatmul.mubr.bf16.gmra.mxu0 %v614
        %v1438 = vpop.f32.mrf.mxu0
        %v1439 = vadd.f32 %v1118, %v1438
        %v1440 = vpop.f32.mrf.mxu0
        %v1441 = vpop.f32.mrf.mxu0
        %v1442 = vadd.f32 %v1121, %v1441
        %v1443 = vpop.f32.mrf.mxu0
        %1444 = vmatprep.mubr.bf16.mxu0 %v618
        %1445 = vmatmul.mubr.bf16.gmra.mxu0 %v617
        %v1446 = vpop.f32.mrf.mxu0
        %v1447 = vadd.f32 %v1126, %v1446
        %v1448 = vpop.f32.mrf.mxu0
        %v1449 = vpop.f32.mrf.mxu0
        %v1450 = vadd.f32 %v1129, %v1449
        %v1451 = vpop.f32.mrf.mxu0
        %1452 = vmatprep.mubr.bf16.mxu0 %v621
        %1453 = vmatmul.mubr.bf16.gmra.mxu0 %v620
        %v1454 = vpop.f32.mrf.mxu0
        %v1455 = vadd.f32 %v1134, %v1454
        %v1456 = vpop.f32.mrf.mxu0
        %v1457 = vpop.f32.mrf.mxu0
        %v1458 = vadd.f32 %v1137, %v1457
        %v1459 = vpop.f32.mrf.mxu0
        %1460 = vdwg.mxu0
        %1461 = vmatprep.subr.bf16.mxu0 0
        %1462 = vmatpush1.bf16.msra.mxu0 %v1275
        %1463 = vmatprep.subr.bf16.mxu0 0
        %1464 = vmatpush1.bf16.msra.mxu0 %v1274
        %1465 = vmatprep.subr.bf16.mxu0 0
        %1466 = vmatpush1.bf16.msra.mxu0 %v1273
        %1467 = vmatprep.subr.bf16.mxu0 0
        %1468 = vmatpush1.bf16.msra.mxu0 %v1272
        %1469 = vmatprep.subr.bf16.mxu0 0
        %1470 = vmatpush1.bf16.msra.mxu0 %v1271
        %1471 = vmatprep.subr.bf16.mxu0 0
        %1472 = vmatpush1.bf16.msra.mxu0 %v1270
        %1473 = vmatprep.subr.bf16.mxu0 0
        %1474 = vmatpush1.bf16.msra.mxu0 %v1269
        %1475 = vmatprep.subr.bf16.mxu0 0
        %1476 = vmatpush1.bf16.msra.mxu0 %v1268
        %1477 = vmatprep.subr.bf16.mxu0 0
        %1478 = vmatpush2.bf16.msra.mxu0 0
        %1479 = vmatprep.subr.bf16.mxu0 0
        %1480 = vmatpush2.bf16.msra.mxu0 0
        %1481 = vmatprep.subr.bf16.mxu0 0
        %1482 = vmatpush2.bf16.msra.mxu0 0
        %1483 = vmatprep.subr.bf16.mxu0 0
        %1484 = vmatpush2.bf16.msra.mxu0 0
        %1485 = vmatprep.subr.bf16.mxu0 0
        %1486 = vmatpush2.bf16.msra.mxu0 0
        %1487 = vmatprep.subr.bf16.mxu0 0
        %1488 = vmatpush2.bf16.msra.mxu0 0
        %1489 = vmatprep.subr.bf16.mxu0 0
        %1490 = vmatpush2.bf16.msra.mxu0 0
        %1491 = vmatprep.subr.bf16.mxu0 0
        %1492 = vmatpush2.bf16.msra.mxu0 0
        %1493 = vmatprep.mubr.bf16.mxu0 0
        %1494 = vmatmul.mubr.bf16.gmra.mxu0 %v1152
        %v1495 = vpop.f32.mrf.mxu0
        %v1496 = vadd.f32 %v1335, %v1495
        %v1497 = vpop.f32.mrf.mxu0
        %v1498 = vpop.f32.mrf.mxu0
        %v1499 = vadd.f32 %v1338, %v1498
        %v1500 = vpop.f32.mrf.mxu0
        %1501 = vmatprep.mubr.bf16.mxu0 0
        %1502 = vmatmul.mubr.bf16.gmra.mxu0 %v580
        %v1503 = vpop.f32.mrf.mxu0
        %v1504 = vadd.f32 %v1343, %v1503
        %v1505 = vpop.f32.mrf.mxu0
        %v1506 = vpop.f32.mrf.mxu0
        %v1507 = vadd.f32 %v1346, %v1506
        %v1508 = vpop.f32.mrf.mxu0
        %1509 = vmatprep.mubr.bf16.mxu0 0
        %1510 = vmatmul.mubr.bf16.gmra.mxu0 %v583
        %v1511 = vpop.f32.mrf.mxu0
        %v1512 = vadd.f32 %v1351, %v1511
        %v1513 = vpop.f32.mrf.mxu0
        %v1514 = vpop.f32.mrf.mxu0
        %v1515 = vadd.f32 %v1354, %v1514
        %v1516 = vpop.f32.mrf.mxu0
        %1517 = vmatprep.mubr.bf16.mxu0 0
        %1518 = vmatmul.mubr.bf16.gmra.mxu0 %v586
        %v1519 = vpop.f32.mrf.mxu0
        %v1520 = vadd.f32 %v1359, %v1519
        %v1521 = vpop.f32.mrf.mxu0
        %v1522 = vpop.f32.mrf.mxu0
        %v1523 = vadd.f32 %v1362, %v1522
        %v1524 = vpop.f32.mrf.mxu0
        %1525 = vmatprep.mubr.bf16.mxu0 0
        %1526 = vmatmul.mubr.bf16.gmra.mxu0 %v589
        %v1527 = vpop.f32.mrf.mxu0
        %v1528 = vadd.f32 %v1367, %v1527
        %v1529 = vpop.f32.mrf.mxu0
        %v1530 = vpop.f32.mrf.mxu0
        %v1531 = vadd.f32 %v1370, %v1530
        %v1532 = vpop.f32.mrf.mxu0
        %1533 = vmatprep.mubr.bf16.mxu0 0
        %1534 = vmatmul.mubr.bf16.gmra.mxu0 %v592
        %v1535 = vpop.f32.mrf.mxu0
        %v1536 = vadd.f32 %v1375, %v1535
        %v1537 = vpop.f32.mrf.mxu0
        %v1538 = vpop.f32.mrf.mxu0
        %v1539 = vadd.f32 %v1378, %v1538
        %v1540 = vpop.f32.mrf.mxu0
        %1541 = vmatprep.mubr.bf16.mxu0 0
        %1542 = vmatmul.mubr.bf16.gmra.mxu0 %v595
        %v1543 = vpop.f32.mrf.mxu0
        %v1544 = vadd.f32 %v1383, %v1543
        %v1545 = vpop.f32.mrf.mxu0
        %v1546 = vpop.f32.mrf.mxu0
        %v1547 = vadd.f32 %v1386, %v1546
        %v1548 = vpop.f32.mrf.mxu0
        %1549 = vmatprep.mubr.bf16.mxu0 0
        %1550 = vmatmul.mubr.bf16.gmra.mxu0 %v598
        %v1551 = vpop.f32.mrf.mxu0
        %v1552 = vadd.f32 %v1391, %v1551
        %v1553 = vpop.f32.mrf.mxu0
        %v1554 = vpop.f32.mrf.mxu0
        %v1555 = vadd.f32 %v1394, %v1554
        %v1556 = vpop.f32.mrf.mxu0
        %1557 = vmatprep.mubr.bf16.mxu0 0
        %1558 = vmatmul.mubr.bf16.gmra.mxu0 %v601
        %v1559 = vpop.f32.mrf.mxu0
        %v1560 = vadd.f32 %v1399, %v1559
        %v1561 = vpop.f32.mrf.mxu0
        %v1562 = vpop.f32.mrf.mxu0
        %v1563 = vadd.f32 %v1402, %v1562
        %v1564 = vpop.f32.mrf.mxu0
        %1565 = vmatprep.mubr.bf16.mxu0 0
        %1566 = vmatmul.mubr.bf16.gmra.mxu0 %v604
        %v1567 = vpop.f32.mrf.mxu0
        %v1568 = vadd.f32 %v1407, %v1567
        %v1569 = vpop.f32.mrf.mxu0
        %v1570 = vpop.f32.mrf.mxu0
        %v1571 = vadd.f32 %v1410, %v1570
        %v1572 = vpop.f32.mrf.mxu0
        %1573 = vmatprep.mubr.bf16.mxu0 0
        %1574 = vmatmul.mubr.bf16.gmra.mxu0 %v607
        %v1575 = vpop.f32.mrf.mxu0
        %v1576 = vadd.f32 %v1415, %v1575
        %v1577 = vpop.f32.mrf.mxu0
        %v1578 = vpop.f32.mrf.mxu0
        %v1579 = vadd.f32 %v1418, %v1578
        %v1580 = vpop.f32.mrf.mxu0
        %1581 = vmatprep.mubr.bf16.mxu0 0
        %1582 = vmatmul.mubr.bf16.gmra.mxu0 %v610
        %v1583 = vpop.f32.mrf.mxu0
        %v1584 = vadd.f32 %v1423, %v1583
        %v1585 = vpop.f32.mrf.mxu0
        %v1586 = vpop.f32.mrf.mxu0
        %v1587 = vadd.f32 %v1426, %v1586
        %v1588 = vpop.f32.mrf.mxu0
        %1589 = vmatprep.mubr.bf16.mxu0 0
        %1590 = vmatmul.mubr.bf16.gmra.mxu0 %v613
        %v1591 = vpop.f32.mrf.mxu0
        %v1592 = vadd.f32 %v1431, %v1591
        %v1593 = vpop.f32.mrf.mxu0
        %v1594 = vpop.f32.mrf.mxu0
        %v1595 = vadd.f32 %v1434, %v1594
        %v1596 = vpop.f32.mrf.mxu0
        %1597 = vmatprep.mubr.bf16.mxu0 0
        %1598 = vmatmul.mubr.bf16.gmra.mxu0 %v616
        %v1599 = vpop.f32.mrf.mxu0
        %v1600 = vadd.f32 %v1439, %v1599
        %v1601 = vpop.f32.mrf.mxu0
        %v1602 = vpop.f32.mrf.mxu0
        %v1603 = vadd.f32 %v1442, %v1602
        %v1604 = vpop.f32.mrf.mxu0
        %1605 = vmatprep.mubr.bf16.mxu0 0
        %1606 = vmatmul.mubr.bf16.gmra.mxu0 %v619
        %v1607 = vpop.f32.mrf.mxu0
        %v1608 = vadd.f32 %v1447, %v1607
        %v1609 = vpop.f32.mrf.mxu0
        %v1610 = vpop.f32.mrf.mxu0
        %v1611 = vadd.f32 %v1450, %v1610
        %v1612 = vpop.f32.mrf.mxu0
        %1613 = vmatprep.mubr.bf16.mxu0 0
        %1614 = vmatmul.mubr.bf16.gmra.mxu0 %v622
        %v1615 = vpop.f32.mrf.mxu0
        %v1616 = vadd.f32 %v1455, %v1615
        %v1617 = vpop.f32.mrf.mxu0
        %v1618 = vpop.f32.mrf.mxu0
        %v1619 = vadd.f32 %v1458, %v1618
        %v1620 = vpop.f32.mrf.mxu0
        %1621 = vdwg.mxu0
        %v1622 = vld [vmem:[%s221 + $0x30] sm:$0xff]
        %v1623 = vld [vmem:[%s221 + $0x38] sm:$0xf]
        %v1624 = vld [vmem:[%s221 + $0x3c] sm:$0xff]
        %v1625 = vld [vmem:[%s221 + $0x44] sm:$0xf]
        %v1626 = vld [vmem:[%s221 + $0x48] sm:$0xff]
        %v1627 = vld [vmem:[%s221 + $0x50] sm:$0xf]
        %v1628 = vld [vmem:[%s221 + $0x54] sm:$0xff]
        %v1629 = vld [vmem:[%s221 + $0x5c] sm:$0xf]
        %v1630 = vld [vmem:[%s221 + $0x60] sm:$0xff]
        %v1631 = vld [vmem:[%s221 + $0x68] sm:$0xf]
        %v1632 = vld [vmem:[%s221 + $0x6c] sm:$0xff]
        %v1633 = vld [vmem:[%s221 + $0x74] sm:$0xf]
        %v1634 = vld [vmem:[%s221 + $0x78] sm:$0xff]
        %v1635 = vld [vmem:[%s221 + $0x80] sm:$0xf]
        %v1636 = vld [vmem:[%s221 + $0x84] sm:$0xff]
        %v1637 = vld [vmem:[%s221 + $0x8c] sm:$0xf]
        %v1638 = vld [vmem:[%s221 + $0x90] sm:$0xff]
        %v1639 = vld [vmem:[%s221 + $0x98] sm:$0xf]
        %v1640 = vld [vmem:[%s221 + $0x9c] sm:$0xff]
        %v1641 = vld [vmem:[%s221 + $0xa4] sm:$0xf]
        %v1642 = vld [vmem:[%s221 + $0xa8] sm:$0xff]
        %v1643 = vld [vmem:[%s221 + $0xb0] sm:$0xf]
        %v1644 = vld [vmem:[%s221 + $0xb4] sm:$0xff]
        %v1645 = vld [vmem:[%s221 + $0xbc] sm:$0xf]
        %v1646 = vld [vmem:[%s221 + $0xc0] sm:$0xff]
        %v1647 = vld [vmem:[%s221 + $0xc8] sm:$0xf]
        %v1648 = vld [vmem:[%s221 + $0xcc] sm:$0xff]
        %v1649 = vld [vmem:[%s221 + $0xd4] sm:$0xf]
        %v1650 = vld [vmem:[%s221 + $0xd8] sm:$0xff]
        %v1651 = vld [vmem:[%s221 + $0xe0] sm:$0xf]
        %v1652 = vld [vmem:[%s221 + $0xe4] sm:$0xff]
        %v1653 = vld [vmem:[%s221 + $0xec] sm:$0xf]
        %v1654 = vld [vmem:[%s221 + $0xf0] sm:$0xff]
        %v1655 = vld [vmem:[%s221 + $0xf8] sm:$0xf]
        %v1656 = vld [vmem:[%s221 + $0xfc] sm:$0xff]
        %v1657 = vld [vmem:[%s221 + $0x104] sm:$0xf]
        %v1658 = vld [vmem:[%s221 + $0x108] sm:$0xff]
        %v1659 = vld [vmem:[%s221 + $0x110] sm:$0xf]
        %v1660 = vld [vmem:[%s221 + $0x114] sm:$0xff]
        %v1661 = vld [vmem:[%s221 + $0x11c] sm:$0xf]
        %v1662 = vld [vmem:[%s221 + $0x120] sm:$0xff]
        %v1663 = vld [vmem:[%s221 + $0x128] sm:$0xf]
        %v1664 = vld [vmem:[%s221 + $0x12c] sm:$0xff]
        %v1665 = vld [vmem:[%s221 + $0x134] sm:$0xf]
        %v1666 = vld [vmem:[%s221 + $0x138] sm:$0xff]
        %v1667 = vld [vmem:[%s221 + $0x140] sm:$0xf]
        %v1668 = vld [vmem:[%s221 + $0x144] sm:$0xff]
        %v1669 = vld [vmem:[%s221 + $0x14c] sm:$0xf]
        %v1670 = vld [vmem:[%s221 + $0x150] sm:$0xff]
        %v1671 = vld [vmem:[%s221 + $0x158] sm:$0xf]
        %v1672 = vld [vmem:[%s221 + $0x15c] sm:$0xff]
        %v1673 = vld [vmem:[%s221 + $0x164] sm:$0xf]
        %v1674 = vld [vmem:[%s221 + $0x168] sm:$0xff]
        %v1675 = vld [vmem:[%s221 + $0x170] sm:$0xf]
        %v1676 = vld [vmem:[%s221 + $0x174] sm:$0xff]
        %v1677 = vld [vmem:[%s221 + $0x17c] sm:$0xf]
        %v1678 = vld [vmem:[%s221 + $0x180] sm:$0xff]
        %v1679 = vld [vmem:[%s221 + $0x188] sm:$0xf]
        %v1680 = vld [vmem:[%s221 + $0x18c] sm:$0xff]
        %v1681 = vld [vmem:[%s221 + $0x194] sm:$0xf]
        %v1682 = vld [vmem:[%s221 + $0x198] sm:$0xff]
        %v1683 = vld [vmem:[%s221 + $0x1a0] sm:$0xf]
        %v1684 = vld [vmem:[%s221 + $0x1a4] sm:$0xff]
        %v1685 = vld [vmem:[%s221 + $0x1ac] sm:$0xf]
        %s1686 = scalar_lea.vmem [#allocation5], 384
        %v1687 = vld [vmem:[%s1686] sm:$0xf]
        %v1688 = vld [vmem:[%s1686 + $0x4] sm:$0xf]
        %v1689 = vld [vmem:[%s1686 + $0x8] sm:$0xf]
        %v1690 = vld [vmem:[%s1686 + $0xc] sm:$0xf]
        %v1691 = vld [vmem:[%s1686 + $0x10] sm:$0xf]
        %v1692 = vld [vmem:[%s1686 + $0x14] sm:$0xf]
        %v1693 = vld [vmem:[%s1686 + $0x18] sm:$0xf]
        %v1694 = vld [vmem:[%s1686 + $0x1c] sm:$0xf]
        %v1695 = vld [vmem:[%s1686 + $0x20] sm:$0xf]
        %v1696 = vld [vmem:[%s1686 + $0x24] sm:$0xf]
        %v1697 = vld [vmem:[%s1686 + $0x28] sm:$0xf]
        %v1698 = vld [vmem:[%s1686 + $0x2c] sm:$0xf]
        %v1699 = vld [vmem:[%s1686 + $0x30] sm:$0xf]
        %v1700 = vld [vmem:[%s1686 + $0x34] sm:$0xf]
        %v1701 = vld [vmem:[%s1686 + $0x38] sm:$0xf]
        %v1702 = vld [vmem:[%s1686 + $0x3c] sm:$0xf]
        %v1703 = vld [vmem:[%s1686 + $0x40] sm:$0xf]
        %v1704 = vld [vmem:[%s1686 + $0x44] sm:$0xf]
        %v1705 = vld [vmem:[%s1686 + $0x48] sm:$0xf]
        %v1706 = vld [vmem:[%s1686 + $0x4c] sm:$0xf]
        %v1707 = vld [vmem:[%s1686 + $0x50] sm:$0xf]
        %v1708 = vld [vmem:[%s1686 + $0x54] sm:$0xf]
        %v1709 = vld [vmem:[%s1686 + $0x58] sm:$0xf]
        %v1710 = vld [vmem:[%s1686 + $0x5c] sm:$0xf]
        %v1711 = vld [vmem:[%s1686 + $0x60] sm:$0xf]
        %v1712 = vld [vmem:[%s1686 + $0x64] sm:$0xf]
        %v1713 = vld [vmem:[%s1686 + $0x68] sm:$0xf]
        %v1714 = vld [vmem:[%s1686 + $0x6c] sm:$0xf]
        %v1715 = vld [vmem:[%s1686 + $0x70] sm:$0xf]
        %v1716 = vld [vmem:[%s1686 + $0x74] sm:$0xf]
        %v1717 = vld [vmem:[%s1686 + $0x78] sm:$0xf]
        %v1718 = vld [vmem:[%s1686 + $0x7c] sm:$0xf]
        %v1719 = vld [vmem:[%s1686 + $0x80] sm:$0xf]
        %v1720 = vld [vmem:[%s1686 + $0x84] sm:$0xf]
        %v1721 = vld [vmem:[%s1686 + $0x88] sm:$0xf]
        %v1722 = vld [vmem:[%s1686 + $0x8c] sm:$0xf]
        %v1723 = vld [vmem:[%s1686 + $0x90] sm:$0xf]
        %v1724 = vld [vmem:[%s1686 + $0x94] sm:$0xf]
        %v1725 = vld [vmem:[%s1686 + $0x98] sm:$0xf]
        %v1726 = vld [vmem:[%s1686 + $0x9c] sm:$0xf]
        %v1727 = vld [vmem:[%s1686 + $0xa0] sm:$0xf]
        %v1728 = vld [vmem:[%s1686 + $0xa4] sm:$0xf]
        %v1729 = vld [vmem:[%s1686 + $0xa8] sm:$0xf]
        %v1730 = vld [vmem:[%s1686 + $0xac] sm:$0xf]
        %v1731 = vld [vmem:[%s1686 + $0xb0] sm:$0xf]
        %v1732 = vld [vmem:[%s1686 + $0xb4] sm:$0xf]
        %v1733 = vld [vmem:[%s1686 + $0xb8] sm:$0xf]
        %v1734 = vld [vmem:[%s1686 + $0xbc] sm:$0xf]
        %v1799 = vunpack.c.l.b16 %v1622
        %v1800 = vunpack.c.h.b16 %v1622
        %v1801 = vunpack.c.l.b16 %v1623
        %v1802 = vunpack.c.l.b16 %v1624
        %v1803 = vunpack.c.h.b16 %v1624
        %v1804 = vunpack.c.l.b16 %v1625
        %v1805 = vunpack.c.l.b16 %v1626
        %v1806 = vunpack.c.h.b16 %v1626
        %v1807 = vunpack.c.l.b16 %v1627
        %v1808 = vunpack.c.l.b16 %v1628
        %v1809 = vunpack.c.h.b16 %v1628
        %v1810 = vunpack.c.l.b16 %v1629
        %v1811 = vunpack.c.l.b16 %v1630
        %v1812 = vunpack.c.h.b16 %v1630
        %v1813 = vunpack.c.l.b16 %v1631
        %v1814 = vunpack.c.l.b16 %v1632
        %v1815 = vunpack.c.h.b16 %v1632
        %v1816 = vunpack.c.l.b16 %v1633
        %v1817 = vunpack.c.l.b16 %v1634
        %v1818 = vunpack.c.h.b16 %v1634
        %v1819 = vunpack.c.l.b16 %v1635
        %v1820 = vunpack.c.l.b16 %v1636
        %v1821 = vunpack.c.h.b16 %v1636
        %v1822 = vunpack.c.l.b16 %v1637
        %v1823 = vunpack.c.l.b16 %v1638
        %v1824 = vunpack.c.h.b16 %v1638
        %v1825 = vunpack.c.l.b16 %v1639
        %v1826 = vunpack.c.l.b16 %v1640
        %v1827 = vunpack.c.h.b16 %v1640
        %v1828 = vunpack.c.l.b16 %v1641
        %v1829 = vunpack.c.l.b16 %v1642
        %v1830 = vunpack.c.h.b16 %v1642
        %v1831 = vunpack.c.l.b16 %v1643
        %v1832 = vunpack.c.l.b16 %v1644
        %v1833 = vunpack.c.h.b16 %v1644
        %v1834 = vunpack.c.l.b16 %v1645
        %v1835 = vunpack.c.l.b16 %v1646
        %v1836 = vunpack.c.h.b16 %v1646
        %v1837 = vunpack.c.l.b16 %v1647
        %v1838 = vunpack.c.l.b16 %v1648
        %v1839 = vunpack.c.h.b16 %v1648
        %v1840 = vunpack.c.l.b16 %v1649
        %v1841 = vunpack.c.l.b16 %v1650
        %v1842 = vunpack.c.h.b16 %v1650
        %v1843 = vunpack.c.l.b16 %v1651
        %v1844 = vunpack.c.l.b16 %v1652
        %v1845 = vunpack.c.h.b16 %v1652
        %v1846 = vunpack.c.l.b16 %v1653
        %v1847 = vunpack.c.l.b16 %v1654
        %v1848 = vunpack.c.h.b16 %v1654
        %v1849 = vunpack.c.l.b16 %v1655
        %v1850 = vunpack.c.l.b16 %v1656
        %v1851 = vunpack.c.h.b16 %v1656
        %v1852 = vunpack.c.l.b16 %v1657
        %v1853 = vunpack.c.l.b16 %v1658
        %v1854 = vunpack.c.h.b16 %v1658
        %v1855 = vunpack.c.l.b16 %v1659
        %v1856 = vunpack.c.l.b16 %v1660
        %v1857 = vunpack.c.h.b16 %v1660
        %v1858 = vunpack.c.l.b16 %v1661
        %v1859 = vunpack.c.l.b16 %v1662
        %v1860 = vunpack.c.h.b16 %v1662
        %v1861 = vunpack.c.l.b16 %v1663
        %v1862 = vunpack.c.l.b16 %v1664
        %v1863 = vunpack.c.h.b16 %v1664
        %v1864 = vunpack.c.l.b16 %v1665
        %v1865 = vunpack.c.l.b16 %v1666
        %v1866 = vunpack.c.h.b16 %v1666
        %v1867 = vunpack.c.l.b16 %v1667
        %v1868 = vunpack.c.l.b16 %v1668
        %v1869 = vunpack.c.h.b16 %v1668
        %v1870 = vunpack.c.l.b16 %v1669
        %v1871 = vunpack.c.l.b16 %v1670
        %v1872 = vunpack.c.h.b16 %v1670
        %v1873 = vunpack.c.l.b16 %v1671
        %v1874 = vunpack.c.l.b16 %v1672
        %v1875 = vunpack.c.h.b16 %v1672
        %v1876 = vunpack.c.l.b16 %v1673
        %v1877 = vunpack.c.l.b16 %v1674
        %v1878 = vunpack.c.h.b16 %v1674
        %v1879 = vunpack.c.l.b16 %v1675
        %v1880 = vunpack.c.l.b16 %v1676
        %v1881 = vunpack.c.h.b16 %v1676
        %v1882 = vunpack.c.l.b16 %v1677
        %v1883 = vunpack.c.l.b16 %v1678
        %v1884 = vunpack.c.h.b16 %v1678
        %v1885 = vunpack.c.l.b16 %v1679
        %v1886 = vunpack.c.l.b16 %v1680
        %v1887 = vunpack.c.h.b16 %v1680
        %v1888 = vunpack.c.l.b16 %v1681
        %v1889 = vunpack.c.l.b16 %v1682
        %v1890 = vunpack.c.h.b16 %v1682
        %v1891 = vunpack.c.l.b16 %v1683
        %v1892 = vunpack.c.l.b16 %v1684
        %v1893 = vunpack.c.h.b16 %v1684
        %v1894 = vunpack.c.l.b16 %v1685
        %v1895 = vpack.c.b16 %v1802, %v1799
        %v1896 = vpack.c.b16 %v1803, %v1800
        %v1897 = vpack.c.b16 %v1804, %v1801
        %v1898 = vpack.c.b16 %v1808, %v1805
        %v1899 = vpack.c.b16 %v1809, %v1806
        %v1900 = vpack.c.b16 %v1810, %v1807
        %v1901 = vpack.c.b16 %v1814, %v1811
        %v1902 = vpack.c.b16 %v1815, %v1812
        %v1903 = vpack.c.b16 %v1816, %v1813
        %v1904 = vpack.c.b16 %v1820, %v1817
        %v1905 = vpack.c.b16 %v1821, %v1818
        %v1906 = vpack.c.b16 %v1822, %v1819
        %v1907 = vpack.c.b16 %v1826, %v1823
        %v1908 = vpack.c.b16 %v1827, %v1824
        %v1909 = vpack.c.b16 %v1828, %v1825
        %v1910 = vpack.c.b16 %v1832, %v1829
        %v1911 = vpack.c.b16 %v1833, %v1830
        %v1912 = vpack.c.b16 %v1834, %v1831
        %v1913 = vpack.c.b16 %v1838, %v1835
        %v1914 = vpack.c.b16 %v1839, %v1836
        %v1915 = vpack.c.b16 %v1840, %v1837
        %v1916 = vpack.c.b16 %v1844, %v1841
        %v1917 = vpack.c.b16 %v1845, %v1842
        %v1918 = vpack.c.b16 %v1846, %v1843
        %v1919 = vpack.c.b16 %v1850, %v1847
        %v1920 = vpack.c.b16 %v1851, %v1848
        %v1921 = vpack.c.b16 %v1852, %v1849
        %v1922 = vpack.c.b16 %v1856, %v1853
        %v1923 = vpack.c.b16 %v1857, %v1854
        %v1924 = vpack.c.b16 %v1858, %v1855
        %v1925 = vpack.c.b16 %v1862, %v1859
        %v1926 = vpack.c.b16 %v1863, %v1860
        %v1927 = vpack.c.b16 %v1864, %v1861
        %v1928 = vpack.c.b16 %v1868, %v1865
        %v1929 = vpack.c.b16 %v1869, %v1866
        %v1930 = vpack.c.b16 %v1870, %v1867
        %v1931 = vpack.c.b16 %v1874, %v1871
        %v1932 = vpack.c.b16 %v1875, %v1872
        %v1933 = vpack.c.b16 %v1876, %v1873
        %v1934 = vpack.c.b16 %v1880, %v1877
        %v1935 = vpack.c.b16 %v1881, %v1878
        %v1936 = vpack.c.b16 %v1882, %v1879
        %v1937 = vpack.c.b16 %v1886, %v1883
        %v1938 = vpack.c.b16 %v1887, %v1884
        %v1939 = vpack.c.b16 %v1888, %v1885
        %v1940 = vpack.c.b16 %v1892, %v1889
        %v1941 = vpack.c.b16 %v1893, %v1890
        %v1942 = vpack.c.b16 %v1894, %v1891
        %v2039 = vunpack.c.l.b16 %v1687
        %v2040 = vunpack.c.l.b16 %v1688
        %v2041 = vunpack.c.l.b16 %v1689
        %v2042 = vunpack.c.l.b16 %v1690
        %v2043 = vunpack.c.l.b16 %v1691
        %v2044 = vunpack.c.l.b16 %v1692
        %v2045 = vunpack.c.l.b16 %v1693
        %v2046 = vunpack.c.l.b16 %v1694
        %v2047 = vunpack.c.l.b16 %v1695
        %v2048 = vunpack.c.l.b16 %v1696
        %v2049 = vunpack.c.l.b16 %v1697
        %v2050 = vunpack.c.l.b16 %v1698
        %v2051 = vunpack.c.l.b16 %v1699
        %v2052 = vunpack.c.l.b16 %v1700
        %v2053 = vunpack.c.l.b16 %v1701
        %v2054 = vunpack.c.l.b16 %v1702
        %v2055 = vunpack.c.l.b16 %v1703
        %v2056 = vunpack.c.l.b16 %v1704
        %v2057 = vunpack.c.l.b16 %v1705
        %v2058 = vunpack.c.l.b16 %v1706
        %v2059 = vunpack.c.l.b16 %v1707
        %v2060 = vunpack.c.l.b16 %v1708
        %v2061 = vunpack.c.l.b16 %v1709
        %v2062 = vunpack.c.l.b16 %v1710
        %v2063 = vunpack.c.l.b16 %v1711
        %v2064 = vunpack.c.l.b16 %v1712
        %v2065 = vunpack.c.l.b16 %v1713
        %v2066 = vunpack.c.l.b16 %v1714
        %v2067 = vunpack.c.l.b16 %v1715
        %v2068 = vunpack.c.l.b16 %v1716
        %v2069 = vunpack.c.l.b16 %v1717
        %v2070 = vunpack.c.l.b16 %v1718
        %v2071 = vunpack.c.l.b16 %v1719
        %v2072 = vunpack.c.l.b16 %v1720
        %v2073 = vunpack.c.l.b16 %v1721
        %v2074 = vunpack.c.l.b16 %v1722
        %v2075 = vunpack.c.l.b16 %v1723
        %v2076 = vunpack.c.l.b16 %v1724
        %v2077 = vunpack.c.l.b16 %v1725
        %v2078 = vunpack.c.l.b16 %v1726
        %v2079 = vunpack.c.l.b16 %v1727
        %v2080 = vunpack.c.l.b16 %v1728
        %v2081 = vunpack.c.l.b16 %v1729
        %v2082 = vunpack.c.l.b16 %v1730
        %v2083 = vunpack.c.l.b16 %v1731
        %v2084 = vunpack.c.l.b16 %v1732
        %v2085 = vunpack.c.l.b16 %v1733
        %v2086 = vunpack.c.l.b16 %v1734
        %v2087 = vpack.c.b16 %v2040, %v2039
        %v2088 = vpack.c.b16 %v2042, %v2041
        %v2089 = vpack.c.b16 %v2044, %v2043
        %v2090 = vpack.c.b16 %v2046, %v2045
        %v2091 = vpack.c.b16 %v2048, %v2047
        %v2092 = vpack.c.b16 %v2050, %v2049
        %v2093 = vpack.c.b16 %v2052, %v2051
        %v2094 = vpack.c.b16 %v2054, %v2053
        %v2095 = vpack.c.b16 %v2056, %v2055
        %v2096 = vpack.c.b16 %v2058, %v2057
        %v2097 = vpack.c.b16 %v2060, %v2059
        %v2098 = vpack.c.b16 %v2062, %v2061
        %v2099 = vpack.c.b16 %v2064, %v2063
        %v2100 = vpack.c.b16 %v2066, %v2065
        %v2101 = vpack.c.b16 %v2068, %v2067
        %v2102 = vpack.c.b16 %v2070, %v2069
        %v2103 = vpack.c.b16 %v2072, %v2071
        %v2104 = vpack.c.b16 %v2074, %v2073
        %v2105 = vpack.c.b16 %v2076, %v2075
        %v2106 = vpack.c.b16 %v2078, %v2077
        %v2107 = vpack.c.b16 %v2080, %v2079
        %v2108 = vpack.c.b16 %v2082, %v2081
        %v2109 = vpack.c.b16 %v2084, %v2083
        %v2110 = vpack.c.b16 %v2086, %v2085
        %2135 = vmatprep.subr.bf16.mxu0 0
        %2136 = vmatpush1.bf16.msra.mxu0 %v2094
        %2137 = vmatprep.subr.bf16.mxu0 0
        %2138 = vmatpush1.bf16.msra.mxu0 %v2093
        %2139 = vmatprep.subr.bf16.mxu0 0
        %2140 = vmatpush1.bf16.msra.mxu0 %v2092
        %2141 = vmatprep.subr.bf16.mxu0 0
        %2142 = vmatpush1.bf16.msra.mxu0 %v2091
        %2143 = vmatprep.subr.bf16.mxu0 0
        %2144 = vmatpush1.bf16.msra.mxu0 %v2090
        %2145 = vmatprep.subr.bf16.mxu0 0
        %2146 = vmatpush1.bf16.msra.mxu0 %v2089
        %2147 = vmatprep.subr.bf16.mxu0 0
        %2148 = vmatpush1.bf16.msra.mxu0 %v2088
        %2149 = vmatprep.subr.bf16.mxu0 0
        %2150 = vmatpush1.bf16.msra.mxu0 %v2087
        %2151 = vmatprep.subr.bf16.mxu0 0
        %2152 = vmatpush2.bf16.msra.mxu0 %v2102
        %2153 = vmatprep.subr.bf16.mxu0 0
        %2154 = vmatpush2.bf16.msra.mxu0 %v2101
        %2155 = vmatprep.subr.bf16.mxu0 0
        %2156 = vmatpush2.bf16.msra.mxu0 %v2100
        %2157 = vmatprep.subr.bf16.mxu0 0
        %2158 = vmatpush2.bf16.msra.mxu0 %v2099
        %2159 = vmatprep.subr.bf16.mxu0 0
        %2160 = vmatpush2.bf16.msra.mxu0 %v2098
        %2161 = vmatprep.subr.bf16.mxu0 0
        %2162 = vmatpush2.bf16.msra.mxu0 %v2097
        %2163 = vmatprep.subr.bf16.mxu0 0
        %2164 = vmatpush2.bf16.msra.mxu0 %v2096
        %2165 = vmatprep.subr.bf16.mxu0 0
        %2166 = vmatpush2.bf16.msra.mxu0 %v2095
        %2167 = vmatprep.mubr.bf16.mxu0 %v1896
        %2168 = vmatmul.mubr.bf16.gmra.mxu0 %v1895
        %v2169 = vpop.f32.mrf.mxu0
        %v2170 = vadd.f32 0.0, %v2169
        %v2171 = vpop.f32.mrf.mxu0
        %v2172 = vpop.f32.mrf.mxu0
        %v2173 = vadd.f32 0.0, %v2172
        %v2174 = vpop.f32.mrf.mxu0
        %2175 = vmatprep.mubr.bf16.mxu0 %v1899
        %2176 = vmatmul.mubr.bf16.gmra.mxu0 %v1898
        %v2177 = vpop.f32.mrf.mxu0
        %v2178 = vadd.f32 0.0, %v2177
        %v2179 = vpop.f32.mrf.mxu0
        %v2180 = vpop.f32.mrf.mxu0
        %v2181 = vadd.f32 0.0, %v2180
        %v2182 = vpop.f32.mrf.mxu0
        %2183 = vmatprep.mubr.bf16.mxu0 %v1902
        %2184 = vmatmul.mubr.bf16.gmra.mxu0 %v1901
        %v2185 = vpop.f32.mrf.mxu0
        %v2186 = vadd.f32 0.0, %v2185
        %v2187 = vpop.f32.mrf.mxu0
        %v2188 = vpop.f32.mrf.mxu0
        %v2189 = vadd.f32 0.0, %v2188
        %v2190 = vpop.f32.mrf.mxu0
        %2191 = vmatprep.mubr.bf16.mxu0 %v1905
        %2192 = vmatmul.mubr.bf16.gmra.mxu0 %v1904
        %v2193 = vpop.f32.mrf.mxu0
        %v2194 = vadd.f32 0.0, %v2193
        %v2195 = vpop.f32.mrf.mxu0
        %v2196 = vpop.f32.mrf.mxu0
        %v2197 = vadd.f32 0.0, %v2196
        %v2198 = vpop.f32.mrf.mxu0
        %2199 = vmatprep.mubr.bf16.mxu0 %v1908
        %2200 = vmatmul.mubr.bf16.gmra.mxu0 %v1907
        %v2201 = vpop.f32.mrf.mxu0
        %v2202 = vadd.f32 0.0, %v2201
        %v2203 = vpop.f32.mrf.mxu0
        %v2204 = vpop.f32.mrf.mxu0
        %v2205 = vadd.f32 0.0, %v2204
        %v2206 = vpop.f32.mrf.mxu0
        %2207 = vmatprep.mubr.bf16.mxu0 %v1911
        %2208 = vmatmul.mubr.bf16.gmra.mxu0 %v1910
        %v2209 = vpop.f32.mrf.mxu0
        %v2210 = vadd.f32 0.0, %v2209
        %v2211 = vpop.f32.mrf.mxu0
        %v2212 = vpop.f32.mrf.mxu0
        %v2213 = vadd.f32 0.0, %v2212
        %v2214 = vpop.f32.mrf.mxu0
        %2215 = vmatprep.mubr.bf16.mxu0 %v1914
        %2216 = vmatmul.mubr.bf16.gmra.mxu0 %v1913
        %v2217 = vpop.f32.mrf.mxu0
        %v2218 = vadd.f32 0.0, %v2217
        %v2219 = vpop.f32.mrf.mxu0
        %v2220 = vpop.f32.mrf.mxu0
        %v2221 = vadd.f32 0.0, %v2220
        %v2222 = vpop.f32.mrf.mxu0
        %2223 = vmatprep.mubr.bf16.mxu0 %v1917
        %2224 = vmatmul.mubr.bf16.gmra.mxu0 %v1916
        %v2225 = vpop.f32.mrf.mxu0
        %v2226 = vadd.f32 0.0, %v2225
        %v2227 = vpop.f32.mrf.mxu0
        %v2228 = vpop.f32.mrf.mxu0
        %v2229 = vadd.f32 0.0, %v2228
        %v2230 = vpop.f32.mrf.mxu0
        %2231 = vmatprep.mubr.bf16.mxu0 %v1920
        %2232 = vmatmul.mubr.bf16.gmra.mxu0 %v1919
        %v2233 = vpop.f32.mrf.mxu0
        %v2234 = vadd.f32 0.0, %v2233
        %v2235 = vpop.f32.mrf.mxu0
        %v2236 = vpop.f32.mrf.mxu0
        %v2237 = vadd.f32 0.0, %v2236
        %v2238 = vpop.f32.mrf.mxu0
        %2239 = vmatprep.mubr.bf16.mxu0 %v1923
        %2240 = vmatmul.mubr.bf16.gmra.mxu0 %v1922
        %v2241 = vpop.f32.mrf.mxu0
        %v2242 = vadd.f32 0.0, %v2241
        %v2243 = vpop.f32.mrf.mxu0
        %v2244 = vpop.f32.mrf.mxu0
        %v2245 = vadd.f32 0.0, %v2244
        %v2246 = vpop.f32.mrf.mxu0
        %2247 = vmatprep.mubr.bf16.mxu0 %v1926
        %2248 = vmatmul.mubr.bf16.gmra.mxu0 %v1925
        %v2249 = vpop.f32.mrf.mxu0
        %v2250 = vadd.f32 0.0, %v2249
        %v2251 = vpop.f32.mrf.mxu0
        %v2252 = vpop.f32.mrf.mxu0
        %v2253 = vadd.f32 0.0, %v2252
        %v2254 = vpop.f32.mrf.mxu0
        %2255 = vmatprep.mubr.bf16.mxu0 %v1929
        %2256 = vmatmul.mubr.bf16.gmra.mxu0 %v1928
        %v2257 = vpop.f32.mrf.mxu0
        %v2258 = vadd.f32 0.0, %v2257
        %v2259 = vpop.f32.mrf.mxu0
        %v2260 = vpop.f32.mrf.mxu0
        %v2261 = vadd.f32 0.0, %v2260
        %v2262 = vpop.f32.mrf.mxu0
        %2263 = vmatprep.mubr.bf16.mxu0 %v1932
        %2264 = vmatmul.mubr.bf16.gmra.mxu0 %v1931
        %v2265 = vpop.f32.mrf.mxu0
        %v2266 = vadd.f32 0.0, %v2265
        %v2267 = vpop.f32.mrf.mxu0
        %v2268 = vpop.f32.mrf.mxu0
        %v2269 = vadd.f32 0.0, %v2268
        %v2270 = vpop.f32.mrf.mxu0
        %2271 = vmatprep.mubr.bf16.mxu0 %v1935
        %2272 = vmatmul.mubr.bf16.gmra.mxu0 %v1934
        %v2273 = vpop.f32.mrf.mxu0
        %v2274 = vadd.f32 0.0, %v2273
        %v2275 = vpop.f32.mrf.mxu0
        %v2276 = vpop.f32.mrf.mxu0
        %v2277 = vadd.f32 0.0, %v2276
        %v2278 = vpop.f32.mrf.mxu0
        %2279 = vmatprep.mubr.bf16.mxu0 %v1938
        %2280 = vmatmul.mubr.bf16.gmra.mxu0 %v1937
        %v2281 = vpop.f32.mrf.mxu0
        %v2282 = vadd.f32 0.0, %v2281
        %v2283 = vpop.f32.mrf.mxu0
        %v2284 = vpop.f32.mrf.mxu0
        %v2285 = vadd.f32 0.0, %v2284
        %v2286 = vpop.f32.mrf.mxu0
        %2287 = vmatprep.mubr.bf16.mxu0 %v1941
        %2288 = vmatmul.mubr.bf16.gmra.mxu0 %v1940
        %v2289 = vpop.f32.mrf.mxu0
        %v2290 = vadd.f32 0.0, %v2289
        %v2291 = vpop.f32.mrf.mxu0
        %v2292 = vpop.f32.mrf.mxu0
        %v2293 = vadd.f32 0.0, %v2292
        %v2294 = vpop.f32.mrf.mxu0
        %2295 = vdwg.mxu0
        %2296 = vmatprep.subr.bf16.mxu0 0
        %2297 = vmatpush1.bf16.msra.mxu0 %v2110
        %2298 = vmatprep.subr.bf16.mxu0 0
        %2299 = vmatpush1.bf16.msra.mxu0 %v2109
        %2300 = vmatprep.subr.bf16.mxu0 0
        %2301 = vmatpush1.bf16.msra.mxu0 %v2108
        %2302 = vmatprep.subr.bf16.mxu0 0
        %2303 = vmatpush1.bf16.msra.mxu0 %v2107
        %2304 = vmatprep.subr.bf16.mxu0 0
        %2305 = vmatpush1.bf16.msra.mxu0 %v2106
        %2306 = vmatprep.subr.bf16.mxu0 0
        %2307 = vmatpush1.bf16.msra.mxu0 %v2105
        %2308 = vmatprep.subr.bf16.mxu0 0
        %2309 = vmatpush1.bf16.msra.mxu0 %v2104
        %2310 = vmatprep.subr.bf16.mxu0 0
        %2311 = vmatpush1.bf16.msra.mxu0 %v2103
        %2312 = vmatprep.subr.bf16.mxu0 0
        %2313 = vmatpush2.bf16.msra.mxu0 0
        %2314 = vmatprep.subr.bf16.mxu0 0
        %2315 = vmatpush2.bf16.msra.mxu0 0
        %2316 = vmatprep.subr.bf16.mxu0 0
        %2317 = vmatpush2.bf16.msra.mxu0 0
        %2318 = vmatprep.subr.bf16.mxu0 0
        %2319 = vmatpush2.bf16.msra.mxu0 0
        %2320 = vmatprep.subr.bf16.mxu0 0
        %2321 = vmatpush2.bf16.msra.mxu0 0
        %2322 = vmatprep.subr.bf16.mxu0 0
        %2323 = vmatpush2.bf16.msra.mxu0 0
        %2324 = vmatprep.subr.bf16.mxu0 0
        %2325 = vmatpush2.bf16.msra.mxu0 0
        %2326 = vmatprep.subr.bf16.mxu0 0
        %2327 = vmatpush2.bf16.msra.mxu0 0
        %2328 = vmatprep.mubr.bf16.mxu0 0
        %2329 = vmatmul.mubr.bf16.gmra.mxu0 %v1897
        %v2330 = vpop.f32.mrf.mxu0
        %v2331 = vadd.f32 %v2170, %v2330
        %v2332 = vpop.f32.mrf.mxu0
        %v2333 = vpop.f32.mrf.mxu0
        %v2334 = vadd.f32 %v2173, %v2333
        %v2335 = vpop.f32.mrf.mxu0
        %2336 = vmatprep.mubr.bf16.mxu0 0
        %2337 = vmatmul.mubr.bf16.gmra.mxu0 %v1900
        %v2338 = vpop.f32.mrf.mxu0
        %v2339 = vadd.f32 %v2178, %v2338
        %v2340 = vpop.f32.mrf.mxu0
        %v2341 = vpop.f32.mrf.mxu0
        %v2342 = vadd.f32 %v2181, %v2341
        %v2343 = vpop.f32.mrf.mxu0
        %2344 = vmatprep.mubr.bf16.mxu0 0
        %2345 = vmatmul.mubr.bf16.gmra.mxu0 %v1903
        %v2346 = vpop.f32.mrf.mxu0
        %v2347 = vadd.f32 %v2186, %v2346
        %v2348 = vpop.f32.mrf.mxu0
        %v2349 = vpop.f32.mrf.mxu0
        %v2350 = vadd.f32 %v2189, %v2349
        %v2351 = vpop.f32.mrf.mxu0
        %2352 = vmatprep.mubr.bf16.mxu0 0
        %2353 = vmatmul.mubr.bf16.gmra.mxu0 %v1906
        %v2354 = vpop.f32.mrf.mxu0
        %v2355 = vadd.f32 %v2194, %v2354
        %v2356 = vpop.f32.mrf.mxu0
        %v2357 = vpop.f32.mrf.mxu0
        %v2358 = vadd.f32 %v2197, %v2357
        %v2359 = vpop.f32.mrf.mxu0
        %2360 = vmatprep.mubr.bf16.mxu0 0
        %2361 = vmatmul.mubr.bf16.gmra.mxu0 %v1909
        %v2362 = vpop.f32.mrf.mxu0
        %v2363 = vadd.f32 %v2202, %v2362
        %v2364 = vpop.f32.mrf.mxu0
        %v2365 = vpop.f32.mrf.mxu0
        %v2366 = vadd.f32 %v2205, %v2365
        %v2367 = vpop.f32.mrf.mxu0
        %2368 = vmatprep.mubr.bf16.mxu0 0
        %2369 = vmatmul.mubr.bf16.gmra.mxu0 %v1912
        %v2370 = vpop.f32.mrf.mxu0
        %v2371 = vadd.f32 %v2210, %v2370
        %v2372 = vpop.f32.mrf.mxu0
        %v2373 = vpop.f32.mrf.mxu0
        %v2374 = vadd.f32 %v2213, %v2373
        %v2375 = vpop.f32.mrf.mxu0
        %2376 = vmatprep.mubr.bf16.mxu0 0
        %2377 = vmatmul.mubr.bf16.gmra.mxu0 %v1915
        %v2378 = vpop.f32.mrf.mxu0
        %v2379 = vadd.f32 %v2218, %v2378
        %v2380 = vpop.f32.mrf.mxu0
        %v2381 = vpop.f32.mrf.mxu0
        %v2382 = vadd.f32 %v2221, %v2381
        %v2383 = vpop.f32.mrf.mxu0
        %2384 = vmatprep.mubr.bf16.mxu0 0
        %2385 = vmatmul.mubr.bf16.gmra.mxu0 %v1918
        %v2386 = vpop.f32.mrf.mxu0
        %v2387 = vadd.f32 %v2226, %v2386
        %v2388 = vpop.f32.mrf.mxu0
        %v2389 = vpop.f32.mrf.mxu0
        %v2390 = vadd.f32 %v2229, %v2389
        %v2391 = vpop.f32.mrf.mxu0
        %2392 = vmatprep.mubr.bf16.mxu0 0
        %2393 = vmatmul.mubr.bf16.gmra.mxu0 %v1921
        %v2394 = vpop.f32.mrf.mxu0
        %v2395 = vadd.f32 %v2234, %v2394
        %v2396 = vpop.f32.mrf.mxu0
        %v2397 = vpop.f32.mrf.mxu0
        %v2398 = vadd.f32 %v2237, %v2397
        %v2399 = vpop.f32.mrf.mxu0
        %2400 = vmatprep.mubr.bf16.mxu0 0
        %2401 = vmatmul.mubr.bf16.gmra.mxu0 %v1924
        %v2402 = vpop.f32.mrf.mxu0
        %v2403 = vadd.f32 %v2242, %v2402
        %v2404 = vpop.f32.mrf.mxu0
        %v2405 = vpop.f32.mrf.mxu0
        %v2406 = vadd.f32 %v2245, %v2405
        %v2407 = vpop.f32.mrf.mxu0
        %2408 = vmatprep.mubr.bf16.mxu0 0
        %2409 = vmatmul.mubr.bf16.gmra.mxu0 %v1927
        %v2410 = vpop.f32.mrf.mxu0
        %v2411 = vadd.f32 %v2250, %v2410
        %v2412 = vpop.f32.mrf.mxu0
        %v2413 = vpop.f32.mrf.mxu0
        %v2414 = vadd.f32 %v2253, %v2413
        %v2415 = vpop.f32.mrf.mxu0
        %2416 = vmatprep.mubr.bf16.mxu0 0
        %2417 = vmatmul.mubr.bf16.gmra.mxu0 %v1930
        %v2418 = vpop.f32.mrf.mxu0
        %v2419 = vadd.f32 %v2258, %v2418
        %v2420 = vpop.f32.mrf.mxu0
        %v2421 = vpop.f32.mrf.mxu0
        %v2422 = vadd.f32 %v2261, %v2421
        %v2423 = vpop.f32.mrf.mxu0
        %2424 = vmatprep.mubr.bf16.mxu0 0
        %2425 = vmatmul.mubr.bf16.gmra.mxu0 %v1933
        %v2426 = vpop.f32.mrf.mxu0
        %v2427 = vadd.f32 %v2266, %v2426
        %v2428 = vpop.f32.mrf.mxu0
        %v2429 = vpop.f32.mrf.mxu0
        %v2430 = vadd.f32 %v2269, %v2429
        %v2431 = vpop.f32.mrf.mxu0
        %2432 = vmatprep.mubr.bf16.mxu0 0
        %2433 = vmatmul.mubr.bf16.gmra.mxu0 %v1936
        %v2434 = vpop.f32.mrf.mxu0
        %v2435 = vadd.f32 %v2274, %v2434
        %v2436 = vpop.f32.mrf.mxu0
        %v2437 = vpop.f32.mrf.mxu0
        %v2438 = vadd.f32 %v2277, %v2437
        %v2439 = vpop.f32.mrf.mxu0
        %2440 = vmatprep.mubr.bf16.mxu0 0
        %2441 = vmatmul.mubr.bf16.gmra.mxu0 %v1939
        %v2442 = vpop.f32.mrf.mxu0
        %v2443 = vadd.f32 %v2282, %v2442
        %v2444 = vpop.f32.mrf.mxu0
        %v2445 = vpop.f32.mrf.mxu0
        %v2446 = vadd.f32 %v2285, %v2445
        %v2447 = vpop.f32.mrf.mxu0
        %2448 = vmatprep.mubr.bf16.mxu0 0
        %2449 = vmatmul.mubr.bf16.gmra.mxu0 %v1942
        %v2450 = vpop.f32.mrf.mxu0
        %v2451 = vadd.f32 %v2290, %v2450
        %v2452 = vpop.f32.mrf.mxu0
        %v2453 = vpop.f32.mrf.mxu0
        %v2454 = vadd.f32 %v2293, %v2453
        %v2455 = vpop.f32.mrf.mxu0
        %2456 = vdwg.mxu0
        %v2457 = vadd.f32 %v1496, %v2331
        %v2458 = vadd.f32 %v1499, %v2334
        %v2459 = vadd.f32 %v1504, %v2339
        %v2460 = vadd.f32 %v1507, %v2342
        %v2461 = vadd.f32 %v1512, %v2347
        %v2462 = vadd.f32 %v1515, %v2350
        %v2463 = vadd.f32 %v1520, %v2355
        %v2464 = vadd.f32 %v1523, %v2358
        %v2465 = vadd.f32 %v1528, %v2363
        %v2466 = vadd.f32 %v1531, %v2366
        %v2467 = vadd.f32 %v1536, %v2371
        %v2468 = vadd.f32 %v1539, %v2374
        %v2469 = vadd.f32 %v1544, %v2379
        %v2470 = vadd.f32 %v1547, %v2382
        %v2471 = vadd.f32 %v1552, %v2387
        %v2472 = vadd.f32 %v1555, %v2390
        %v2473 = vadd.f32 %v1560, %v2395
        %v2474 = vadd.f32 %v1563, %v2398
        %v2475 = vadd.f32 %v1568, %v2403
        %v2476 = vadd.f32 %v1571, %v2406
        %v2477 = vadd.f32 %v1576, %v2411
        %v2478 = vadd.f32 %v1579, %v2414
        %v2479 = vadd.f32 %v1584, %v2419
        %v2480 = vadd.f32 %v1587, %v2422
        %v2481 = vadd.f32 %v1592, %v2427
        %v2482 = vadd.f32 %v1595, %v2430
        %v2483 = vadd.f32 %v1600, %v2435
        %v2484 = vadd.f32 %v1603, %v2438
        %v2485 = vadd.f32 %v1608, %v2443
        %v2486 = vadd.f32 %v1611, %v2446
        %v2487 = vadd.f32 %v1616, %v2451
        %v2488 = vadd.f32 %v1619, %v2454
        %v2489 = vpack.c.bf16 %v2458, %v2457
        %v2490 = vpack.c.bf16 %v2460, %v2459
        %v2491 = vpack.c.bf16 %v2462, %v2461
        %v2492 = vpack.c.bf16 %v2464, %v2463
        %v2493 = vpack.c.bf16 %v2466, %v2465
        %v2494 = vpack.c.bf16 %v2468, %v2467
        %v2495 = vpack.c.bf16 %v2470, %v2469
        %v2496 = vpack.c.bf16 %v2472, %v2471
        %v2497 = vpack.c.bf16 %v2474, %v2473
        %v2498 = vpack.c.bf16 %v2476, %v2475
        %v2499 = vpack.c.bf16 %v2478, %v2477
        %v2500 = vpack.c.bf16 %v2480, %v2479
        %v2501 = vpack.c.bf16 %v2482, %v2481
        %v2502 = vpack.c.bf16 %v2484, %v2483
        %v2503 = vpack.c.bf16 %v2486, %v2485
        %v2504 = vpack.c.bf16 %v2488, %v2487
        %v2521 = vunpack.c.l.b16 %v2489
        %v2522 = vunpack.c.h.b16 %v2489
        %v2523 = vunpack.c.l.b16 %v2490
        %v2524 = vunpack.c.h.b16 %v2490
        %v2525 = vunpack.c.l.b16 %v2491
        %v2526 = vunpack.c.h.b16 %v2491
        %v2527 = vunpack.c.l.b16 %v2492
        %v2528 = vunpack.c.h.b16 %v2492
        %v2529 = vunpack.c.l.b16 %v2493
        %v2530 = vunpack.c.h.b16 %v2493
        %v2531 = vunpack.c.l.b16 %v2494
        %v2532 = vunpack.c.h.b16 %v2494
        %v2533 = vunpack.c.l.b16 %v2495
        %v2534 = vunpack.c.h.b16 %v2495
        %v2535 = vunpack.c.l.b16 %v2496
        %v2536 = vunpack.c.h.b16 %v2496
        %v2537 = vunpack.c.l.b16 %v2497
        %v2538 = vunpack.c.h.b16 %v2497
        %v2539 = vunpack.c.l.b16 %v2498
        %v2540 = vunpack.c.h.b16 %v2498
        %v2541 = vunpack.c.l.b16 %v2499
        %v2542 = vunpack.c.h.b16 %v2499
        %v2543 = vunpack.c.l.b16 %v2500
        %v2544 = vunpack.c.h.b16 %v2500
        %v2545 = vunpack.c.l.b16 %v2501
        %v2546 = vunpack.c.h.b16 %v2501
        %v2547 = vunpack.c.l.b16 %v2502
        %v2548 = vunpack.c.h.b16 %v2502
        %v2549 = vunpack.c.l.b16 %v2503
        %v2550 = vunpack.c.h.b16 %v2503
        %v2551 = vunpack.c.l.b16 %v2504
        %v2552 = vunpack.c.h.b16 %v2504
        %v2553 = vpack.c.b16 %v2521, %v2521
        %v2554 = vpack.c.b16 %v2522, %v2522
        %v2555 = vpack.c.b16 %v2523, %v2523
        %v2556 = vpack.c.b16 %v2524, %v2524
        %v2557 = vpack.c.b16 %v2525, %v2525
        %v2558 = vpack.c.b16 %v2526, %v2526
        %v2559 = vpack.c.b16 %v2527, %v2527
        %v2560 = vpack.c.b16 %v2528, %v2528
        %v2561 = vpack.c.b16 %v2529, %v2529
        %v2562 = vpack.c.b16 %v2530, %v2530
        %v2563 = vpack.c.b16 %v2531, %v2531
        %v2564 = vpack.c.b16 %v2532, %v2532
        %v2565 = vpack.c.b16 %v2533, %v2533
        %v2566 = vpack.c.b16 %v2534, %v2534
        %v2567 = vpack.c.b16 %v2535, %v2535
        %v2568 = vpack.c.b16 %v2536, %v2536
        %v2569 = vpack.c.b16 %v2537, %v2537
        %v2570 = vpack.c.b16 %v2538, %v2538
        %v2571 = vpack.c.b16 %v2539, %v2539
        %v2572 = vpack.c.b16 %v2540, %v2540
        %v2573 = vpack.c.b16 %v2541, %v2541
        %v2574 = vpack.c.b16 %v2542, %v2542
        %v2575 = vpack.c.b16 %v2543, %v2543
        %v2576 = vpack.c.b16 %v2544, %v2544
        %v2577 = vpack.c.b16 %v2545, %v2545
        %v2578 = vpack.c.b16 %v2546, %v2546
        %v2579 = vpack.c.b16 %v2547, %v2547
        %v2580 = vpack.c.b16 %v2548, %v2548
        %v2581 = vpack.c.b16 %v2549, %v2549
        %v2582 = vpack.c.b16 %v2550, %v2550
        %v2583 = vpack.c.b16 %v2551, %v2551
        %v2584 = vpack.c.b16 %v2552, %v2552
        %2617 = vst [vmem:[%s245] sm:$0xf] %v2553
        %2618 = vst [vmem:[%s245 + $0x4] sm:$0xf] %v2554
        %2619 = vst [vmem:[%s245 + $0x8] sm:$0xf] %v2555
        %2620 = vst [vmem:[%s245 + $0xc] sm:$0xf] %v2556
        %2621 = vst [vmem:[%s245 + $0x10] sm:$0xf] %v2557
        %2622 = vst [vmem:[%s245 + $0x14] sm:$0xf] %v2558
        %2623 = vst [vmem:[%s245 + $0x18] sm:$0xf] %v2559
        %2624 = vst [vmem:[%s245 + $0x1c] sm:$0xf] %v2560
        %2625 = vst [vmem:[%s245 + $0x20] sm:$0xf] %v2561
        %2626 = vst [vmem:[%s245 + $0x24] sm:$0xf] %v2562
        %2627 = vst [vmem:[%s245 + $0x28] sm:$0xf] %v2563
        %2628 = vst [vmem:[%s245 + $0x2c] sm:$0xf] %v2564
        %2629 = vst [vmem:[%s245 + $0x30] sm:$0xf] %v2565
        %2630 = vst [vmem:[%s245 + $0x34] sm:$0xf] %v2566
        %2631 = vst [vmem:[%s245 + $0x38] sm:$0xf] %v2567
        %2632 = vst [vmem:[%s245 + $0x3c] sm:$0xf] %v2568
        %2633 = vst [vmem:[%s245 + $0x40] sm:$0xf] %v2569
        %2634 = vst [vmem:[%s245 + $0x44] sm:$0xf] %v2570
        %2635 = vst [vmem:[%s245 + $0x48] sm:$0xf] %v2571
        %2636 = vst [vmem:[%s245 + $0x4c] sm:$0xf] %v2572
        %2637 = vst [vmem:[%s245 + $0x50] sm:$0xf] %v2573
        %2638 = vst [vmem:[%s245 + $0x54] sm:$0xf] %v2574
        %2639 = vst [vmem:[%s245 + $0x58] sm:$0xf] %v2575
        %2640 = vst [vmem:[%s245 + $0x5c] sm:$0xf] %v2576
        %2641 = vst [vmem:[%s245 + $0x60] sm:$0xf] %v2577
        %2642 = vst [vmem:[%s245 + $0x64] sm:$0xf] %v2578
        %2643 = vst [vmem:[%s245 + $0x68] sm:$0xf] %v2579
        %2644 = vst [vmem:[%s245 + $0x6c] sm:$0xf] %v2580
        %2645 = vst [vmem:[%s245 + $0x70] sm:$0xf] %v2581
        %2646 = vst [vmem:[%s245 + $0x74] sm:$0xf] %v2582
        %2647 = vst [vmem:[%s245 + $0x78] sm:$0xf] %v2583
        %2648 = vst [vmem:[%s245 + $0x7c] sm:$0xf] %v2584
        %v2649 = vadd.f32 %v2457, %v2458
        %v2650 = vadd.f32 %v2649, %v2459
        %v2651 = vadd.f32 %v2650, %v2460
        %v2652 = vadd.f32 %v2651, %v2461
        %v2653 = vadd.f32 %v2652, %v2462
        %v2654 = vadd.f32 %v2653, %v2463
        %v2655 = vadd.f32 %v2654, %v2464
        %v2656 = vadd.f32 %v2655, %v2465
        %v2657 = vadd.f32 %v2656, %v2466
        %v2658 = vadd.f32 %v2657, %v2467
        %v2659 = vadd.f32 %v2658, %v2468
        %v2660 = vadd.f32 %v2659, %v2469
        %v2661 = vadd.f32 %v2660, %v2470
        %v2662 = vadd.f32 %v2661, %v2471
        %v2663 = vadd.f32 %v2662, %v2472
        %v2664 = vadd.f32 %v2663, %v2473
        %v2665 = vadd.f32 %v2664, %v2474
        %v2666 = vadd.f32 %v2665, %v2475
        %v2667 = vadd.f32 %v2666, %v2476
        %v2668 = vadd.f32 %v2667, %v2477
        %v2669 = vadd.f32 %v2668, %v2478
        %v2670 = vadd.f32 %v2669, %v2479
        %v2671 = vadd.f32 %v2670, %v2480
        %v2672 = vadd.f32 %v2671, %v2481
        %v2673 = vadd.f32 %v2672, %v2482
        %v2674 = vadd.f32 %v2673, %v2483
        %v2675 = vadd.f32 %v2674, %v2484
        %v2676 = vadd.f32 %v2675, %v2485
        %v2677 = vadd.f32 %v2676, %v2486
        %v2678 = vadd.f32 %v2677, %v2487
        %v2679 = vadd.f32 %v2678, %v2488
        %v2680 = vrot.slane %v2679, 4
        %v2681 = vadd.f32 %v2679, %v2680
        %v2682 = vrot.slane %v2681, 2
        %v2683 = vadd.f32 %v2681, %v2682
        %v2684 = vrot.slane %v2683, 1
        %v2685 = vadd.f32 %v2683, %v2684
        %v2686 = vmul.f32 %v2685, 0.00390625
        %v2687 = vsub.f32 %v2457, %v2686
        %v2688 = vsub.f32 %v2458, %v2686
        %v2689 = vsub.f32 %v2459, %v2686
        %v2690 = vsub.f32 %v2460, %v2686
        %v2691 = vsub.f32 %v2461, %v2686
        %v2692 = vsub.f32 %v2462, %v2686
        %v2693 = vsub.f32 %v2463, %v2686
        %v2694 = vsub.f32 %v2464, %v2686
        %v2695 = vsub.f32 %v2465, %v2686
        %v2696 = vsub.f32 %v2466, %v2686
        %v2697 = vsub.f32 %v2467, %v2686
        %v2698 = vsub.f32 %v2468, %v2686
        %v2699 = vsub.f32 %v2469, %v2686
        %v2700 = vsub.f32 %v2470, %v2686
        %v2701 = vsub.f32 %v2471, %v2686
        %v2702 = vsub.f32 %v2472, %v2686
        %v2703 = vsub.f32 %v2473, %v2686
        %v2704 = vsub.f32 %v2474, %v2686
        %v2705 = vsub.f32 %v2475, %v2686
        %v2706 = vsub.f32 %v2476, %v2686
        %v2707 = vsub.f32 %v2477, %v2686
        %v2708 = vsub.f32 %v2478, %v2686
        %v2709 = vsub.f32 %v2479, %v2686
        %v2710 = vsub.f32 %v2480, %v2686
        %v2711 = vsub.f32 %v2481, %v2686
        %v2712 = vsub.f32 %v2482, %v2686
        %v2713 = vsub.f32 %v2483, %v2686
        %v2714 = vsub.f32 %v2484, %v2686
        %v2715 = vsub.f32 %v2485, %v2686
        %v2716 = vsub.f32 %v2486, %v2686
        %v2717 = vsub.f32 %v2487, %v2686
        %v2718 = vsub.f32 %v2488, %v2686
        %v2719 = vmul.f32 %v2687, %v2687
        %v2720 = vmul.f32 %v2688, %v2688
        %v2721 = vmul.f32 %v2689, %v2689
        %v2722 = vmul.f32 %v2690, %v2690
        %v2723 = vmul.f32 %v2691, %v2691
        %v2724 = vmul.f32 %v2692, %v2692
        %v2725 = vmul.f32 %v2693, %v2693
        %v2726 = vmul.f32 %v2694, %v2694
        %v2727 = vmul.f32 %v2695, %v2695
        %v2728 = vmul.f32 %v2696, %v2696
        %v2729 = vmul.f32 %v2697, %v2697
        %v2730 = vmul.f32 %v2698, %v2698
        %v2731 = vmul.f32 %v2699, %v2699
        %v2732 = vmul.f32 %v2700, %v2700
        %v2733 = vmul.f32 %v2701, %v2701
        %v2734 = vmul.f32 %v2702, %v2702
        %v2735 = vmul.f32 %v2703, %v2703
        %v2736 = vmul.f32 %v2704, %v2704
        %v2737 = vmul.f32 %v2705, %v2705
        %v2738 = vmul.f32 %v2706, %v2706
        %v2739 = vmul.f32 %v2707, %v2707
        %v2740 = vmul.f32 %v2708, %v2708
        %v2741 = vmul.f32 %v2709, %v2709
        %v2742 = vmul.f32 %v2710, %v2710
        %v2743 = vmul.f32 %v2711, %v2711
        %v2744 = vmul.f32 %v2712, %v2712
        %v2745 = vmul.f32 %v2713, %v2713
        %v2746 = vmul.f32 %v2714, %v2714
        %v2747 = vmul.f32 %v2715, %v2715
        %v2748 = vmul.f32 %v2716, %v2716
        %v2749 = vmul.f32 %v2717, %v2717
        %v2750 = vmul.f32 %v2718, %v2718
        %v2751 = vadd.f32 %v2719, %v2720
        %v2752 = vadd.f32 %v2751, %v2721
        %v2753 = vadd.f32 %v2752, %v2722
        %v2754 = vadd.f32 %v2753, %v2723
        %v2755 = vadd.f32 %v2754, %v2724
        %v2756 = vadd.f32 %v2755, %v2725
        %v2757 = vadd.f32 %v2756, %v2726
        %v2758 = vadd.f32 %v2757, %v2727
        %v2759 = vadd.f32 %v2758, %v2728
        %v2760 = vadd.f32 %v2759, %v2729
        %v2761 = vadd.f32 %v2760, %v2730
        %v2762 = vadd.f32 %v2761, %v2731
        %v2763 = vadd.f32 %v2762, %v2732
        %v2764 = vadd.f32 %v2763, %v2733
        %v2765 = vadd.f32 %v2764, %v2734
        %v2766 = vadd.f32 %v2765, %v2735
        %v2767 = vadd.f32 %v2766, %v2736
        %v2768 = vadd.f32 %v2767, %v2737
        %v2769 = vadd.f32 %v2768, %v2738
        %v2770 = vadd.f32 %v2769, %v2739
        %v2771 = vadd.f32 %v2770, %v2740
        %v2772 = vadd.f32 %v2771, %v2741
        %v2773 = vadd.f32 %v2772, %v2742
        %v2774 = vadd.f32 %v2773, %v2743
        %v2775 = vadd.f32 %v2774, %v2744
        %v2776 = vadd.f32 %v2775, %v2745
        %v2777 = vadd.f32 %v2776, %v2746
        %v2778 = vadd.f32 %v2777, %v2747
        %v2779 = vadd.f32 %v2778, %v2748
        %v2780 = vadd.f32 %v2779, %v2749
        %v2781 = vadd.f32 %v2780, %v2750
        %v2782 = vrot.slane %v2781, 4
        %v2783 = vadd.f32 %v2781, %v2782
        %v2784 = vrot.slane %v2783, 2
        %v2785 = vadd.f32 %v2783, %v2784
        %v2786 = vrot.slane %v2785, 1
        %v2787 = vadd.f32 %v2785, %v2786
        %p2788 = scmp.eq.s32.totalorder %s26, 0
        // Predicated region
        $region37: #{tpu_custom_call.1} parent=27 // pred_check
          %p2789 = pneg %p2788
        $region38: #{tpu_custom_call.1} parent=27 // pred_check_branch
          %2791 = sbr.rel (%p2789) target = $region40
        $region39: #{tpu_custom_call.1} parent=27 // pred_region
          %2792 = vst [vmem:[#allocation8] sm:$0x1] 0.0
          %2793 = vst [vmem:[#allocation10] sm:$0x1] 0.0
          %2794 = vst [vmem:[#allocation11] sm:$0x1] 0.0
        $region40: #{tpu_custom_call.1} parent=27 // pred_fallthru
          _
        %v2795 = vld [vmem:[#allocation8] sm:$0x1]
        %v2796 = vadd.f32 %v2795, %v2685
        %2797 = vst [vmem:[#allocation8] sm:$0x1] %v2796
        %v2798 = vld [vmem:[#allocation10] sm:$0x1]
        %v2799 = vadd.f32 %v2798, %v2787
        %2800 = vst [vmem:[#allocation10] sm:$0x1] %v2799
        %v2801 = vld [vmem:[#allocation11] sm:$0x1]
        %v2802 = vmul.f32 %v2686, %v2686
        %v2803 = vadd.f32 %v2801, %v2802
        %2804 = vst [vmem:[#allocation11] sm:$0x1] %v2803
        %s2805 = sand.u32 %s81, 1
        %s2806 = scalar_lea.sflag [#allocation4], %s2805
        %s2807 = sand.u32 %s81, 1
        %s2808 = smul.addr %s2807, 128
        %s2809 = scalar_lea.vmem [#allocation7], %s2808
        // Predicated region
        $region41: #{tpu_custom_call.1} parent=27 // pred_check
          %p2810 = pneg %p91
        $region42: #{tpu_custom_call.1} parent=27 // pred_check_branch
          %2812 = sbr.rel (%p2810) target = $region44
        $region43: #{tpu_custom_call.1} parent=27 // pred_region
          %s2814 = ssub.s32 2048, 2048
          %2815 = vsyncadd %s2806, %s2814
          %s2816 = smul.addr %s26, 32
          %s2817 = smul.addr %s2816, 64
          %s2818 = scalar_lea.hbm %s2, %s2817
          %s2819 = sshll.u32 %s2809, 4
          %s2820 = int_to_ptr.vmem [resolvable:$true] %s2819
          %2825 = dma.vmem_to_hbm [thread:$0]  %s2820, 2048, %s2818, %s2806, 64, 64, 4
        $region44: #{tpu_custom_call.1} parent=27 // pred_fallthru
          _
        // Predicated region
        $region45: #{tpu_custom_call.1} parent=27 // pred_check
          %p2826 = pneg %p112
        $region46: #{tpu_custom_call.1} parent=27 // pred_check_branch
          %2828 = sbr.rel (%p2826) target = $region48
        $region47: #{tpu_custom_call.1} parent=27 // pred_region
          %s2830 = ssub.s32 16, 16
          %2831 = vsyncadd [#allocation9], %s2830
          %s2833 = sshll.u32 [#allocation8], 4
          %s2834 = int_to_ptr.vmem [resolvable:$true] %s2833
          %2836 = dma.vmem_to_hbm [thread:$0]  %s2834, 16, %s3, [#allocation9]
        $region48: #{tpu_custom_call.1} parent=27 // pred_fallthru
          _
        // Predicated region
        $region49: #{tpu_custom_call.1} parent=27 // pred_check
          %p2837 = pneg %p133
        $region50: #{tpu_custom_call.1} parent=27 // pred_check_branch
          %2839 = sbr.rel (%p2837) target = $region52
        $region51: #{tpu_custom_call.1} parent=27 // pred_region
          %s2841 = ssub.s32 16, 16
          %2842 = vsyncadd [#allocation9], %s2841
          %s2844 = sshll.u32 [#allocation10], 4
          %s2845 = int_to_ptr.vmem [resolvable:$true] %s2844
          %2847 = dma.vmem_to_hbm [thread:$0]  %s2845, 16, %s4, [#allocation9]
        $region52: #{tpu_custom_call.1} parent=27 // pred_fallthru
          _
        // Predicated region
        $region53: #{tpu_custom_call.1} parent=27 // pred_check
          %p2848 = pneg %p154
        $region54: #{tpu_custom_call.1} parent=27 // pred_check_branch
          %2850 = sbr.rel (%p2848) target = $region56
        $region55: #{tpu_custom_call.1} parent=27 // pred_region
          %s2852 = ssub.s32 16, 16
          %2853 = vsyncadd [#allocation12], %s2852
          %s2855 = sshll.u32 [#allocation11], 4
          %s2856 = int_to_ptr.vmem [resolvable:$true] %s2855
          %2858 = dma.vmem_to_hbm [thread:$0]  %s2856, 16, %s5, [#allocation12]
        $region56: #{tpu_custom_call.1} parent=27 // pred_fallthru
          _
        // Predicated region
        $region57: #{tpu_custom_call.1} parent=27 // pred_check
          %p2859 = pneg %p112
        $region58: #{tpu_custom_call.1} parent=27 // pred_check_branch
          %2861 = sbr.rel (%p2859) target = $region60
        $region59: #{tpu_custom_call.1} parent=27 // pred_region
          %2862 = dma.done [#allocation9], 16
        $region60: #{tpu_custom_call.1} parent=27 // pred_fallthru
          _
        // Predicated region
        $region61: #{tpu_custom_call.1} parent=27 // pred_check
          %p2863 = pneg %p133
        $region62: #{tpu_custom_call.1} parent=27 // pred_check_branch
          %2865 = sbr.rel (%p2863) target = $region64
        $region63: #{tpu_custom_call.1} parent=27 // pred_region
          %2866 = dma.done [#allocation9], 16
        $region64: #{tpu_custom_call.1} parent=27 // pred_fallthru
          _
        // Predicated region
        $region65: #{tpu_custom_call.1} parent=27 // pred_check
          %p2867 = pneg %p154
        $region66: #{tpu_custom_call.1} parent=27 // pred_check_branch
          %2869 = sbr.rel (%p2867) target = $region68
        $region67: #{tpu_custom_call.1} parent=27 // pred_region
          %2870 = dma.done [#allocation12], 16
        $region68: #{tpu_custom_call.1} parent=27 // pred_fallthru
          _
      $region28: #{tpu_custom_call.1} parent=5 // pred_fallthru
        _
      %p2871 = scmp.le.s32.totalorder 2, %s21
      // Predicated region
      $region69: #{tpu_custom_call.1} parent=5 // pred_check
        %p2872 = pneg %p2871
      $region70: #{tpu_custom_call.1} parent=5 // pred_check_branch
        %2874 = sbr.rel (%p2872) target = $region72
      $region71: #{tpu_custom_call.1} parent=5 // pred_region
        %s2875 = ssub.s32 %s21, 2
        // Predicated region
        $region73: #{tpu_custom_call.1} parent=71 // pred_check
          %p2876 = pneg %p97
        $region74: #{tpu_custom_call.1} parent=71 // pred_check_branch
          %2878 = sbr.rel (%p2876) target = $region76
        $region75: #{tpu_custom_call.1} parent=71 // pred_region
          %s2879 = sand.u32 %s82, 1
          %s2880 = scalar_lea.sflag [#allocation4], %s2879
          %s2881 = sand.u32 %s82, 1
          %s2882 = smul.addr %s2881, 128
          %s2883 = scalar_lea.vmem [#allocation7], %s2882
          %2884 = dma.done %s2880, 2048
        $region76: #{tpu_custom_call.1} parent=71 // pred_fallthru
          _
      $region72: #{tpu_custom_call.1} parent=5 // pred_fallthru
        _
    $region6: #{tpu_custom_call.1} parent=1 // loop_footer
      %s25 = sadd.s32 1, %s21
    $region7: #{tpu_custom_call.1} parent=1 // loop_footer_branch
      %20 = sbr.rel target = $region3
    $region8: #{tpu_custom_call.1} parent=1 // loop_exit
      _
    %2885 = vsyncpa [#allocation3], 1
    %s2886 = scalar_lea.sflag [#allocation3], 1
    %2887 = vsyncpa %s2886, 1
    %2888 = vsyncpa [#allocation6], 1
    %2889 = vsyncpa [#allocation4], 1
    %s2890 = scalar_lea.sflag [#allocation4], 1
    %2891 = vsyncpa %s2890, 1
    %2892 = vsyncpa [#allocation9], 1
    %2893 = vsyncpa [#allocation12], 1

</llo_original>
